<compile_context>
chip_gen: v7x
topology: tpu7x:2x2x1
jax: 0.10.0
libtpu: 0.0.40
codegen_flags: <defaults>
</compile_context>

<pallas_src>
import jax
import jax.numpy as jnp
from jax.experimental import pallas as pl
from jax.experimental.pallas import tpu as pltpu


NEG_SLOPE = 0.01              # nn.LeakyReLU default negative_slope
ROW_TILE = 256                # row tile for large flattened batches (mult. of 8)
SINGLE_BLOCK_MAX_ROWS = 1024  # up to this many rows -> one whole-array block


def _leaky_relu(y):
    return jnp.where(y > 0, y, NEG_SLOPE * y)


# ----------------------------------------------------------------------------
# One fused kernel: y = L3( leaky( L2( leaky( L1(x) ) ) ) )
# Intermediates live entirely in VMEM/vregs; weights are bf16, accum is f32.
# ----------------------------------------------------------------------------
def _mlp_fused_kernel(x_ref, w1_ref, b1_ref, w2_ref, b2_ref, w3_ref, b3_ref,
                      o_ref):
    x = x_ref[...].astype(jnp.bfloat16)

    h = jnp.dot(x, w1_ref[...], preferred_element_type=jnp.float32)
    h = _leaky_relu(h + b1_ref[...])

    h = jnp.dot(h.astype(jnp.bfloat16), w2_ref[...],
                preferred_element_type=jnp.float32)
    h = _leaky_relu(h + b2_ref[...])

    y = jnp.dot(h.astype(jnp.bfloat16), w3_ref[...],
                preferred_element_type=jnp.float32)
    y = y + b3_ref[...]

    o_ref[...] = y.astype(o_ref.dtype)


def mlp_forward(x, params):
    """Fused MLP forward.  x: (..., d_in) f32 -> (..., d_out) f32."""
    (w1, b1), (w2, b2), (w3, b3) = params
    d_in, d_hid = w1.shape
    d_out = w3.shape[1]

    lead_shape = x.shape[:-1]
    x2d = x.reshape(-1, d_in).astype(jnp.float32)
    m = x2d.shape[0]

    # Row tiling: round rows up to a sublane multiple; use one whole-array
    # block for modest batches, 256-row parallel tiles for big batches.
    m8 = ((m + 7) // 8) * 8
    if m8 <= SINGLE_BLOCK_MAX_ROWS:
        tm = m8
        m_pad = m8
    else:
        tm = ROW_TILE
        m_pad = pl.cdiv(m, tm) * tm
    if m_pad != m:
        x2d = jnp.pad(x2d, ((0, m_pad - m), (0, 0)))
    grid = (m_pad // tm,)

    b1r = b1.reshape(1, d_hid).astype(jnp.float32)
    b2r = b2.reshape(1, d_hid).astype(jnp.float32)
    b3r = b3.reshape(1, d_out).astype(jnp.float32)

    cost = pl.CostEstimate(
        flops=2 * m_pad * (d_in * d_hid + d_hid * d_hid + d_hid * d_out),
        transcendentals=0,
        bytes_accessed=(x2d.size * 4 + m_pad * d_out * 4
                        + (w1.size + w2.size + w3.size) * 2
                        + (b1.size + b2.size + b3.size) * 4),
    )

    out = pl.pallas_call(
        _mlp_fused_kernel,
        out_shape=jax.ShapeDtypeStruct((m_pad, d_out), jnp.float32),
        grid=grid,
        in_specs=[
            pl.BlockSpec((tm, d_in), lambda i: (i, 0)),      # x rows (streamed)
            pl.BlockSpec((d_in, d_hid), lambda i: (0, 0)),   # W1 (VMEM-resident)
            pl.BlockSpec((1, d_hid), lambda i: (0, 0)),      # b1
            pl.BlockSpec((d_hid, d_hid), lambda i: (0, 0)),  # W2 (VMEM-resident)
            pl.BlockSpec((1, d_hid), lambda i: (0, 0)),      # b2
            pl.BlockSpec((d_hid, d_out), lambda i: (0, 0)),  # W3 (VMEM-resident)
            pl.BlockSpec((1, d_out), lambda i: (0, 0)),      # b3
        ],
        out_specs=pl.BlockSpec((tm, d_out), lambda i: (i, 0)),
        compiler_params=pltpu.CompilerParams(
            dimension_semantics=("parallel",),
            vmem_limit_bytes=64 << 20,
        ),
        cost_estimate=cost,
    )(x2d, w1, b1r, w2, b2r, w3, b3r)

    out = out[:m]
    return out.reshape(*lead_shape, d_out)


# ----------------------------------------------------------------------------
# Parameter construction (nn.Linear default init: U(-1/sqrt(fan_in), +)).
# Weights stored (in, out) in bf16 (MXU-native), biases in f32.
# ----------------------------------------------------------------------------
def init_linear(key, d_in, d_out):
    k_w, k_b = jax.random.split(key)
    bound = 1.0 / jnp.sqrt(jnp.float32(d_in))
    w = jax.random.uniform(k_w, (d_in, d_out), jnp.float32, -bound, bound)
    b = jax.random.uniform(k_b, (d_out,), jnp.float32, -bound, bound)
    return w.astype(jnp.bfloat16), b


def init_mlp(key, d_in, d_hid, d_out):
    k1, k2, k3 = jax.random.split(key, 3)
    return (
        init_linear(k1, d_in, d_hid),
        init_linear(k2, d_hid, d_hid),
        init_linear(k3, d_hid, d_out),
    )


# ----------------------------------------------------------------------------
# Pure-JAX reference with the same numerics (bf16 weights/inputs, f32 accum).
# ----------------------------------------------------------------------------
def mlp_forward_ref(x, params):
    (w1, b1), (w2, b2), (w3, b3) = params
    d_out = w3.shape[1]
    h = x.reshape(-1, x.shape[-1]).astype(jnp.float32)

    def layer(h, w, b, act):
        y = jnp.dot(h.astype(jnp.bfloat16).astype(jnp.float32),
                    w.astype(jnp.float32),
                    precision=jax.lax.Precision.HIGHEST) + b
        return _leaky_relu(y) if act else y

    h = layer(h, w1, b1, True)
    h = layer(h, w2, b2, True)
    y = layer(h, w3, b3, False)
    return y.reshape(*x.shape[:-1], d_out)


if __name__ == "__main__":
    key = jax.random.PRNGKey(0)
    k_params, k_x1, k_x2, k_x3 = jax.random.split(key, 4)

    # Shapes representative of the AE_A module's biggest MLP (mlp21):
    # input_dim=26*16=416, hidden_dim=832, output_dim=416; small batch.
    d_in, d_hid, d_out = 416, 832, 416
    params = init_mlp(k_params, d_in, d_hid, d_out)

    fwd = jax.jit(mlp_forward)

    # Case 1: tiny batch (padded to 8 rows, single whole-array block).
    x_small = jax.random.normal(k_x1, (2, d_in), jnp.float32)
    out_small = jax.block_until_ready(fwd(x_small, params))
    assert out_small.shape == (2, d_out), out_small.shape
    ref_small = mlp_forward_ref(x_small, params)
    assert jnp.allclose(out_small, ref_small, atol=2e-3, rtol=2e-3)

    # Case 2: moderate flattened batch (520 rows -> single resident block).
    x_mid = jax.random.normal(k_x2, (20, 26, d_in), jnp.float32)
    out_mid = jax.block_until_ready(fwd(x_mid, params))
    assert out_mid.shape == (20, 26, d_out), out_mid.shape
    ref_mid = mlp_forward_ref(x_mid, params)
    assert jnp.allclose(out_mid, ref_mid, atol=2e-3, rtol=2e-3)

    # Case 3: larger flattened batch (1280 rows -> 5 parallel 256-row tiles).
    x_big = jax.random.normal(k_x3, (40, 32, d_in), jnp.float32)
    out_big = jax.block_until_ready(fwd(x_big, params))
    assert out_big.shape == (40, 32, d_out), out_big.shape
    ref_big = mlp_forward_ref(x_big, params)
    assert jnp.allclose(out_big, ref_big, atol=2e-3, rtol=2e-3)

    print("KERNEL_OK")
</pallas_src>

<mosaic_0001>
module attributes {stable_mosaic.version = 11 : i64} {
  func.func @_mlp_fused_kernel(%arg0: i32, %arg1: memref<8x416xf32, #tpu.memory_space<vmem>>, %arg2: memref<416x832xbf16, #tpu.memory_space<vmem>>, %arg3: memref<1x832xf32, #tpu.memory_space<vmem>>, %arg4: memref<832x832xbf16, #tpu.memory_space<vmem>>, %arg5: memref<1x832xf32, #tpu.memory_space<vmem>>, %arg6: memref<832x416xbf16, #tpu.memory_space<vmem>>, %arg7: memref<1x416xf32, #tpu.memory_space<vmem>>, %arg8: memref<8x416xf32, #tpu.memory_space<vmem>>) attributes {dimension_semantics = [#tpu.dimension_semantics<parallel>], iteration_bounds = array<i64: 1>, scalar_prefetch = 0 : i64, scratch_operands = 0 : i64, tpu.core_type = #tpu.core_type<tc>, window_params = [{transform_indices = @transform_0, window_bounds = array<i64: 8, 416>}, {pipeline_mode = #tpu.pipeline_mode<synchronous>, transform_indices = @transform_1, window_bounds = array<i64: 416, 832>}, {pipeline_mode = #tpu.pipeline_mode<synchronous>, transform_indices = @transform_2, window_bounds = array<i64: 1, 832>}, {pipeline_mode = #tpu.pipeline_mode<synchronous>, transform_indices = @transform_3, window_bounds = array<i64: 832, 832>}, {pipeline_mode = #tpu.pipeline_mode<synchronous>, transform_indices = @transform_4, window_bounds = array<i64: 1, 832>}, {pipeline_mode = #tpu.pipeline_mode<synchronous>, transform_indices = @transform_5, window_bounds = array<i64: 832, 416>}, {pipeline_mode = #tpu.pipeline_mode<synchronous>, transform_indices = @transform_6, window_bounds = array<i64: 1, 416>}, {transform_indices = @transform_7, window_bounds = array<i64: 8, 416>}]} {
    %c0 = arith.constant 0 : index
    %c0_0 = arith.constant 0 : index
    %0 = vector.load %arg1[%c0, %c0_0] : memref<8x416xf32, #tpu.memory_space<vmem>>, vector<8x416xf32>
    %1 = arith.truncf %0 : vector<8x416xf32> to vector<8x416xbf16>
    %c0_1 = arith.constant 0 : index
    %c0_2 = arith.constant 0 : index
    %2 = vector.load %arg2[%c0_1, %c0_2] : memref<416x832xbf16, #tpu.memory_space<vmem>>, vector<416x832xbf16>
    %cst = arith.constant dense<0.000000e+00> : vector<8x832xf32>
    %3 = tpu.matmul %1, %2, %cst {dimension_numbers = #tpu.dot_dimension_numbers<[1], [0], [0], [1], [0, 0, 1, 1], [], []>} : vector<8x416xbf16>, vector<416x832xbf16>, vector<8x832xf32> -> vector<8x832xf32>
    %c0_3 = arith.constant 0 : index
    %c0_4 = arith.constant 0 : index
    %4 = vector.load %arg3[%c0_3, %c0_4] : memref<1x832xf32, #tpu.memory_space<vmem>>, vector<1x832xf32>
    %5 = vector.broadcast %4 : vector<1x832xf32> to vector<8x832xf32>
    %6 = arith.addf %3, %5 : vector<8x832xf32>
    %cst_5 = arith.constant 0.000000e+00 : f32
    %7 = vector.broadcast %cst_5 : f32 to vector<8x832xf32>
    %8 = arith.cmpf ogt, %6, %7 : vector<8x832xf32>
    %cst_6 = arith.constant 0.00999999977 : f32
    %9 = vector.broadcast %cst_6 : f32 to vector<8x832xf32>
    %10 = arith.mulf %9, %6 : vector<8x832xf32>
    %11 = arith.select %8, %6, %10 : vector<8x832xi1>, vector<8x832xf32>
    %12 = arith.truncf %11 : vector<8x832xf32> to vector<8x832xbf16>
    %c0_7 = arith.constant 0 : index
    %c0_8 = arith.constant 0 : index
    %13 = vector.load %arg4[%c0_7, %c0_8] : memref<832x832xbf16, #tpu.memory_space<vmem>>, vector<832x832xbf16>
    %cst_9 = arith.constant dense<0.000000e+00> : vector<8x832xf32>
    %14 = tpu.matmul %12, %13, %cst_9 {dimension_numbers = #tpu.dot_dimension_numbers<[1], [0], [0], [1], [0, 0, 1, 1], [], []>} : vector<8x832xbf16>, vector<832x832xbf16>, vector<8x832xf32> -> vector<8x832xf32>
    %c0_10 = arith.constant 0 : index
    %c0_11 = arith.constant 0 : index
    %15 = vector.load %arg5[%c0_10, %c0_11] : memref<1x832xf32, #tpu.memory_space<vmem>>, vector<1x832xf32>
    %16 = vector.broadcast %15 : vector<1x832xf32> to vector<8x832xf32>
    %17 = arith.addf %14, %16 : vector<8x832xf32>
    %cst_12 = arith.constant 0.000000e+00 : f32
    %18 = vector.broadcast %cst_12 : f32 to vector<8x832xf32>
    %19 = arith.cmpf ogt, %17, %18 : vector<8x832xf32>
    %cst_13 = arith.constant 0.00999999977 : f32
    %20 = vector.broadcast %cst_13 : f32 to vector<8x832xf32>
    %21 = arith.mulf %20, %17 : vector<8x832xf32>
    %22 = arith.select %19, %17, %21 : vector<8x832xi1>, vector<8x832xf32>
    %23 = arith.truncf %22 : vector<8x832xf32> to vector<8x832xbf16>
    %c0_14 = arith.constant 0 : index
    %c0_15 = arith.constant 0 : index
    %24 = vector.load %arg6[%c0_14, %c0_15] : memref<832x416xbf16, #tpu.memory_space<vmem>>, vector<832x416xbf16>
    %cst_16 = arith.constant dense<0.000000e+00> : vector<8x416xf32>
    %25 = tpu.matmul %23, %24, %cst_16 {dimension_numbers = #tpu.dot_dimension_numbers<[1], [0], [0], [1], [0, 0, 1, 1], [], []>} : vector<8x832xbf16>, vector<832x416xbf16>, vector<8x416xf32> -> vector<8x416xf32>
    %c0_17 = arith.constant 0 : index
    %c0_18 = arith.constant 0 : index
    %26 = vector.load %arg7[%c0_17, %c0_18] : memref<1x416xf32, #tpu.memory_space<vmem>>, vector<1x416xf32>
    %27 = vector.broadcast %26 : vector<1x416xf32> to vector<8x416xf32>
    %28 = arith.addf %25, %27 : vector<8x416xf32>
    %c0_19 = arith.constant 0 : index
    %c0_20 = arith.constant 0 : index
    %29 = vector.load %arg8[%c0_19, %c0_20] : memref<8x416xf32, #tpu.memory_space<vmem>>, vector<8x416xf32>
    tpu.vector_store %arg8[%c0_19, %c0_20], %28 {strides = array<i32>} : memref<8x416xf32, #tpu.memory_space<vmem>>, vector<8x416xf32>,
    return
  }
  func.func @transform_0(%arg0: i32) -> (i32, i32) {
    %c0_i32 = arith.constant 0 : i32
    %c0_i32_0 = arith.constant 0 : i32
    return %arg0, %c0_i32 : i32, i32
  }
  func.func @transform_1(%arg0: i32) -> (i32, i32) {
    %c0_i32 = arith.constant 0 : i32
    %c0_i32_0 = arith.constant 0 : i32
    %c0_i32_1 = arith.constant 0 : i32
    return %c0_i32, %c0_i32_0 : i32, i32
  }
  func.func @transform_2(%arg0: i32) -> (i32, i32) {
    %c0_i32 = arith.constant 0 : i32
    %c0_i32_0 = arith.constant 0 : i32
    %c0_i32_1 = arith.constant 0 : i32
    return %c0_i32, %c0_i32_0 : i32, i32
  }
  func.func @transform_3(%arg0: i32) -> (i32, i32) {
    %c0_i32 = arith.constant 0 : i32
    %c0_i32_0 = arith.constant 0 : i32
    %c0_i32_1 = arith.constant 0 : i32
    return %c0_i32, %c0_i32_0 : i32, i32
  }
  func.func @transform_4(%arg0: i32) -> (i32, i32) {
    %c0_i32 = arith.constant 0 : i32
    %c0_i32_0 = arith.constant 0 : i32
    %c0_i32_1 = arith.constant 0 : i32
    return %c0_i32, %c0_i32_0 : i32, i32
  }
  func.func @transform_5(%arg0: i32) -> (i32, i32) {
    %c0_i32 = arith.constant 0 : i32
    %c0_i32_0 = arith.constant 0 : i32
    %c0_i32_1 = arith.constant 0 : i32
    return %c0_i32, %c0_i32_0 : i32, i32
  }
  func.func @transform_6(%arg0: i32) -> (i32, i32) {
    %c0_i32 = arith.constant 0 : i32
    %c0_i32_0 = arith.constant 0 : i32
    %c0_i32_1 = arith.constant 0 : i32
    return %c0_i32, %c0_i32_0 : i32, i32
  }
  func.func @transform_7(%arg0: i32) -> (i32, i32) {
    %c0_i32 = arith.constant 0 : i32
    %c0_i32_0 = arith.constant 0 : i32
    return %arg0, %c0_i32 : i32, i32
  }
}

</mosaic_0001>

<llo_original>
// kernel: mlp_forward.1
$region0: #{mlp_forward.1}
  #allocation0 [shape = 'u32[]', space=smem, size = 0x4, offset = 0x4, fixed_abs, tag = 'smem constant byte address 0x4 - core index']
  #allocation1 [shape = 'u32[144,128]{1,0:T(1,128)}', space=vmem, size = 0x12000, scoped, tag = 'internal scratch']
  %s0 = inlined_call_operand.hbm [shape: f32[8,416], index: 0, kind: input, shape index: {}]
  %s1 = inlined_call_operand.hbm [shape: bf16[416,832], index: 1, kind: input, shape index: {}]
  %s2 = inlined_call_operand.hbm [shape: f32[1,832], index: 2, kind: input, shape index: {}]
  %s3 = inlined_call_operand.hbm [shape: bf16[832,832], index: 3, kind: input, shape index: {}]
  %s4 = inlined_call_operand.hbm [shape: f32[1,832], index: 4, kind: input, shape index: {}]
  %s5 = inlined_call_operand.hbm [shape: bf16[832,416], index: 5, kind: input, shape index: {}]
  %s6 = inlined_call_operand.hbm [shape: f32[1,416], index: 6, kind: input, shape index: {}]
  %s7 = inlined_call_operand.hbm [shape: f32[8,416], index: 7, kind: output, shape index: {}]
  %s8 = sld [smem:[#allocation0]]
  $region66: #{mlp_forward.1} parent=0
    _
  %s10 = ssub.s32 1, %s8
  %s11 = scalar_select 0, %s10, %s8
  $region1: #{mlp_forward.1} parent=0
    #allocation2 [shape = 'u8[16384]{0}', space=vmem, size = 0x4000, scoped, tag = 'input window, operand 0, single buffered']
    #allocation3 [shape = 's32[1]{0}', space=sflag, size = 0x4, scoped, tag = 'scoped memory for mlp_forward.1']
    #allocation4 [shape = 's32[1]{0}', space=sflag, size = 0x4, scoped, tag = 'scoped memory for mlp_forward.1']
    #allocation5 [shape = 'u8[745472]{0}', space=vmem, size = 0xb6000, scoped, tag = 'input window, operand 1, single buffered']
    #allocation6 [shape = 's32[1]{0}', space=sflag, size = 0x4, scoped, tag = 'scoped memory for mlp_forward.1']
    #allocation7 [shape = 'u8[3584]{0}', space=vmem, size = 0x1000, scoped, tag = 'input window, operand 2, single buffered']
    #allocation8 [shape = 'u8[1490944]{0}', space=vmem, size = 0x16c000, scoped, tag = 'input window, operand 3, single buffered']
    #allocation9 [shape = 's32[1]{0}', space=sflag, size = 0x4, scoped, tag = 'scoped memory for mlp_forward.1']
    #allocation10 [shape = 'u8[3584]{0}', space=vmem, size = 0x1000, scoped, tag = 'input window, operand 4, single buffered']
    #allocation11 [shape = 'u8[851968]{0}', space=vmem, size = 0xd0000, scoped, tag = 'input window, operand 5, single buffered']
    #allocation12 [shape = 's32[1]{0}', space=sflag, size = 0x4, scoped, tag = 'scoped memory for mlp_forward.1']
    #allocation13 [shape = 'u8[2048]{0}', space=vmem, size = 0x800, scoped, tag = 'input window, operand 6, single buffered']
    #allocation14 [shape = 'u8[16384]{0}', space=vmem, size = 0x4000, scoped, tag = 'output window, operand 0, single buffered']
    %12 = vsyncpa [#allocation3], 0
    %13 = vsyncpa [#allocation6], 0
    %14 = vsyncpa [#allocation9], 0
    %15 = vsyncpa [#allocation12], 0
    %16 = vsyncpa [#allocation4], 0
    // Predicated region
    $region2: #{mlp_forward.1} parent=1 // pred_check
      _
    $region3: #{mlp_forward.1} parent=1 // pred_check_branch
      %18 = sbr.rel (0) target = $region5
    $region4: #{mlp_forward.1} parent=1 // pred_region
      %s20 = ssub.s32 512, 512
      %21 = vsyncadd [#allocation3], %s20
      %s23 = sshll.u32 [#allocation2], 4
      %s24 = int_to_ptr.vmem [resolvable:$true] %s23
      %26 = dma.hbm_to_vmem [thread:$0]  %s0, 512, %s24, [#allocation3]
    $region5: #{mlp_forward.1} parent=1 // pred_fallthru
      _
    // Predicated region
    $region6: #{mlp_forward.1} parent=1 // pred_check
      _
    $region7: #{mlp_forward.1} parent=1 // pred_check_branch
      %28 = sbr.rel (0) target = $region9
    $region8: #{mlp_forward.1} parent=1 // pred_region
      %s30 = ssub.s32 23296, 23296
      %31 = vsyncadd [#allocation6], %s30
      %s32 = sshll.u32 [#allocation5], 4
      %s33 = int_to_ptr.vmem [resolvable:$true] %s32
      %38 = dma.hbm_to_vmem [thread:$0]  %s1, 23296, %s33, [#allocation6], 448, 448, 28
    $region9: #{mlp_forward.1} parent=1 // pred_fallthru
      _
    // Predicated region
    $region10: #{mlp_forward.1} parent=1 // pred_check
      _
    $region11: #{mlp_forward.1} parent=1 // pred_check_branch
      %40 = sbr.rel (0) target = $region13
    $region12: #{mlp_forward.1} parent=1 // pred_region
      %s42 = ssub.s32 112, 112
      %43 = vsyncadd [#allocation6], %s42
      %s45 = sshll.u32 [#allocation7], 4
      %s46 = int_to_ptr.vmem [resolvable:$true] %s45
      %48 = dma.hbm_to_vmem [thread:$0]  %s2, 112, %s46, [#allocation6]
    $region13: #{mlp_forward.1} parent=1 // pred_fallthru
      _
    // Predicated region
    $region14: #{mlp_forward.1} parent=1 // pred_check
      _
    $region15: #{mlp_forward.1} parent=1 // pred_check_branch
      %50 = sbr.rel (0) target = $region17
    $region16: #{mlp_forward.1} parent=1 // pred_region
      %s52 = ssub.s32 46592, 46592
      %53 = vsyncadd [#allocation9], %s52
      %s54 = sshll.u32 [#allocation8], 4
      %s55 = int_to_ptr.vmem [resolvable:$true] %s54
      %60 = dma.hbm_to_vmem [thread:$0]  %s3, 46592, %s55, [#allocation9], 448, 448, 28
    $region17: #{mlp_forward.1} parent=1 // pred_fallthru
      _
    // Predicated region
    $region18: #{mlp_forward.1} parent=1 // pred_check
      _
    $region19: #{mlp_forward.1} parent=1 // pred_check_branch
      %62 = sbr.rel (0) target = $region21
    $region20: #{mlp_forward.1} parent=1 // pred_region
      %s64 = ssub.s32 112, 112
      %65 = vsyncadd [#allocation9], %s64
      %s67 = sshll.u32 [#allocation10], 4
      %s68 = int_to_ptr.vmem [resolvable:$true] %s67
      %70 = dma.hbm_to_vmem [thread:$0]  %s4, 112, %s68, [#allocation9]
    $region21: #{mlp_forward.1} parent=1 // pred_fallthru
      _
    // Predicated region
    $region22: #{mlp_forward.1} parent=1 // pred_check
      _
    $region23: #{mlp_forward.1} parent=1 // pred_check_branch
      %72 = sbr.rel (0) target = $region25
    $region24: #{mlp_forward.1} parent=1 // pred_region
      %s74 = ssub.s32 26624, 26624
      %75 = vsyncadd [#allocation12], %s74
      %s76 = sshll.u32 [#allocation11], 4
      %s77 = int_to_ptr.vmem [resolvable:$true] %s76
      %82 = dma.hbm_to_vmem [thread:$0]  %s5, 26624, %s77, [#allocation12], 256, 256, 16
    $region25: #{mlp_forward.1} parent=1 // pred_fallthru
      _
    // Predicated region
    $region26: #{mlp_forward.1} parent=1 // pred_check
      _
    $region27: #{mlp_forward.1} parent=1 // pred_check_branch
      %84 = sbr.rel (0) target = $region29
    $region28: #{mlp_forward.1} parent=1 // pred_region
      %s86 = ssub.s32 64, 64
      %87 = vsyncadd [#allocation12], %s86
      %s89 = sshll.u32 [#allocation13], 4
      %s90 = int_to_ptr.vmem [resolvable:$true] %s89
      %92 = dma.hbm_to_vmem [thread:$0]  %s6, 64, %s90, [#allocation12]
    $region29: #{mlp_forward.1} parent=1 // pred_fallthru
      _
    // Predicated region
    $region30: #{mlp_forward.1} parent=1 // pred_check
      _
    $region31: #{mlp_forward.1} parent=1 // pred_check_branch
      %94 = sbr.rel (0) target = $region33
    $region32: #{mlp_forward.1} parent=1 // pred_region
      %95 = dma.done [#allocation3], 512
    $region33: #{mlp_forward.1} parent=1 // pred_fallthru
      _
    // Predicated region
    $region34: #{mlp_forward.1} parent=1 // pred_check
      _
    $region35: #{mlp_forward.1} parent=1 // pred_check_branch
      %97 = sbr.rel (0) target = $region37
    $region36: #{mlp_forward.1} parent=1 // pred_region
      %98 = dma.done [#allocation6], 23296
    $region37: #{mlp_forward.1} parent=1 // pred_fallthru
      _
    // Predicated region
    $region38: #{mlp_forward.1} parent=1 // pred_check
      _
    $region39: #{mlp_forward.1} parent=1 // pred_check_branch
      %100 = sbr.rel (0) target = $region41
    $region40: #{mlp_forward.1} parent=1 // pred_region
      %101 = dma.done [#allocation6], 112
    $region41: #{mlp_forward.1} parent=1 // pred_fallthru
      _
    // Predicated region
    $region42: #{mlp_forward.1} parent=1 // pred_check
      _
    $region43: #{mlp_forward.1} parent=1 // pred_check_branch
      %103 = sbr.rel (0) target = $region45
    $region44: #{mlp_forward.1} parent=1 // pred_region
      %104 = dma.done [#allocation9], 46592
    $region45: #{mlp_forward.1} parent=1 // pred_fallthru
      _
    // Predicated region
    $region46: #{mlp_forward.1} parent=1 // pred_check
      _
    $region47: #{mlp_forward.1} parent=1 // pred_check_branch
      %106 = sbr.rel (0) target = $region49
    $region48: #{mlp_forward.1} parent=1 // pred_region
      %107 = dma.done [#allocation9], 112
    $region49: #{mlp_forward.1} parent=1 // pred_fallthru
      _
    // Predicated region
    $region50: #{mlp_forward.1} parent=1 // pred_check
      _
    $region51: #{mlp_forward.1} parent=1 // pred_check_branch
      %109 = sbr.rel (0) target = $region53
    $region52: #{mlp_forward.1} parent=1 // pred_region
      %110 = dma.done [#allocation12], 26624
    $region53: #{mlp_forward.1} parent=1 // pred_fallthru
      _
    // Predicated region
    $region54: #{mlp_forward.1} parent=1 // pred_check
      _
    $region55: #{mlp_forward.1} parent=1 // pred_check_branch
      %112 = sbr.rel (0) target = $region57
    $region56: #{mlp_forward.1} parent=1 // pred_region
      %113 = dma.done [#allocation12], 64
    $region57: #{mlp_forward.1} parent=1 // pred_fallthru
      _
    %v115 = vld [vmem:[#allocation2] sm:$0xff]
    %v116 = vld [vmem:[#allocation2 + $0x8] sm:$0xff]
    %v117 = vld [vmem:[#allocation2 + $0x10] sm:$0xff]
    %v118 = vld [vmem:[#allocation2 + $0x18] sm:$0xff]
    %v119 = vpack.c.bf16 %v115, %v115
    %v120 = vpack.c.bf16 %v116, %v116
    %v121 = vpack.c.bf16 %v117, %v117
    %v122 = vpack.c.bf16 %v118, %v118
    %v123 = vld [vmem:[#allocation5] sm:$0xff]
    %v124 = vld [vmem:[#allocation5 + $0x8] sm:$0xff]
    %v125 = vld [vmem:[#allocation5 + $0x10] sm:$0xff]
    %v126 = vld [vmem:[#allocation5 + $0x18] sm:$0xf]
    %v127 = vld [vmem:[#allocation5 + $0x1c] sm:$0xff]
    %v128 = vld [vmem:[#allocation5 + $0x24] sm:$0xff]
    %v129 = vld [vmem:[#allocation5 + $0x2c] sm:$0xff]
    %v130 = vld [vmem:[#allocation5 + $0x34] sm:$0xf]
    %v131 = vld [vmem:[#allocation5 + $0x38] sm:$0xff]
    %v132 = vld [vmem:[#allocation5 + $0x40] sm:$0xff]
    %v133 = vld [vmem:[#allocation5 + $0x48] sm:$0xff]
    %v134 = vld [vmem:[#allocation5 + $0x50] sm:$0xf]
    %v135 = vld [vmem:[#allocation5 + $0x54] sm:$0xff]
    %v136 = vld [vmem:[#allocation5 + $0x5c] sm:$0xff]
    %v137 = vld [vmem:[#allocation5 + $0x64] sm:$0xff]
    %v138 = vld [vmem:[#allocation5 + $0x6c] sm:$0xf]
    %v139 = vld [vmem:[#allocation5 + $0x70] sm:$0xff]
    %v140 = vld [vmem:[#allocation5 + $0x78] sm:$0xff]
    %v141 = vld [vmem:[#allocation5 + $0x80] sm:$0xff]
    %v142 = vld [vmem:[#allocation5 + $0x88] sm:$0xf]
    %v143 = vld [vmem:[#allocation5 + $0x8c] sm:$0xff]
    %v144 = vld [vmem:[#allocation5 + $0x94] sm:$0xff]
    %v145 = vld [vmem:[#allocation5 + $0x9c] sm:$0xff]
    %v146 = vld [vmem:[#allocation5 + $0xa4] sm:$0xf]
    %v147 = vld [vmem:[#allocation5 + $0xa8] sm:$0xff]
    %v148 = vld [vmem:[#allocation5 + $0xb0] sm:$0xff]
    %v149 = vld [vmem:[#allocation5 + $0xb8] sm:$0xff]
    %v150 = vld [vmem:[#allocation5 + $0xc0] sm:$0xf]
    %v151 = vld [vmem:[#allocation5 + $0xc4] sm:$0xff]
    %v152 = vld [vmem:[#allocation5 + $0xcc] sm:$0xff]
    %v153 = vld [vmem:[#allocation5 + $0xd4] sm:$0xff]
    %v154 = vld [vmem:[#allocation5 + $0xdc] sm:$0xf]
    %v155 = vld [vmem:[#allocation5 + $0xe0] sm:$0xff]
    %v156 = vld [vmem:[#allocation5 + $0xe8] sm:$0xff]
    %v157 = vld [vmem:[#allocation5 + $0xf0] sm:$0xff]
    %v158 = vld [vmem:[#allocation5 + $0xf8] sm:$0xf]
    %v159 = vld [vmem:[#allocation5 + $0xfc] sm:$0xff]
    %v160 = vld [vmem:[#allocation5 + $0x104] sm:$0xff]
    %v161 = vld [vmem:[#allocation5 + $0x10c] sm:$0xff]
    %v162 = vld [vmem:[#allocation5 + $0x114] sm:$0xf]
    %v163 = vld [vmem:[#allocation5 + $0x118] sm:$0xff]
    %v164 = vld [vmem:[#allocation5 + $0x120] sm:$0xff]
    %v165 = vld [vmem:[#allocation5 + $0x128] sm:$0xff]
    %v166 = vld [vmem:[#allocation5 + $0x130] sm:$0xf]
    %v167 = vld [vmem:[#allocation5 + $0x134] sm:$0xff]
    %v168 = vld [vmem:[#allocation5 + $0x13c] sm:$0xff]
    %v169 = vld [vmem:[#allocation5 + $0x144] sm:$0xff]
    %v170 = vld [vmem:[#allocation5 + $0x14c] sm:$0xf]
    %v171 = vld [vmem:[#allocation5 + $0x150] sm:$0xff]
    %v172 = vld [vmem:[#allocation5 + $0x158] sm:$0xff]
    %v173 = vld [vmem:[#allocation5 + $0x160] sm:$0xff]
    %v174 = vld [vmem:[#allocation5 + $0x168] sm:$0xf]
    %v175 = vld [vmem:[#allocation5 + $0x16c] sm:$0xff]
    %v176 = vld [vmem:[#allocation5 + $0x174] sm:$0xff]
    %v177 = vld [vmem:[#allocation5 + $0x17c] sm:$0xff]
    %v178 = vld [vmem:[#allocation5 + $0x184] sm:$0xf]
    %v179 = vld [vmem:[#allocation5 + $0x188] sm:$0xff]
    %v180 = vld [vmem:[#allocation5 + $0x190] sm:$0xff]
    %v181 = vld [vmem:[#allocation5 + $0x198] sm:$0xff]
    %v182 = vld [vmem:[#allocation5 + $0x1a0] sm:$0xf]
    %v183 = vld [vmem:[#allocation5 + $0x1a4] sm:$0xff]
    %v184 = vld [vmem:[#allocation5 + $0x1ac] sm:$0xff]
    %v185 = vld [vmem:[#allocation5 + $0x1b4] sm:$0xff]
    %v186 = vld [vmem:[#allocation5 + $0x1bc] sm:$0xf]
    %v187 = vld [vmem:[#allocation5 + $0x1c0] sm:$0xff]
    %v188 = vld [vmem:[#allocation5 + $0x1c8] sm:$0xff]
    %v189 = vld [vmem:[#allocation5 + $0x1d0] sm:$0xff]
    %v190 = vld [vmem:[#allocation5 + $0x1d8] sm:$0xf]
    %v191 = vld [vmem:[#allocation5 + $0x1dc] sm:$0xff]
    %v192 = vld [vmem:[#allocation5 + $0x1e4] sm:$0xff]
    %v193 = vld [vmem:[#allocation5 + $0x1ec] sm:$0xff]
    %v194 = vld [vmem:[#allocation5 + $0x1f4] sm:$0xf]
    %v195 = vld [vmem:[#allocation5 + $0x1f8] sm:$0xff]
    %v196 = vld [vmem:[#allocation5 + $0x200] sm:$0xff]
    %v197 = vld [vmem:[#allocation5 + $0x208] sm:$0xff]
    %v198 = vld [vmem:[#allocation5 + $0x210] sm:$0xf]
    %v199 = vld [vmem:[#allocation5 + $0x214] sm:$0xff]
    %v200 = vld [vmem:[#allocation5 + $0x21c] sm:$0xff]
    %v201 = vld [vmem:[#allocation5 + $0x224] sm:$0xff]
    %v202 = vld [vmem:[#allocation5 + $0x22c] sm:$0xf]
    %v203 = vld [vmem:[#allocation5 + $0x230] sm:$0xff]
    %v204 = vld [vmem:[#allocation5 + $0x238] sm:$0xff]
    %v205 = vld [vmem:[#allocation5 + $0x240] sm:$0xff]
    %v206 = vld [vmem:[#allocation5 + $0x248] sm:$0xf]
    %v207 = vld [vmem:[#allocation5 + $0x24c] sm:$0xff]
    %v208 = vld [vmem:[#allocation5 + $0x254] sm:$0xff]
    %v209 = vld [vmem:[#allocation5 + $0x25c] sm:$0xff]
    %v210 = vld [vmem:[#allocation5 + $0x264] sm:$0xf]
    %v211 = vld [vmem:[#allocation5 + $0x268] sm:$0xff]
    %v212 = vld [vmem:[#allocation5 + $0x270] sm:$0xff]
    %v213 = vld [vmem:[#allocation5 + $0x278] sm:$0xff]
    %v214 = vld [vmem:[#allocation5 + $0x280] sm:$0xf]
    %v215 = vld [vmem:[#allocation5 + $0x284] sm:$0xff]
    %v216 = vld [vmem:[#allocation5 + $0x28c] sm:$0xff]
    %v217 = vld [vmem:[#allocation5 + $0x294] sm:$0xff]
    %v218 = vld [vmem:[#allocation5 + $0x29c] sm:$0xf]
    %v219 = vld [vmem:[#allocation5 + $0x2a0] sm:$0xff]
    %v220 = vld [vmem:[#allocation5 + $0x2a8] sm:$0xff]
    %v221 = vld [vmem:[#allocation5 + $0x2b0] sm:$0xff]
    %v222 = vld [vmem:[#allocation5 + $0x2b8] sm:$0xf]
    %v223 = vld [vmem:[#allocation5 + $0x2bc] sm:$0xff]
    %v224 = vld [vmem:[#allocation5 + $0x2c4] sm:$0xff]
    %v225 = vld [vmem:[#allocation5 + $0x2cc] sm:$0xff]
    %v226 = vld [vmem:[#allocation5 + $0x2d4] sm:$0xf]
    %v227 = vld [vmem:[#allocation5 + $0x2d8] sm:$0xff]
    %v228 = vld [vmem:[#allocation5 + $0x2e0] sm:$0xff]
    %v229 = vld [vmem:[#allocation5 + $0x2e8] sm:$0xff]
    %v230 = vld [vmem:[#allocation5 + $0x2f0] sm:$0xf]
    %v231 = vld [vmem:[#allocation5 + $0x2f4] sm:$0xff]
    %v232 = vld [vmem:[#allocation5 + $0x2fc] sm:$0xff]
    %v233 = vld [vmem:[#allocation5 + $0x304] sm:$0xff]
    %v234 = vld [vmem:[#allocation5 + $0x30c] sm:$0xf]
    %v235 = vld [vmem:[#allocation5 + $0x310] sm:$0xff]
    %v236 = vld [vmem:[#allocation5 + $0x318] sm:$0xff]
    %v237 = vld [vmem:[#allocation5 + $0x320] sm:$0xff]
    %v238 = vld [vmem:[#allocation5 + $0x328] sm:$0xf]
    %v239 = vld [vmem:[#allocation5 + $0x32c] sm:$0xff]
    %v240 = vld [vmem:[#allocation5 + $0x334] sm:$0xff]
    %v241 = vld [vmem:[#allocation5 + $0x33c] sm:$0xff]
    %v242 = vld [vmem:[#allocation5 + $0x344] sm:$0xf]
    %v243 = vld [vmem:[#allocation5 + $0x348] sm:$0xff]
    %v244 = vld [vmem:[#allocation5 + $0x350] sm:$0xff]
    %v245 = vld [vmem:[#allocation5 + $0x358] sm:$0xff]
    %v246 = vld [vmem:[#allocation5 + $0x360] sm:$0xf]
    %v247 = vld [vmem:[#allocation5 + $0x364] sm:$0xff]
    %v248 = vld [vmem:[#allocation5 + $0x36c] sm:$0xff]
    %v249 = vld [vmem:[#allocation5 + $0x374] sm:$0xff]
    %v250 = vld [vmem:[#allocation5 + $0x37c] sm:$0xf]
    %v251 = vld [vmem:[#allocation5 + $0x380] sm:$0xff]
    %v252 = vld [vmem:[#allocation5 + $0x388] sm:$0xff]
    %v253 = vld [vmem:[#allocation5 + $0x390] sm:$0xff]
    %v254 = vld [vmem:[#allocation5 + $0x398] sm:$0xf]
    %v255 = vld [vmem:[#allocation5 + $0x39c] sm:$0xff]
    %v256 = vld [vmem:[#allocation5 + $0x3a4] sm:$0xff]
    %v257 = vld [vmem:[#allocation5 + $0x3ac] sm:$0xff]
    %v258 = vld [vmem:[#allocation5 + $0x3b4] sm:$0xf]
    %v259 = vld [vmem:[#allocation5 + $0x3b8] sm:$0xff]
    %v260 = vld [vmem:[#allocation5 + $0x3c0] sm:$0xff]
    %v261 = vld [vmem:[#allocation5 + $0x3c8] sm:$0xff]
    %v262 = vld [vmem:[#allocation5 + $0x3d0] sm:$0xf]
    %v263 = vld [vmem:[#allocation5 + $0x3d4] sm:$0xff]
    %v264 = vld [vmem:[#allocation5 + $0x3dc] sm:$0xff]
    %v265 = vld [vmem:[#allocation5 + $0x3e4] sm:$0xff]
    %v266 = vld [vmem:[#allocation5 + $0x3ec] sm:$0xf]
    %v267 = vld [vmem:[#allocation5 + $0x3f0] sm:$0xff]
    %v268 = vld [vmem:[#allocation5 + $0x3f8] sm:$0xff]
    %v269 = vld [vmem:[#allocation5 + $0x400] sm:$0xff]
    %v270 = vld [vmem:[#allocation5 + $0x408] sm:$0xf]
    %v271 = vld [vmem:[#allocation5 + $0x40c] sm:$0xff]
    %v272 = vld [vmem:[#allocation5 + $0x414] sm:$0xff]
    %v273 = vld [vmem:[#allocation5 + $0x41c] sm:$0xff]
    %v274 = vld [vmem:[#allocation5 + $0x424] sm:$0xf]
    %v275 = vld [vmem:[#allocation5 + $0x428] sm:$0xff]
    %v276 = vld [vmem:[#allocation5 + $0x430] sm:$0xff]
    %v277 = vld [vmem:[#allocation5 + $0x438] sm:$0xff]
    %v278 = vld [vmem:[#allocation5 + $0x440] sm:$0xf]
    %v279 = vld [vmem:[#allocation5 + $0x444] sm:$0xff]
    %v280 = vld [vmem:[#allocation5 + $0x44c] sm:$0xff]
    %v281 = vld [vmem:[#allocation5 + $0x454] sm:$0xff]
    %v282 = vld [vmem:[#allocation5 + $0x45c] sm:$0xf]
    %v283 = vld [vmem:[#allocation5 + $0x460] sm:$0xff]
    %v284 = vld [vmem:[#allocation5 + $0x468] sm:$0xff]
    %v285 = vld [vmem:[#allocation5 + $0x470] sm:$0xff]
    %v286 = vld [vmem:[#allocation5 + $0x478] sm:$0xf]
    %v287 = vld [vmem:[#allocation5 + $0x47c] sm:$0xff]
    %v288 = vld [vmem:[#allocation5 + $0x484] sm:$0xff]
    %v289 = vld [vmem:[#allocation5 + $0x48c] sm:$0xff]
    %v290 = vld [vmem:[#allocation5 + $0x494] sm:$0xf]
    %v291 = vld [vmem:[#allocation5 + $0x498] sm:$0xff]
    %v292 = vld [vmem:[#allocation5 + $0x4a0] sm:$0xff]
    %v293 = vld [vmem:[#allocation5 + $0x4a8] sm:$0xff]
    %v294 = vld [vmem:[#allocation5 + $0x4b0] sm:$0xf]
    %v295 = vld [vmem:[#allocation5 + $0x4b4] sm:$0xff]
    %v296 = vld [vmem:[#allocation5 + $0x4bc] sm:$0xff]
    %v297 = vld [vmem:[#allocation5 + $0x4c4] sm:$0xff]
    %v298 = vld [vmem:[#allocation5 + $0x4cc] sm:$0xf]
    %v299 = vld [vmem:[#allocation5 + $0x4d0] sm:$0xff]
    %v300 = vld [vmem:[#allocation5 + $0x4d8] sm:$0xff]
    %v301 = vld [vmem:[#allocation5 + $0x4e0] sm:$0xff]
    %v302 = vld [vmem:[#allocation5 + $0x4e8] sm:$0xf]
    %v303 = vld [vmem:[#allocation5 + $0x4ec] sm:$0xff]
    %v304 = vld [vmem:[#allocation5 + $0x4f4] sm:$0xff]
    %v305 = vld [vmem:[#allocation5 + $0x4fc] sm:$0xff]
    %v306 = vld [vmem:[#allocation5 + $0x504] sm:$0xf]
    %v307 = vld [vmem:[#allocation5 + $0x508] sm:$0xff]
    %v308 = vld [vmem:[#allocation5 + $0x510] sm:$0xff]
    %v309 = vld [vmem:[#allocation5 + $0x518] sm:$0xff]
    %v310 = vld [vmem:[#allocation5 + $0x520] sm:$0xf]
    %v311 = vld [vmem:[#allocation5 + $0x524] sm:$0xff]
    %v312 = vld [vmem:[#allocation5 + $0x52c] sm:$0xff]
    %v313 = vld [vmem:[#allocation5 + $0x534] sm:$0xff]
    %v314 = vld [vmem:[#allocation5 + $0x53c] sm:$0xf]
    %v315 = vld [vmem:[#allocation5 + $0x540] sm:$0xff]
    %v316 = vld [vmem:[#allocation5 + $0x548] sm:$0xff]
    %v317 = vld [vmem:[#allocation5 + $0x550] sm:$0xff]
    %v318 = vld [vmem:[#allocation5 + $0x558] sm:$0xf]
    %v319 = vld [vmem:[#allocation5 + $0x55c] sm:$0xff]
    %v320 = vld [vmem:[#allocation5 + $0x564] sm:$0xff]
    %v321 = vld [vmem:[#allocation5 + $0x56c] sm:$0xff]
    %v322 = vld [vmem:[#allocation5 + $0x574] sm:$0xf]
    %v323 = vld [vmem:[#allocation5 + $0x578] sm:$0xff]
    %v324 = vld [vmem:[#allocation5 + $0x580] sm:$0xff]
    %v325 = vld [vmem:[#allocation5 + $0x588] sm:$0xff]
    %v326 = vld [vmem:[#allocation5 + $0x590] sm:$0xf]
    %v327 = vld [vmem:[#allocation5 + $0x594] sm:$0xff]
    %v328 = vld [vmem:[#allocation5 + $0x59c] sm:$0xff]
    %v329 = vld [vmem:[#allocation5 + $0x5a4] sm:$0xff]
    %v330 = vld [vmem:[#allocation5 + $0x5ac] sm:$0xf]
    %v331 = vld [vmem:[#allocation7] sm:$0x7f]
    %v333 = vlaneseq
    %v334 = vshrl.u32 %v333, 7
    %v335 = vsub.s32 0, %v334
    %v336 = vrot.slane %v331, %v335
    %v337 = vlaneseq
    %v338 = vshrl.u32 %v337, 7
    %v339 = vsub.s32 1, %v338
    %v340 = vrot.slane %v331, %v339
    %v341 = vlaneseq
    %v342 = vshrl.u32 %v341, 7
    %v343 = vsub.s32 2, %v342
    %v344 = vrot.slane %v331, %v343
    %v345 = vlaneseq
    %v346 = vshrl.u32 %v345, 7
    %v347 = vsub.s32 3, %v346
    %v348 = vrot.slane %v331, %v347
    %v349 = vlaneseq
    %v350 = vshrl.u32 %v349, 7
    %v351 = vsub.s32 4, %v350
    %v352 = vrot.slane %v331, %v351
    %v353 = vlaneseq
    %v354 = vshrl.u32 %v353, 7
    %v355 = vsub.s32 5, %v354
    %v356 = vrot.slane %v331, %v355
    %v357 = vlaneseq
    %v358 = vshrl.u32 %v357, 7
    %v359 = vsub.s32 6, %v358
    %v360 = vrot.slane %v331, %v359
    %v576 = vunpack.c.l.b16 %v123
    %v577 = vunpack.c.h.b16 %v123
    %v578 = vunpack.c.l.b16 %v124
    %v579 = vunpack.c.h.b16 %v124
    %v580 = vunpack.c.l.b16 %v125
    %v581 = vunpack.c.h.b16 %v125
    %v582 = vunpack.c.l.b16 %v126
    %v583 = vunpack.c.l.b16 %v127
    %v584 = vunpack.c.h.b16 %v127
    %v585 = vunpack.c.l.b16 %v128
    %v586 = vunpack.c.h.b16 %v128
    %v587 = vunpack.c.l.b16 %v129
    %v588 = vunpack.c.h.b16 %v129
    %v589 = vunpack.c.l.b16 %v130
    %v590 = vunpack.c.l.b16 %v131
    %v591 = vunpack.c.h.b16 %v131
    %v592 = vunpack.c.l.b16 %v132
    %v593 = vunpack.c.h.b16 %v132
    %v594 = vunpack.c.l.b16 %v133
    %v595 = vunpack.c.h.b16 %v133
    %v596 = vunpack.c.l.b16 %v134
    %v597 = vunpack.c.l.b16 %v135
    %v598 = vunpack.c.h.b16 %v135
    %v599 = vunpack.c.l.b16 %v136
    %v600 = vunpack.c.h.b16 %v136
    %v601 = vunpack.c.l.b16 %v137
    %v602 = vunpack.c.h.b16 %v137
    %v603 = vunpack.c.l.b16 %v138
    %v604 = vunpack.c.l.b16 %v139
    %v605 = vunpack.c.h.b16 %v139
    %v606 = vunpack.c.l.b16 %v140
    %v607 = vunpack.c.h.b16 %v140
    %v608 = vunpack.c.l.b16 %v141
    %v609 = vunpack.c.h.b16 %v141
    %v610 = vunpack.c.l.b16 %v142
    %v611 = vunpack.c.l.b16 %v143
    %v612 = vunpack.c.h.b16 %v143
    %v613 = vunpack.c.l.b16 %v144
    %v614 = vunpack.c.h.b16 %v144
    %v615 = vunpack.c.l.b16 %v145
    %v616 = vunpack.c.h.b16 %v145
    %v617 = vunpack.c.l.b16 %v146
    %v618 = vunpack.c.l.b16 %v147
    %v619 = vunpack.c.h.b16 %v147
    %v620 = vunpack.c.l.b16 %v148
    %v621 = vunpack.c.h.b16 %v148
    %v622 = vunpack.c.l.b16 %v149
    %v623 = vunpack.c.h.b16 %v149
    %v624 = vunpack.c.l.b16 %v150
    %v625 = vunpack.c.l.b16 %v151
    %v626 = vunpack.c.h.b16 %v151
    %v627 = vunpack.c.l.b16 %v152
    %v628 = vunpack.c.h.b16 %v152
    %v629 = vunpack.c.l.b16 %v153
    %v630 = vunpack.c.h.b16 %v153
    %v631 = vunpack.c.l.b16 %v154
    %v632 = vunpack.c.l.b16 %v155
    %v633 = vunpack.c.h.b16 %v155
    %v634 = vunpack.c.l.b16 %v156
    %v635 = vunpack.c.h.b16 %v156
    %v636 = vunpack.c.l.b16 %v157
    %v637 = vunpack.c.h.b16 %v157
    %v638 = vunpack.c.l.b16 %v158
    %v639 = vunpack.c.l.b16 %v159
    %v640 = vunpack.c.h.b16 %v159
    %v641 = vunpack.c.l.b16 %v160
    %v642 = vunpack.c.h.b16 %v160
    %v643 = vunpack.c.l.b16 %v161
    %v644 = vunpack.c.h.b16 %v161
    %v645 = vunpack.c.l.b16 %v162
    %v646 = vunpack.c.l.b16 %v163
    %v647 = vunpack.c.h.b16 %v163
    %v648 = vunpack.c.l.b16 %v164
    %v649 = vunpack.c.h.b16 %v164
    %v650 = vunpack.c.l.b16 %v165
    %v651 = vunpack.c.h.b16 %v165
    %v652 = vunpack.c.l.b16 %v166
    %v653 = vunpack.c.l.b16 %v167
    %v654 = vunpack.c.h.b16 %v167
    %v655 = vunpack.c.l.b16 %v168
    %v656 = vunpack.c.h.b16 %v168
    %v657 = vunpack.c.l.b16 %v169
    %v658 = vunpack.c.h.b16 %v169
    %v659 = vunpack.c.l.b16 %v170
    %v660 = vunpack.c.l.b16 %v171
    %v661 = vunpack.c.h.b16 %v171
    %v662 = vunpack.c.l.b16 %v172
    %v663 = vunpack.c.h.b16 %v172
    %v664 = vunpack.c.l.b16 %v173
    %v665 = vunpack.c.h.b16 %v173
    %v666 = vunpack.c.l.b16 %v174
    %v667 = vunpack.c.l.b16 %v175
    %v668 = vunpack.c.h.b16 %v175
    %v669 = vunpack.c.l.b16 %v176
    %v670 = vunpack.c.h.b16 %v176
    %v671 = vunpack.c.l.b16 %v177
    %v672 = vunpack.c.h.b16 %v177
    %v673 = vunpack.c.l.b16 %v178
    %v674 = vunpack.c.l.b16 %v179
    %v675 = vunpack.c.h.b16 %v179
    %v676 = vunpack.c.l.b16 %v180
    %v677 = vunpack.c.h.b16 %v180
    %v678 = vunpack.c.l.b16 %v181
    %v679 = vunpack.c.h.b16 %v181
    %v680 = vunpack.c.l.b16 %v182
    %v681 = vunpack.c.l.b16 %v183
    %v682 = vunpack.c.h.b16 %v183
    %v683 = vunpack.c.l.b16 %v184
    %v684 = vunpack.c.h.b16 %v184
    %v685 = vunpack.c.l.b16 %v185
    %v686 = vunpack.c.h.b16 %v185
    %v687 = vunpack.c.l.b16 %v186
    %v688 = vunpack.c.l.b16 %v187
    %v689 = vunpack.c.h.b16 %v187
    %v690 = vunpack.c.l.b16 %v188
    %v691 = vunpack.c.h.b16 %v188
    %v692 = vunpack.c.l.b16 %v189
    %v693 = vunpack.c.h.b16 %v189
    %v694 = vunpack.c.l.b16 %v190
    %v695 = vunpack.c.l.b16 %v191
    %v696 = vunpack.c.h.b16 %v191
    %v697 = vunpack.c.l.b16 %v192
    %v698 = vunpack.c.h.b16 %v192
    %v699 = vunpack.c.l.b16 %v193
    %v700 = vunpack.c.h.b16 %v193
    %v701 = vunpack.c.l.b16 %v194
    %v702 = vunpack.c.l.b16 %v195
    %v703 = vunpack.c.h.b16 %v195
    %v704 = vunpack.c.l.b16 %v196
    %v705 = vunpack.c.h.b16 %v196
    %v706 = vunpack.c.l.b16 %v197
    %v707 = vunpack.c.h.b16 %v197
    %v708 = vunpack.c.l.b16 %v198
    %v709 = vunpack.c.l.b16 %v199
    %v710 = vunpack.c.h.b16 %v199
    %v711 = vunpack.c.l.b16 %v200
    %v712 = vunpack.c.h.b16 %v200
    %v713 = vunpack.c.l.b16 %v201
    %v714 = vunpack.c.h.b16 %v201
    %v715 = vunpack.c.l.b16 %v202
    %v716 = vunpack.c.l.b16 %v203
    %v717 = vunpack.c.h.b16 %v203
    %v718 = vunpack.c.l.b16 %v204
    %v719 = vunpack.c.h.b16 %v204
    %v720 = vunpack.c.l.b16 %v205
    %v721 = vunpack.c.h.b16 %v205
    %v722 = vunpack.c.l.b16 %v206
    %v723 = vunpack.c.l.b16 %v207
    %v724 = vunpack.c.h.b16 %v207
    %v725 = vunpack.c.l.b16 %v208
    %v726 = vunpack.c.h.b16 %v208
    %v727 = vunpack.c.l.b16 %v209
    %v728 = vunpack.c.h.b16 %v209
    %v729 = vunpack.c.l.b16 %v210
    %v730 = vunpack.c.l.b16 %v211
    %v731 = vunpack.c.h.b16 %v211
    %v732 = vunpack.c.l.b16 %v212
    %v733 = vunpack.c.h.b16 %v212
    %v734 = vunpack.c.l.b16 %v213
    %v735 = vunpack.c.h.b16 %v213
    %v736 = vunpack.c.l.b16 %v214
    %v737 = vunpack.c.l.b16 %v215
    %v738 = vunpack.c.h.b16 %v215
    %v739 = vunpack.c.l.b16 %v216
    %v740 = vunpack.c.h.b16 %v216
    %v741 = vunpack.c.l.b16 %v217
    %v742 = vunpack.c.h.b16 %v217
    %v743 = vunpack.c.l.b16 %v218
    %v744 = vunpack.c.l.b16 %v219
    %v745 = vunpack.c.h.b16 %v219
    %v746 = vunpack.c.l.b16 %v220
    %v747 = vunpack.c.h.b16 %v220
    %v748 = vunpack.c.l.b16 %v221
    %v749 = vunpack.c.h.b16 %v221
    %v750 = vunpack.c.l.b16 %v222
    %v751 = vunpack.c.l.b16 %v223
    %v752 = vunpack.c.h.b16 %v223
    %v753 = vunpack.c.l.b16 %v224
    %v754 = vunpack.c.h.b16 %v224
    %v755 = vunpack.c.l.b16 %v225
    %v756 = vunpack.c.h.b16 %v225
    %v757 = vunpack.c.l.b16 %v226
    %v758 = vunpack.c.l.b16 %v227
    %v759 = vunpack.c.h.b16 %v227
    %v760 = vunpack.c.l.b16 %v228
    %v761 = vunpack.c.h.b16 %v228
    %v762 = vunpack.c.l.b16 %v229
    %v763 = vunpack.c.h.b16 %v229
    %v764 = vunpack.c.l.b16 %v230
    %v765 = vunpack.c.l.b16 %v231
    %v766 = vunpack.c.h.b16 %v231
    %v767 = vunpack.c.l.b16 %v232
    %v768 = vunpack.c.h.b16 %v232
    %v769 = vunpack.c.l.b16 %v233
    %v770 = vunpack.c.h.b16 %v233
    %v771 = vunpack.c.l.b16 %v234
    %v772 = vunpack.c.l.b16 %v235
    %v773 = vunpack.c.h.b16 %v235
    %v774 = vunpack.c.l.b16 %v236
    %v775 = vunpack.c.h.b16 %v236
    %v776 = vunpack.c.l.b16 %v237
    %v777 = vunpack.c.h.b16 %v237
    %v778 = vunpack.c.l.b16 %v238
    %v779 = vunpack.c.l.b16 %v239
    %v780 = vunpack.c.h.b16 %v239
    %v781 = vunpack.c.l.b16 %v240
    %v782 = vunpack.c.h.b16 %v240
    %v783 = vunpack.c.l.b16 %v241
    %v784 = vunpack.c.h.b16 %v241
    %v785 = vunpack.c.l.b16 %v242
    %v786 = vunpack.c.l.b16 %v243
    %v787 = vunpack.c.h.b16 %v243
    %v788 = vunpack.c.l.b16 %v244
    %v789 = vunpack.c.h.b16 %v244
    %v790 = vunpack.c.l.b16 %v245
    %v791 = vunpack.c.h.b16 %v245
    %v792 = vunpack.c.l.b16 %v246
    %v793 = vunpack.c.l.b16 %v247
    %v794 = vunpack.c.h.b16 %v247
    %v795 = vunpack.c.l.b16 %v248
    %v796 = vunpack.c.h.b16 %v248
    %v797 = vunpack.c.l.b16 %v249
    %v798 = vunpack.c.h.b16 %v249
    %v799 = vunpack.c.l.b16 %v250
    %v800 = vunpack.c.l.b16 %v251
    %v801 = vunpack.c.h.b16 %v251
    %v802 = vunpack.c.l.b16 %v252
    %v803 = vunpack.c.h.b16 %v252
    %v804 = vunpack.c.l.b16 %v253
    %v805 = vunpack.c.h.b16 %v253
    %v806 = vunpack.c.l.b16 %v254
    %v807 = vunpack.c.l.b16 %v255
    %v808 = vunpack.c.h.b16 %v255
    %v809 = vunpack.c.l.b16 %v256
    %v810 = vunpack.c.h.b16 %v256
    %v811 = vunpack.c.l.b16 %v257
    %v812 = vunpack.c.h.b16 %v257
    %v813 = vunpack.c.l.b16 %v258
    %v814 = vunpack.c.l.b16 %v259
    %v815 = vunpack.c.h.b16 %v259
    %v816 = vunpack.c.l.b16 %v260
    %v817 = vunpack.c.h.b16 %v260
    %v818 = vunpack.c.l.b16 %v261
    %v819 = vunpack.c.h.b16 %v261
    %v820 = vunpack.c.l.b16 %v262
    %v821 = vunpack.c.l.b16 %v263
    %v822 = vunpack.c.h.b16 %v263
    %v823 = vunpack.c.l.b16 %v264
    %v824 = vunpack.c.h.b16 %v264
    %v825 = vunpack.c.l.b16 %v265
    %v826 = vunpack.c.h.b16 %v265
    %v827 = vunpack.c.l.b16 %v266
    %v828 = vunpack.c.l.b16 %v267
    %v829 = vunpack.c.h.b16 %v267
    %v830 = vunpack.c.l.b16 %v268
    %v831 = vunpack.c.h.b16 %v268
    %v832 = vunpack.c.l.b16 %v269
    %v833 = vunpack.c.h.b16 %v269
    %v834 = vunpack.c.l.b16 %v270
    %v835 = vunpack.c.l.b16 %v271
    %v836 = vunpack.c.h.b16 %v271
    %v837 = vunpack.c.l.b16 %v272
    %v838 = vunpack.c.h.b16 %v272
    %v839 = vunpack.c.l.b16 %v273
    %v840 = vunpack.c.h.b16 %v273
    %v841 = vunpack.c.l.b16 %v274
    %v842 = vunpack.c.l.b16 %v275
    %v843 = vunpack.c.h.b16 %v275
    %v844 = vunpack.c.l.b16 %v276
    %v845 = vunpack.c.h.b16 %v276
    %v846 = vunpack.c.l.b16 %v277
    %v847 = vunpack.c.h.b16 %v277
    %v848 = vunpack.c.l.b16 %v278
    %v849 = vunpack.c.l.b16 %v279
    %v850 = vunpack.c.h.b16 %v279
    %v851 = vunpack.c.l.b16 %v280
    %v852 = vunpack.c.h.b16 %v280
    %v853 = vunpack.c.l.b16 %v281
    %v854 = vunpack.c.h.b16 %v281
    %v855 = vunpack.c.l.b16 %v282
    %v856 = vunpack.c.l.b16 %v283
    %v857 = vunpack.c.h.b16 %v283
    %v858 = vunpack.c.l.b16 %v284
    %v859 = vunpack.c.h.b16 %v284
    %v860 = vunpack.c.l.b16 %v285
    %v861 = vunpack.c.h.b16 %v285
    %v862 = vunpack.c.l.b16 %v286
    %v863 = vunpack.c.l.b16 %v287
    %v864 = vunpack.c.h.b16 %v287
    %v865 = vunpack.c.l.b16 %v288
    %v866 = vunpack.c.h.b16 %v288
    %v867 = vunpack.c.l.b16 %v289
    %v868 = vunpack.c.h.b16 %v289
    %v869 = vunpack.c.l.b16 %v290
    %v870 = vunpack.c.l.b16 %v291
    %v871 = vunpack.c.h.b16 %v291
    %v872 = vunpack.c.l.b16 %v292
    %v873 = vunpack.c.h.b16 %v292
    %v874 = vunpack.c.l.b16 %v293
    %v875 = vunpack.c.h.b16 %v293
    %v876 = vunpack.c.l.b16 %v294
    %v877 = vunpack.c.l.b16 %v295
    %v878 = vunpack.c.h.b16 %v295
    %v879 = vunpack.c.l.b16 %v296
    %v880 = vunpack.c.h.b16 %v296
    %v881 = vunpack.c.l.b16 %v297
    %v882 = vunpack.c.h.b16 %v297
    %v883 = vunpack.c.l.b16 %v298
    %v884 = vunpack.c.l.b16 %v299
    %v885 = vunpack.c.h.b16 %v299
    %v886 = vunpack.c.l.b16 %v300
    %v887 = vunpack.c.h.b16 %v300
    %v888 = vunpack.c.l.b16 %v301
    %v889 = vunpack.c.h.b16 %v301
    %v890 = vunpack.c.l.b16 %v302
    %v891 = vunpack.c.l.b16 %v303
    %v892 = vunpack.c.h.b16 %v303
    %v893 = vunpack.c.l.b16 %v304
    %v894 = vunpack.c.h.b16 %v304
    %v895 = vunpack.c.l.b16 %v305
    %v896 = vunpack.c.h.b16 %v305
    %v897 = vunpack.c.l.b16 %v306
    %v898 = vunpack.c.l.b16 %v307
    %v899 = vunpack.c.h.b16 %v307
    %v900 = vunpack.c.l.b16 %v308
    %v901 = vunpack.c.h.b16 %v308
    %v902 = vunpack.c.l.b16 %v309
    %v903 = vunpack.c.h.b16 %v309
    %v904 = vunpack.c.l.b16 %v310
    %v905 = vunpack.c.l.b16 %v311
    %v906 = vunpack.c.h.b16 %v311
    %v907 = vunpack.c.l.b16 %v312
    %v908 = vunpack.c.h.b16 %v312
    %v909 = vunpack.c.l.b16 %v313
    %v910 = vunpack.c.h.b16 %v313
    %v911 = vunpack.c.l.b16 %v314
    %v912 = vunpack.c.l.b16 %v315
    %v913 = vunpack.c.h.b16 %v315
    %v914 = vunpack.c.l.b16 %v316
    %v915 = vunpack.c.h.b16 %v316
    %v916 = vunpack.c.l.b16 %v317
    %v917 = vunpack.c.h.b16 %v317
    %v918 = vunpack.c.l.b16 %v318
    %v919 = vunpack.c.l.b16 %v319
    %v920 = vunpack.c.h.b16 %v319
    %v921 = vunpack.c.l.b16 %v320
    %v922 = vunpack.c.h.b16 %v320
    %v923 = vunpack.c.l.b16 %v321
    %v924 = vunpack.c.h.b16 %v321
    %v925 = vunpack.c.l.b16 %v322
    %v926 = vunpack.c.l.b16 %v323
    %v927 = vunpack.c.h.b16 %v323
    %v928 = vunpack.c.l.b16 %v324
    %v929 = vunpack.c.h.b16 %v324
    %v930 = vunpack.c.l.b16 %v325
    %v931 = vunpack.c.h.b16 %v325
    %v932 = vunpack.c.l.b16 %v326
    %v933 = vunpack.c.l.b16 %v327
    %v934 = vunpack.c.h.b16 %v327
    %v935 = vunpack.c.l.b16 %v328
    %v936 = vunpack.c.h.b16 %v328
    %v937 = vunpack.c.l.b16 %v329
    %v938 = vunpack.c.h.b16 %v329
    %v939 = vunpack.c.l.b16 %v330
    %v940 = vpack.c.b16 %v583, %v576
    %v941 = vpack.c.b16 %v584, %v577
    %v942 = vpack.c.b16 %v585, %v578
    %v943 = vpack.c.b16 %v586, %v579
    %v944 = vpack.c.b16 %v587, %v580
    %v945 = vpack.c.b16 %v588, %v581
    %v946 = vpack.c.b16 %v589, %v582
    %v947 = vpack.c.b16 %v597, %v590
    %v948 = vpack.c.b16 %v598, %v591
    %v949 = vpack.c.b16 %v599, %v592
    %v950 = vpack.c.b16 %v600, %v593
    %v951 = vpack.c.b16 %v601, %v594
    %v952 = vpack.c.b16 %v602, %v595
    %v953 = vpack.c.b16 %v603, %v596
    %v954 = vpack.c.b16 %v611, %v604
    %v955 = vpack.c.b16 %v612, %v605
    %v956 = vpack.c.b16 %v613, %v606
    %v957 = vpack.c.b16 %v614, %v607
    %v958 = vpack.c.b16 %v615, %v608
    %v959 = vpack.c.b16 %v616, %v609
    %v960 = vpack.c.b16 %v617, %v610
    %v961 = vpack.c.b16 %v625, %v618
    %v962 = vpack.c.b16 %v626, %v619
    %v963 = vpack.c.b16 %v627, %v620
    %v964 = vpack.c.b16 %v628, %v621
    %v965 = vpack.c.b16 %v629, %v622
    %v966 = vpack.c.b16 %v630, %v623
    %v967 = vpack.c.b16 %v631, %v624
    %v968 = vpack.c.b16 %v639, %v632
    %v969 = vpack.c.b16 %v640, %v633
    %v970 = vpack.c.b16 %v641, %v634
    %v971 = vpack.c.b16 %v642, %v635
    %v972 = vpack.c.b16 %v643, %v636
    %v973 = vpack.c.b16 %v644, %v637
    %v974 = vpack.c.b16 %v645, %v638
    %v975 = vpack.c.b16 %v653, %v646
    %v976 = vpack.c.b16 %v654, %v647
    %v977 = vpack.c.b16 %v655, %v648
    %v978 = vpack.c.b16 %v656, %v649
    %v979 = vpack.c.b16 %v657, %v650
    %v980 = vpack.c.b16 %v658, %v651
    %v981 = vpack.c.b16 %v659, %v652
    %v982 = vpack.c.b16 %v667, %v660
    %v983 = vpack.c.b16 %v668, %v661
    %v984 = vpack.c.b16 %v669, %v662
    %v985 = vpack.c.b16 %v670, %v663
    %v986 = vpack.c.b16 %v671, %v664
    %v987 = vpack.c.b16 %v672, %v665
    %v988 = vpack.c.b16 %v673, %v666
    %v989 = vpack.c.b16 %v681, %v674
    %v990 = vpack.c.b16 %v682, %v675
    %v991 = vpack.c.b16 %v683, %v676
    %v992 = vpack.c.b16 %v684, %v677
    %v993 = vpack.c.b16 %v685, %v678
    %v994 = vpack.c.b16 %v686, %v679
    %v995 = vpack.c.b16 %v687, %v680
    %v996 = vpack.c.b16 %v695, %v688
    %v997 = vpack.c.b16 %v696, %v689
    %v998 = vpack.c.b16 %v697, %v690
    %v999 = vpack.c.b16 %v698, %v691
    %v1000 = vpack.c.b16 %v699, %v692
    %v1001 = vpack.c.b16 %v700, %v693
    %v1002 = vpack.c.b16 %v701, %v694
    %v1003 = vpack.c.b16 %v709, %v702
    %v1004 = vpack.c.b16 %v710, %v703
    %v1005 = vpack.c.b16 %v711, %v704
    %v1006 = vpack.c.b16 %v712, %v705
    %v1007 = vpack.c.b16 %v713, %v706
    %v1008 = vpack.c.b16 %v714, %v707
    %v1009 = vpack.c.b16 %v715, %v708
    %v1010 = vpack.c.b16 %v723, %v716
    %v1011 = vpack.c.b16 %v724, %v717
    %v1012 = vpack.c.b16 %v725, %v718
    %v1013 = vpack.c.b16 %v726, %v719
    %v1014 = vpack.c.b16 %v727, %v720
    %v1015 = vpack.c.b16 %v728, %v721
    %v1016 = vpack.c.b16 %v729, %v722
    %v1017 = vpack.c.b16 %v737, %v730
    %v1018 = vpack.c.b16 %v738, %v731
    %v1019 = vpack.c.b16 %v739, %v732
    %v1020 = vpack.c.b16 %v740, %v733
    %v1021 = vpack.c.b16 %v741, %v734
    %v1022 = vpack.c.b16 %v742, %v735
    %v1023 = vpack.c.b16 %v743, %v736
    %v1024 = vpack.c.b16 %v751, %v744
    %v1025 = vpack.c.b16 %v752, %v745
    %v1026 = vpack.c.b16 %v753, %v746
    %v1027 = vpack.c.b16 %v754, %v747
    %v1028 = vpack.c.b16 %v755, %v748
    %v1029 = vpack.c.b16 %v756, %v749
    %v1030 = vpack.c.b16 %v757, %v750
    %v1031 = vpack.c.b16 %v765, %v758
    %v1032 = vpack.c.b16 %v766, %v759
    %v1033 = vpack.c.b16 %v767, %v760
    %v1034 = vpack.c.b16 %v768, %v761
    %v1035 = vpack.c.b16 %v769, %v762
    %v1036 = vpack.c.b16 %v770, %v763
    %v1037 = vpack.c.b16 %v771, %v764
    %v1038 = vpack.c.b16 %v779, %v772
    %v1039 = vpack.c.b16 %v780, %v773
    %v1040 = vpack.c.b16 %v781, %v774
    %v1041 = vpack.c.b16 %v782, %v775
    %v1042 = vpack.c.b16 %v783, %v776
    %v1043 = vpack.c.b16 %v784, %v777
    %v1044 = vpack.c.b16 %v785, %v778
    %v1045 = vpack.c.b16 %v793, %v786
    %v1046 = vpack.c.b16 %v794, %v787
    %v1047 = vpack.c.b16 %v795, %v788
    %v1048 = vpack.c.b16 %v796, %v789
    %v1049 = vpack.c.b16 %v797, %v790
    %v1050 = vpack.c.b16 %v798, %v791
    %v1051 = vpack.c.b16 %v799, %v792
    %v1052 = vpack.c.b16 %v807, %v800
    %v1053 = vpack.c.b16 %v808, %v801
    %v1054 = vpack.c.b16 %v809, %v802
    %v1055 = vpack.c.b16 %v810, %v803
    %v1056 = vpack.c.b16 %v811, %v804
    %v1057 = vpack.c.b16 %v812, %v805
    %v1058 = vpack.c.b16 %v813, %v806
    %v1059 = vpack.c.b16 %v821, %v814
    %v1060 = vpack.c.b16 %v822, %v815
    %v1061 = vpack.c.b16 %v823, %v816
    %v1062 = vpack.c.b16 %v824, %v817
    %v1063 = vpack.c.b16 %v825, %v818
    %v1064 = vpack.c.b16 %v826, %v819
    %v1065 = vpack.c.b16 %v827, %v820
    %v1066 = vpack.c.b16 %v835, %v828
    %v1067 = vpack.c.b16 %v836, %v829
    %v1068 = vpack.c.b16 %v837, %v830
    %v1069 = vpack.c.b16 %v838, %v831
    %v1070 = vpack.c.b16 %v839, %v832
    %v1071 = vpack.c.b16 %v840, %v833
    %v1072 = vpack.c.b16 %v841, %v834
    %v1073 = vpack.c.b16 %v849, %v842
    %v1074 = vpack.c.b16 %v850, %v843
    %v1075 = vpack.c.b16 %v851, %v844
    %v1076 = vpack.c.b16 %v852, %v845
    %v1077 = vpack.c.b16 %v853, %v846
    %v1078 = vpack.c.b16 %v854, %v847
    %v1079 = vpack.c.b16 %v855, %v848
    %v1080 = vpack.c.b16 %v863, %v856
    %v1081 = vpack.c.b16 %v864, %v857
    %v1082 = vpack.c.b16 %v865, %v858
    %v1083 = vpack.c.b16 %v866, %v859
    %v1084 = vpack.c.b16 %v867, %v860
    %v1085 = vpack.c.b16 %v868, %v861
    %v1086 = vpack.c.b16 %v869, %v862
    %v1087 = vpack.c.b16 %v877, %v870
    %v1088 = vpack.c.b16 %v878, %v871
    %v1089 = vpack.c.b16 %v879, %v872
    %v1090 = vpack.c.b16 %v880, %v873
    %v1091 = vpack.c.b16 %v881, %v874
    %v1092 = vpack.c.b16 %v882, %v875
    %v1093 = vpack.c.b16 %v883, %v876
    %v1094 = vpack.c.b16 %v891, %v884
    %v1095 = vpack.c.b16 %v892, %v885
    %v1096 = vpack.c.b16 %v893, %v886
    %v1097 = vpack.c.b16 %v894, %v887
    %v1098 = vpack.c.b16 %v895, %v888
    %v1099 = vpack.c.b16 %v896, %v889
    %v1100 = vpack.c.b16 %v897, %v890
    %v1101 = vpack.c.b16 %v905, %v898
    %v1102 = vpack.c.b16 %v906, %v899
    %v1103 = vpack.c.b16 %v907, %v900
    %v1104 = vpack.c.b16 %v908, %v901
    %v1105 = vpack.c.b16 %v909, %v902
    %v1106 = vpack.c.b16 %v910, %v903
    %v1107 = vpack.c.b16 %v911, %v904
    %v1108 = vpack.c.b16 %v919, %v912
    %v1109 = vpack.c.b16 %v920, %v913
    %v1110 = vpack.c.b16 %v921, %v914
    %v1111 = vpack.c.b16 %v922, %v915
    %v1112 = vpack.c.b16 %v923, %v916
    %v1113 = vpack.c.b16 %v924, %v917
    %v1114 = vpack.c.b16 %v925, %v918
    %v1115 = vpack.c.b16 %v933, %v926
    %v1116 = vpack.c.b16 %v934, %v927
    %v1117 = vpack.c.b16 %v935, %v928
    %v1118 = vpack.c.b16 %v936, %v929
    %v1119 = vpack.c.b16 %v937, %v930
    %v1120 = vpack.c.b16 %v938, %v931
    %v1121 = vpack.c.b16 %v939, %v932
    %vm1304 = vcmask 261120
    %v1306 = vsel %vm1304, %v122, 0
    %1308 = vmatprep.subr.bf16.mxu0 %v941
    %1309 = vmatpush1.bf16.msra.mxu0 %v940
    %1310 = vmatprep.subr.bf16.mxu0 %v948
    %1311 = vmatpush1.bf16.msra.mxu0 %v947
    %1312 = vmatprep.subr.bf16.mxu0 %v955
    %1313 = vmatpush1.bf16.msra.mxu0 %v954
    %1314 = vmatprep.subr.bf16.mxu0 %v962
    %1315 = vmatpush1.bf16.msra.mxu0 %v961
    %1316 = vmatprep.subr.bf16.mxu0 %v969
    %1317 = vmatpush1.bf16.msra.mxu0 %v968
    %1318 = vmatprep.subr.bf16.mxu0 %v976
    %1319 = vmatpush1.bf16.msra.mxu0 %v975
    %1320 = vmatprep.subr.bf16.mxu0 %v983
    %1321 = vmatpush1.bf16.msra.mxu0 %v982
    %1322 = vmatprep.subr.bf16.mxu0 %v990
    %1323 = vmatpush1.bf16.msra.mxu0 %v989
    %1324 = vmatprep.subr.bf16.mxu0 %v997
    %1325 = vmatpush1.bf16.msra.mxu0 %v996
    %1326 = vmatprep.subr.bf16.mxu0 %v1004
    %1327 = vmatpush1.bf16.msra.mxu0 %v1003
    %1328 = vmatprep.subr.bf16.mxu0 %v1011
    %1329 = vmatpush1.bf16.msra.mxu0 %v1010
    %1330 = vmatprep.subr.bf16.mxu0 %v1018
    %1331 = vmatpush1.bf16.msra.mxu0 %v1017
    %1332 = vmatprep.subr.bf16.mxu0 %v1025
    %1333 = vmatpush1.bf16.msra.mxu0 %v1024
    %1334 = vmatprep.subr.bf16.mxu0 %v1032
    %1335 = vmatpush1.bf16.msra.mxu0 %v1031
    %1336 = vmatprep.subr.bf16.mxu0 %v1039
    %1337 = vmatpush1.bf16.msra.mxu0 %v1038
    %1338 = vmatprep.subr.bf16.mxu0 %v1046
    %1339 = vmatpush1.bf16.msra.mxu0 %v1045
    %1340 = vmatprep.mubr.bf16.mxu0 %v120
    %1341 = vmatmul.mubr.bf16.gmra.mrb[0].mxu0 %v119
    %v1342 = vpop.f32.mrb[0].mxu0
    %v1343 = vadd.f32 %v336, %v1342
    %v1344 = vpop.f32.mrb[0].mxu0
    %v1345 = vadd.f32 %v340, %v1344
    %v1346 = vpop.f32.mrb[0].mxu0
    %v1347 = vpop.f32.mrb[0].mxu0
    %1348 = vdwg.mxu0
    %1349 = vmatprep.subr.bf16.mxu0 %v1053
    %1350 = vmatpush1.bf16.msra.mxu0 %v1052
    %1351 = vmatprep.subr.bf16.mxu0 %v1060
    %1352 = vmatpush1.bf16.msra.mxu0 %v1059
    %1353 = vmatprep.subr.bf16.mxu0 %v1067
    %1354 = vmatpush1.bf16.msra.mxu0 %v1066
    %1355 = vmatprep.subr.bf16.mxu0 %v1074
    %1356 = vmatpush1.bf16.msra.mxu0 %v1073
    %1357 = vmatprep.subr.bf16.mxu0 %v1081
    %1358 = vmatpush1.bf16.msra.mxu0 %v1080
    %1359 = vmatprep.subr.bf16.mxu0 %v1088
    %1360 = vmatpush1.bf16.msra.mxu0 %v1087
    %1361 = vmatprep.subr.bf16.mxu0 %v1095
    %1362 = vmatpush1.bf16.msra.mxu0 %v1094
    %1363 = vmatprep.subr.bf16.mxu0 %v1102
    %1364 = vmatpush1.bf16.msra.mxu0 %v1101
    %1365 = vmatprep.subr.bf16.mxu0 %v1109
    %1366 = vmatpush1.bf16.msra.mxu0 %v1108
    %1367 = vmatprep.subr.bf16.mxu0 %v1116
    %1368 = vmatpush1.bf16.msra.mxu0 %v1115
    %1369 = vmatprep.subr.bf16.mxu0 0
    %1370 = vmatpush1.bf16.msra.mxu0 0
    %1371 = vmatprep.subr.bf16.mxu0 0
    %1372 = vmatpush1.bf16.msra.mxu0 0
    %1373 = vmatprep.subr.bf16.mxu0 0
    %1374 = vmatpush1.bf16.msra.mxu0 0
    %1375 = vmatprep.subr.bf16.mxu0 0
    %1376 = vmatpush1.bf16.msra.mxu0 0
    %1377 = vmatprep.subr.bf16.mxu0 0
    %1378 = vmatpush1.bf16.msra.mxu0 0
    %1379 = vmatprep.subr.bf16.mxu0 0
    %1380 = vmatpush1.bf16.msra.mxu0 0
    %1381 = vmatprep.mubr.bf16.mxu0 %v1306
    %1382 = vmatmul.mubr.bf16.gmra.mrb[0].mxu0 %v121
    %v1383 = vpop.f32.mrb[0].mxu0
    %v1384 = vadd.f32 %v1343, %v1383
    %v1385 = vpop.f32.mrb[0].mxu0
    %v1386 = vadd.f32 %v1345, %v1385
    %v1387 = vpop.f32.mrb[0].mxu0
    %v1388 = vpop.f32.mrb[0].mxu0
    %1389 = vdwg.mxu0
    %1390 = vmatprep.subr.bf16.mxu0 %v943
    %1391 = vmatpush1.bf16.msra.mxu0 %v942
    %1392 = vmatprep.subr.bf16.mxu0 %v950
    %1393 = vmatpush1.bf16.msra.mxu0 %v949
    %1394 = vmatprep.subr.bf16.mxu0 %v957
    %1395 = vmatpush1.bf16.msra.mxu0 %v956
    %1396 = vmatprep.subr.bf16.mxu0 %v964
    %1397 = vmatpush1.bf16.msra.mxu0 %v963
    %1398 = vmatprep.subr.bf16.mxu0 %v971
    %1399 = vmatpush1.bf16.msra.mxu0 %v970
    %1400 = vmatprep.subr.bf16.mxu0 %v978
    %1401 = vmatpush1.bf16.msra.mxu0 %v977
    %1402 = vmatprep.subr.bf16.mxu0 %v985
    %1403 = vmatpush1.bf16.msra.mxu0 %v984
    %1404 = vmatprep.subr.bf16.mxu0 %v992
    %1405 = vmatpush1.bf16.msra.mxu0 %v991
    %1406 = vmatprep.subr.bf16.mxu0 %v999
    %1407 = vmatpush1.bf16.msra.mxu0 %v998
    %1408 = vmatprep.subr.bf16.mxu0 %v1006
    %1409 = vmatpush1.bf16.msra.mxu0 %v1005
    %1410 = vmatprep.subr.bf16.mxu0 %v1013
    %1411 = vmatpush1.bf16.msra.mxu0 %v1012
    %1412 = vmatprep.subr.bf16.mxu0 %v1020
    %1413 = vmatpush1.bf16.msra.mxu0 %v1019
    %1414 = vmatprep.subr.bf16.mxu0 %v1027
    %1415 = vmatpush1.bf16.msra.mxu0 %v1026
    %1416 = vmatprep.subr.bf16.mxu0 %v1034
    %1417 = vmatpush1.bf16.msra.mxu0 %v1033
    %1418 = vmatprep.subr.bf16.mxu0 %v1041
    %1419 = vmatpush1.bf16.msra.mxu0 %v1040
    %1420 = vmatprep.subr.bf16.mxu0 %v1048
    %1421 = vmatpush1.bf16.msra.mxu0 %v1047
    %1422 = vmatprep.mubr.bf16.mxu0 %v120
    %1423 = vmatmul.mubr.bf16.gmra.mrb[0].mxu0 %v119
    %v1424 = vpop.f32.mrb[0].mxu0
    %v1425 = vadd.f32 %v344, %v1424
    %v1426 = vpop.f32.mrb[0].mxu0
    %v1427 = vadd.f32 %v348, %v1426
    %v1428 = vpop.f32.mrb[0].mxu0
    %v1429 = vpop.f32.mrb[0].mxu0
    %1430 = vdwg.mxu0
    %1431 = vmatprep.subr.bf16.mxu0 %v1055
    %1432 = vmatpush1.bf16.msra.mxu0 %v1054
    %1433 = vmatprep.subr.bf16.mxu0 %v1062
    %1434 = vmatpush1.bf16.msra.mxu0 %v1061
    %1435 = vmatprep.subr.bf16.mxu0 %v1069
    %1436 = vmatpush1.bf16.msra.mxu0 %v1068
    %1437 = vmatprep.subr.bf16.mxu0 %v1076
    %1438 = vmatpush1.bf16.msra.mxu0 %v1075
    %1439 = vmatprep.subr.bf16.mxu0 %v1083
    %1440 = vmatpush1.bf16.msra.mxu0 %v1082
    %1441 = vmatprep.subr.bf16.mxu0 %v1090
    %1442 = vmatpush1.bf16.msra.mxu0 %v1089
    %1443 = vmatprep.subr.bf16.mxu0 %v1097
    %1444 = vmatpush1.bf16.msra.mxu0 %v1096
    %1445 = vmatprep.subr.bf16.mxu0 %v1104
    %1446 = vmatpush1.bf16.msra.mxu0 %v1103
    %1447 = vmatprep.subr.bf16.mxu0 %v1111
    %1448 = vmatpush1.bf16.msra.mxu0 %v1110
    %1449 = vmatprep.subr.bf16.mxu0 %v1118
    %1450 = vmatpush1.bf16.msra.mxu0 %v1117
    %1451 = vmatprep.subr.bf16.mxu0 0
    %1452 = vmatpush1.bf16.msra.mxu0 0
    %1453 = vmatprep.subr.bf16.mxu0 0
    %1454 = vmatpush1.bf16.msra.mxu0 0
    %1455 = vmatprep.subr.bf16.mxu0 0
    %1456 = vmatpush1.bf16.msra.mxu0 0
    %1457 = vmatprep.subr.bf16.mxu0 0
    %1458 = vmatpush1.bf16.msra.mxu0 0
    %1459 = vmatprep.subr.bf16.mxu0 0
    %1460 = vmatpush1.bf16.msra.mxu0 0
    %1461 = vmatprep.subr.bf16.mxu0 0
    %1462 = vmatpush1.bf16.msra.mxu0 0
    %1463 = vmatprep.mubr.bf16.mxu0 %v1306
    %1464 = vmatmul.mubr.bf16.gmra.mrb[0].mxu0 %v121
    %v1465 = vpop.f32.mrb[0].mxu0
    %v1466 = vadd.f32 %v1425, %v1465
    %v1467 = vpop.f32.mrb[0].mxu0
    %v1468 = vadd.f32 %v1427, %v1467
    %v1469 = vpop.f32.mrb[0].mxu0
    %v1470 = vpop.f32.mrb[0].mxu0
    %1471 = vdwg.mxu0
    %1472 = vmatprep.subr.bf16.mxu0 %v945
    %1473 = vmatpush1.bf16.msra.mxu0 %v944
    %1474 = vmatprep.subr.bf16.mxu0 %v952
    %1475 = vmatpush1.bf16.msra.mxu0 %v951
    %1476 = vmatprep.subr.bf16.mxu0 %v959
    %1477 = vmatpush1.bf16.msra.mxu0 %v958
    %1478 = vmatprep.subr.bf16.mxu0 %v966
    %1479 = vmatpush1.bf16.msra.mxu0 %v965
    %1480 = vmatprep.subr.bf16.mxu0 %v973
    %1481 = vmatpush1.bf16.msra.mxu0 %v972
    %1482 = vmatprep.subr.bf16.mxu0 %v980
    %1483 = vmatpush1.bf16.msra.mxu0 %v979
    %1484 = vmatprep.subr.bf16.mxu0 %v987
    %1485 = vmatpush1.bf16.msra.mxu0 %v986
    %1486 = vmatprep.subr.bf16.mxu0 %v994
    %1487 = vmatpush1.bf16.msra.mxu0 %v993
    %1488 = vmatprep.subr.bf16.mxu0 %v1001
    %1489 = vmatpush1.bf16.msra.mxu0 %v1000
    %1490 = vmatprep.subr.bf16.mxu0 %v1008
    %1491 = vmatpush1.bf16.msra.mxu0 %v1007
    %1492 = vmatprep.subr.bf16.mxu0 %v1015
    %1493 = vmatpush1.bf16.msra.mxu0 %v1014
    %1494 = vmatprep.subr.bf16.mxu0 %v1022
    %1495 = vmatpush1.bf16.msra.mxu0 %v1021
    %1496 = vmatprep.subr.bf16.mxu0 %v1029
    %1497 = vmatpush1.bf16.msra.mxu0 %v1028
    %1498 = vmatprep.subr.bf16.mxu0 %v1036
    %1499 = vmatpush1.bf16.msra.mxu0 %v1035
    %1500 = vmatprep.subr.bf16.mxu0 %v1043
    %1501 = vmatpush1.bf16.msra.mxu0 %v1042
    %1502 = vmatprep.subr.bf16.mxu0 %v1050
    %1503 = vmatpush1.bf16.msra.mxu0 %v1049
    %1504 = vmatprep.mubr.bf16.mxu0 %v120
    %1505 = vmatmul.mubr.bf16.gmra.mrb[0].mxu0 %v119
    %v1506 = vpop.f32.mrb[0].mxu0
    %v1507 = vadd.f32 %v352, %v1506
    %v1508 = vpop.f32.mrb[0].mxu0
    %v1509 = vadd.f32 %v356, %v1508
    %v1510 = vpop.f32.mrb[0].mxu0
    %v1511 = vpop.f32.mrb[0].mxu0
    %1512 = vdwg.mxu0
    %1513 = vmatprep.subr.bf16.mxu0 %v1057
    %1514 = vmatpush1.bf16.msra.mxu0 %v1056
    %1515 = vmatprep.subr.bf16.mxu0 %v1064
    %1516 = vmatpush1.bf16.msra.mxu0 %v1063
    %1517 = vmatprep.subr.bf16.mxu0 %v1071
    %1518 = vmatpush1.bf16.msra.mxu0 %v1070
    %1519 = vmatprep.subr.bf16.mxu0 %v1078
    %1520 = vmatpush1.bf16.msra.mxu0 %v1077
    %1521 = vmatprep.subr.bf16.mxu0 %v1085
    %1522 = vmatpush1.bf16.msra.mxu0 %v1084
    %1523 = vmatprep.subr.bf16.mxu0 %v1092
    %1524 = vmatpush1.bf16.msra.mxu0 %v1091
    %1525 = vmatprep.subr.bf16.mxu0 %v1099
    %1526 = vmatpush1.bf16.msra.mxu0 %v1098
    %1527 = vmatprep.subr.bf16.mxu0 %v1106
    %1528 = vmatpush1.bf16.msra.mxu0 %v1105
    %1529 = vmatprep.subr.bf16.mxu0 %v1113
    %1530 = vmatpush1.bf16.msra.mxu0 %v1112
    %1531 = vmatprep.subr.bf16.mxu0 %v1120
    %1532 = vmatpush1.bf16.msra.mxu0 %v1119
    %1533 = vmatprep.subr.bf16.mxu0 0
    %1534 = vmatpush1.bf16.msra.mxu0 0
    %1535 = vmatprep.subr.bf16.mxu0 0
    %1536 = vmatpush1.bf16.msra.mxu0 0
    %1537 = vmatprep.subr.bf16.mxu0 0
    %1538 = vmatpush1.bf16.msra.mxu0 0
    %1539 = vmatprep.subr.bf16.mxu0 0
    %1540 = vmatpush1.bf16.msra.mxu0 0
    %1541 = vmatprep.subr.bf16.mxu0 0
    %1542 = vmatpush1.bf16.msra.mxu0 0
    %1543 = vmatprep.subr.bf16.mxu0 0
    %1544 = vmatpush1.bf16.msra.mxu0 0
    %1545 = vmatprep.mubr.bf16.mxu0 %v1306
    %1546 = vmatmul.mubr.bf16.gmra.mrb[0].mxu0 %v121
    %v1547 = vpop.f32.mrb[0].mxu0
    %v1548 = vadd.f32 %v1507, %v1547
    %v1549 = vpop.f32.mrb[0].mxu0
    %v1550 = vadd.f32 %v1509, %v1549
    %v1551 = vpop.f32.mrb[0].mxu0
    %v1552 = vpop.f32.mrb[0].mxu0
    %1553 = vdwg.mxu0
    %1554 = vmatprep.subr.bf16.mxu0 0
    %1555 = vmatpush1.bf16.msra.mxu0 %v946
    %1556 = vmatprep.subr.bf16.mxu0 0
    %1557 = vmatpush1.bf16.msra.mxu0 %v953
    %1558 = vmatprep.subr.bf16.mxu0 0
    %1559 = vmatpush1.bf16.msra.mxu0 %v960
    %1560 = vmatprep.subr.bf16.mxu0 0
    %1561 = vmatpush1.bf16.msra.mxu0 %v967
    %1562 = vmatprep.subr.bf16.mxu0 0
    %1563 = vmatpush1.bf16.msra.mxu0 %v974
    %1564 = vmatprep.subr.bf16.mxu0 0
    %1565 = vmatpush1.bf16.msra.mxu0 %v981
    %1566 = vmatprep.subr.bf16.mxu0 0
    %1567 = vmatpush1.bf16.msra.mxu0 %v988
    %1568 = vmatprep.subr.bf16.mxu0 0
    %1569 = vmatpush1.bf16.msra.mxu0 %v995
    %1570 = vmatprep.subr.bf16.mxu0 0
    %1571 = vmatpush1.bf16.msra.mxu0 %v1002
    %1572 = vmatprep.subr.bf16.mxu0 0
    %1573 = vmatpush1.bf16.msra.mxu0 %v1009
    %1574 = vmatprep.subr.bf16.mxu0 0
    %1575 = vmatpush1.bf16.msra.mxu0 %v1016
    %1576 = vmatprep.subr.bf16.mxu0 0
    %1577 = vmatpush1.bf16.msra.mxu0 %v1023
    %1578 = vmatprep.subr.bf16.mxu0 0
    %1579 = vmatpush1.bf16.msra.mxu0 %v1030
    %1580 = vmatprep.subr.bf16.mxu0 0
    %1581 = vmatpush1.bf16.msra.mxu0 %v1037
    %1582 = vmatprep.subr.bf16.mxu0 0
    %1583 = vmatpush1.bf16.msra.mxu0 %v1044
    %1584 = vmatprep.subr.bf16.mxu0 0
    %1585 = vmatpush1.bf16.msra.mxu0 %v1051
    %1586 = vmatprep.mubr.bf16.mxu0 %v120
    %1587 = vmatmul.mubr.bf16.gmra.mrb[0].mxu0 %v119
    %v1588 = vpop.f32.mrb[0].mxu0
    %v1589 = vadd.f32 %v360, %v1588
    %v1590 = vpop.f32.mrb[0].mxu0
    %v1591 = vpop.f32.mrb[0].mxu0
    %v1592 = vpop.f32.mrb[0].mxu0
    %1593 = vdwg.mxu0
    %1594 = vmatprep.subr.bf16.mxu0 0
    %1595 = vmatpush1.bf16.msra.mxu0 %v1058
    %1596 = vmatprep.subr.bf16.mxu0 0
    %1597 = vmatpush1.bf16.msra.mxu0 %v1065
    %1598 = vmatprep.subr.bf16.mxu0 0
    %1599 = vmatpush1.bf16.msra.mxu0 %v1072
    %1600 = vmatprep.subr.bf16.mxu0 0
    %1601 = vmatpush1.bf16.msra.mxu0 %v1079
    %1602 = vmatprep.subr.bf16.mxu0 0
    %1603 = vmatpush1.bf16.msra.mxu0 %v1086
    %1604 = vmatprep.subr.bf16.mxu0 0
    %1605 = vmatpush1.bf16.msra.mxu0 %v1093
    %1606 = vmatprep.subr.bf16.mxu0 0
    %1607 = vmatpush1.bf16.msra.mxu0 %v1100
    %1608 = vmatprep.subr.bf16.mxu0 0
    %1609 = vmatpush1.bf16.msra.mxu0 %v1107
    %1610 = vmatprep.subr.bf16.mxu0 0
    %1611 = vmatpush1.bf16.msra.mxu0 %v1114
    %1612 = vmatprep.subr.bf16.mxu0 0
    %1613 = vmatpush1.bf16.msra.mxu0 %v1121
    %1614 = vmatprep.subr.bf16.mxu0 0
    %1615 = vmatpush1.bf16.msra.mxu0 0
    %1616 = vmatprep.subr.bf16.mxu0 0
    %1617 = vmatpush1.bf16.msra.mxu0 0
    %1618 = vmatprep.subr.bf16.mxu0 0
    %1619 = vmatpush1.bf16.msra.mxu0 0
    %1620 = vmatprep.subr.bf16.mxu0 0
    %1621 = vmatpush1.bf16.msra.mxu0 0
    %1622 = vmatprep.subr.bf16.mxu0 0
    %1623 = vmatpush1.bf16.msra.mxu0 0
    %1624 = vmatprep.subr.bf16.mxu0 0
    %1625 = vmatpush1.bf16.msra.mxu0 0
    %1626 = vmatprep.mubr.bf16.mxu0 %v1306
    %1627 = vmatmul.mubr.bf16.gmra.mrb[0].mxu0 %v121
    %v1628 = vpop.f32.mrb[0].mxu0
    %v1629 = vadd.f32 %v1589, %v1628
    %v1630 = vpop.f32.mrb[0].mxu0
    %v1631 = vpop.f32.mrb[0].mxu0
    %v1632 = vpop.f32.mrb[0].mxu0
    %1633 = vdwg.mxu0
    %vm1634 = vcmp.gt.f32.partialorder %v1384, 0.0
    %vm1635 = vcmp.gt.f32.partialorder %v1386, 0.0
    %vm1636 = vcmp.gt.f32.partialorder %v1466, 0.0
    %vm1637 = vcmp.gt.f32.partialorder %v1468, 0.0
    %vm1638 = vcmp.gt.f32.partialorder %v1548, 0.0
    %vm1639 = vcmp.gt.f32.partialorder %v1550, 0.0
    %vm1640 = vcmp.gt.f32.partialorder %v1629, 0.0
    %v1641 = vmul.f32 %v1384, 0.01
    %v1642 = vmul.f32 %v1386, 0.01
    %v1643 = vmul.f32 %v1466, 0.01
    %v1644 = vmul.f32 %v1468, 0.01
    %v1645 = vmul.f32 %v1548, 0.01
    %v1646 = vmul.f32 %v1550, 0.01
    %v1647 = vmul.f32 %v1629, 0.01
    %v1648 = vsel %vm1634, %v1384, %v1641
    %v1649 = vsel %vm1635, %v1386, %v1642
    %v1650 = vsel %vm1636, %v1466, %v1643
    %v1651 = vsel %vm1637, %v1468, %v1644
    %v1652 = vsel %vm1638, %v1548, %v1645
    %v1653 = vsel %vm1639, %v1550, %v1646
    %v1654 = vsel %vm1640, %v1629, %v1647
    %v1655 = vpack.c.bf16 %v1648, %v1648
    %v1656 = vpack.c.bf16 %v1649, %v1649
    %v1657 = vpack.c.bf16 %v1650, %v1650
    %v1658 = vpack.c.bf16 %v1651, %v1651
    %v1659 = vpack.c.bf16 %v1652, %v1652
    %v1660 = vpack.c.bf16 %v1653, %v1653
    %v1661 = vpack.c.bf16 %v1654, %v1654
    %v1662 = vld [vmem:[#allocation8] sm:$0xff]
    %v1663 = vld [vmem:[#allocation8 + $0x8] sm:$0xff]
    %v1664 = vld [vmem:[#allocation8 + $0x10] sm:$0xff]
    %v1665 = vld [vmem:[#allocation8 + $0x18] sm:$0xf]
    %v1666 = vld [vmem:[#allocation8 + $0x1c] sm:$0xff]
    %v1667 = vld [vmem:[#allocation8 + $0x24] sm:$0xff]
    %v1668 = vld [vmem:[#allocation8 + $0x2c] sm:$0xff]
    %v1669 = vld [vmem:[#allocation8 + $0x34] sm:$0xf]
    %v1670 = vld [vmem:[#allocation8 + $0x38] sm:$0xff]
    %v1671 = vld [vmem:[#allocation8 + $0x40] sm:$0xff]
    %v1672 = vld [vmem:[#allocation8 + $0x48] sm:$0xff]
    %v1673 = vld [vmem:[#allocation8 + $0x50] sm:$0xf]
    %v1674 = vld [vmem:[#allocation8 + $0x54] sm:$0xff]
    %v1675 = vld [vmem:[#allocation8 + $0x5c] sm:$0xff]
    %v1676 = vld [vmem:[#allocation8 + $0x64] sm:$0xff]
    %v1677 = vld [vmem:[#allocation8 + $0x6c] sm:$0xf]
    %v1678 = vld [vmem:[#allocation8 + $0x70] sm:$0xff]
    %v1679 = vld [vmem:[#allocation8 + $0x78] sm:$0xff]
    %v1680 = vld [vmem:[#allocation8 + $0x80] sm:$0xff]
    %v1681 = vld [vmem:[#allocation8 + $0x88] sm:$0xf]
    %v1682 = vld [vmem:[#allocation8 + $0x8c] sm:$0xff]
    %v1683 = vld [vmem:[#allocation8 + $0x94] sm:$0xff]
    %v1684 = vld [vmem:[#allocation8 + $0x9c] sm:$0xff]
    %v1685 = vld [vmem:[#allocation8 + $0xa4] sm:$0xf]
    %v1686 = vld [vmem:[#allocation8 + $0xa8] sm:$0xff]
    %v1687 = vld [vmem:[#allocation8 + $0xb0] sm:$0xff]
    %v1688 = vld [vmem:[#allocation8 + $0xb8] sm:$0xff]
    %v1689 = vld [vmem:[#allocation8 + $0xc0] sm:$0xf]
    %v1690 = vld [vmem:[#allocation8 + $0xc4] sm:$0xff]
    %v1691 = vld [vmem:[#allocation8 + $0xcc] sm:$0xff]
    %v1692 = vld [vmem:[#allocation8 + $0xd4] sm:$0xff]
    %v1693 = vld [vmem:[#allocation8 + $0xdc] sm:$0xf]
    %v1694 = vld [vmem:[#allocation8 + $0xe0] sm:$0xff]
    %v1695 = vld [vmem:[#allocation8 + $0xe8] sm:$0xff]
    %v1696 = vld [vmem:[#allocation8 + $0xf0] sm:$0xff]
    %v1697 = vld [vmem:[#allocation8 + $0xf8] sm:$0xf]
    %v1698 = vld [vmem:[#allocation8 + $0xfc] sm:$0xff]
    %v1699 = vld [vmem:[#allocation8 + $0x104] sm:$0xff]
    %v1700 = vld [vmem:[#allocation8 + $0x10c] sm:$0xff]
    %v1701 = vld [vmem:[#allocation8 + $0x114] sm:$0xf]
    %v1702 = vld [vmem:[#allocation8 + $0x118] sm:$0xff]
    %v1703 = vld [vmem:[#allocation8 + $0x120] sm:$0xff]
    %v1704 = vld [vmem:[#allocation8 + $0x128] sm:$0xff]
    %v1705 = vld [vmem:[#allocation8 + $0x130] sm:$0xf]
    %v1706 = vld [vmem:[#allocation8 + $0x134] sm:$0xff]
    %v1707 = vld [vmem:[#allocation8 + $0x13c] sm:$0xff]
    %v1708 = vld [vmem:[#allocation8 + $0x144] sm:$0xff]
    %v1709 = vld [vmem:[#allocation8 + $0x14c] sm:$0xf]
    %v1710 = vld [vmem:[#allocation8 + $0x150] sm:$0xff]
    %v1711 = vld [vmem:[#allocation8 + $0x158] sm:$0xff]
    %v1712 = vld [vmem:[#allocation8 + $0x160] sm:$0xff]
    %v1713 = vld [vmem:[#allocation8 + $0x168] sm:$0xf]
    %v1714 = vld [vmem:[#allocation8 + $0x16c] sm:$0xff]
    %v1715 = vld [vmem:[#allocation8 + $0x174] sm:$0xff]
    %v1716 = vld [vmem:[#allocation8 + $0x17c] sm:$0xff]
    %v1717 = vld [vmem:[#allocation8 + $0x184] sm:$0xf]
    %v1718 = vld [vmem:[#allocation8 + $0x188] sm:$0xff]
    %v1719 = vld [vmem:[#allocation8 + $0x190] sm:$0xff]
    %v1720 = vld [vmem:[#allocation8 + $0x198] sm:$0xff]
    %v1721 = vld [vmem:[#allocation8 + $0x1a0] sm:$0xf]
    %v1722 = vld [vmem:[#allocation8 + $0x1a4] sm:$0xff]
    %v1723 = vld [vmem:[#allocation8 + $0x1ac] sm:$0xff]
    %v1724 = vld [vmem:[#allocation8 + $0x1b4] sm:$0xff]
    %v1725 = vld [vmem:[#allocation8 + $0x1bc] sm:$0xf]
    %v1726 = vld [vmem:[#allocation8 + $0x1c0] sm:$0xff]
    %v1727 = vld [vmem:[#allocation8 + $0x1c8] sm:$0xff]
    %v1728 = vld [vmem:[#allocation8 + $0x1d0] sm:$0xff]
    %v1729 = vld [vmem:[#allocation8 + $0x1d8] sm:$0xf]
    %v1730 = vld [vmem:[#allocation8 + $0x1dc] sm:$0xff]
    %v1731 = vld [vmem:[#allocation8 + $0x1e4] sm:$0xff]
    %v1732 = vld [vmem:[#allocation8 + $0x1ec] sm:$0xff]
    %v1733 = vld [vmem:[#allocation8 + $0x1f4] sm:$0xf]
    %v1734 = vld [vmem:[#allocation8 + $0x1f8] sm:$0xff]
    %v1735 = vld [vmem:[#allocation8 + $0x200] sm:$0xff]
    %v1736 = vld [vmem:[#allocation8 + $0x208] sm:$0xff]
    %v1737 = vld [vmem:[#allocation8 + $0x210] sm:$0xf]
    %v1738 = vld [vmem:[#allocation8 + $0x214] sm:$0xff]
    %v1739 = vld [vmem:[#allocation8 + $0x21c] sm:$0xff]
    %v1740 = vld [vmem:[#allocation8 + $0x224] sm:$0xff]
    %v1741 = vld [vmem:[#allocation8 + $0x22c] sm:$0xf]
    %v1742 = vld [vmem:[#allocation8 + $0x230] sm:$0xff]
    %v1743 = vld [vmem:[#allocation8 + $0x238] sm:$0xff]
    %v1744 = vld [vmem:[#allocation8 + $0x240] sm:$0xff]
    %v1745 = vld [vmem:[#allocation8 + $0x248] sm:$0xf]
    %v1746 = vld [vmem:[#allocation8 + $0x24c] sm:$0xff]
    %v1747 = vld [vmem:[#allocation8 + $0x254] sm:$0xff]
    %v1748 = vld [vmem:[#allocation8 + $0x25c] sm:$0xff]
    %v1749 = vld [vmem:[#allocation8 + $0x264] sm:$0xf]
    %v1750 = vld [vmem:[#allocation8 + $0x268] sm:$0xff]
    %v1751 = vld [vmem:[#allocation8 + $0x270] sm:$0xff]
    %v1752 = vld [vmem:[#allocation8 + $0x278] sm:$0xff]
    %v1753 = vld [vmem:[#allocation8 + $0x280] sm:$0xf]
    %v1754 = vld [vmem:[#allocation8 + $0x284] sm:$0xff]
    %v1755 = vld [vmem:[#allocation8 + $0x28c] sm:$0xff]
    %v1756 = vld [vmem:[#allocation8 + $0x294] sm:$0xff]
    %v1757 = vld [vmem:[#allocation8 + $0x29c] sm:$0xf]
    %v1758 = vld [vmem:[#allocation8 + $0x2a0] sm:$0xff]
    %v1759 = vld [vmem:[#allocation8 + $0x2a8] sm:$0xff]
    %v1760 = vld [vmem:[#allocation8 + $0x2b0] sm:$0xff]
    %v1761 = vld [vmem:[#allocation8 + $0x2b8] sm:$0xf]
    %v1762 = vld [vmem:[#allocation8 + $0x2bc] sm:$0xff]
    %v1763 = vld [vmem:[#allocation8 + $0x2c4] sm:$0xff]
    %v1764 = vld [vmem:[#allocation8 + $0x2cc] sm:$0xff]
    %v1765 = vld [vmem:[#allocation8 + $0x2d4] sm:$0xf]
    %v1766 = vld [vmem:[#allocation8 + $0x2d8] sm:$0xff]
    %v1767 = vld [vmem:[#allocation8 + $0x2e0] sm:$0xff]
    %v1768 = vld [vmem:[#allocation8 + $0x2e8] sm:$0xff]
    %v1769 = vld [vmem:[#allocation8 + $0x2f0] sm:$0xf]
    %v1770 = vld [vmem:[#allocation8 + $0x2f4] sm:$0xff]
    %v1771 = vld [vmem:[#allocation8 + $0x2fc] sm:$0xff]
    %v1772 = vld [vmem:[#allocation8 + $0x304] sm:$0xff]
    %v1773 = vld [vmem:[#allocation8 + $0x30c] sm:$0xf]
    %v1774 = vld [vmem:[#allocation8 + $0x310] sm:$0xff]
    %v1775 = vld [vmem:[#allocation8 + $0x318] sm:$0xff]
    %v1776 = vld [vmem:[#allocation8 + $0x320] sm:$0xff]
    %v1777 = vld [vmem:[#allocation8 + $0x328] sm:$0xf]
    %v1778 = vld [vmem:[#allocation8 + $0x32c] sm:$0xff]
    %v1779 = vld [vmem:[#allocation8 + $0x334] sm:$0xff]
    %v1780 = vld [vmem:[#allocation8 + $0x33c] sm:$0xff]
    %v1781 = vld [vmem:[#allocation8 + $0x344] sm:$0xf]
    %v1782 = vld [vmem:[#allocation8 + $0x348] sm:$0xff]
    %v1783 = vld [vmem:[#allocation8 + $0x350] sm:$0xff]
    %v1784 = vld [vmem:[#allocation8 + $0x358] sm:$0xff]
    %v1785 = vld [vmem:[#allocation8 + $0x360] sm:$0xf]
    %v1786 = vld [vmem:[#allocation8 + $0x364] sm:$0xff]
    %v1787 = vld [vmem:[#allocation8 + $0x36c] sm:$0xff]
    %v1788 = vld [vmem:[#allocation8 + $0x374] sm:$0xff]
    %v1789 = vld [vmem:[#allocation8 + $0x37c] sm:$0xf]
    %v1790 = vld [vmem:[#allocation8 + $0x380] sm:$0xff]
    %v1791 = vld [vmem:[#allocation8 + $0x388] sm:$0xff]
    %v1792 = vld [vmem:[#allocation8 + $0x390] sm:$0xff]
    %v1793 = vld [vmem:[#allocation8 + $0x398] sm:$0xf]
    %v1794 = vld [vmem:[#allocation8 + $0x39c] sm:$0xff]
    %v1795 = vld [vmem:[#allocation8 + $0x3a4] sm:$0xff]
    %v1796 = vld [vmem:[#allocation8 + $0x3ac] sm:$0xff]
    %v1797 = vld [vmem:[#allocation8 + $0x3b4] sm:$0xf]
    %v1798 = vld [vmem:[#allocation8 + $0x3b8] sm:$0xff]
    %v1799 = vld [vmem:[#allocation8 + $0x3c0] sm:$0xff]
    %v1800 = vld [vmem:[#allocation8 + $0x3c8] sm:$0xff]
    %v1801 = vld [vmem:[#allocation8 + $0x3d0] sm:$0xf]
    %v1802 = vld [vmem:[#allocation8 + $0x3d4] sm:$0xff]
    %v1803 = vld [vmem:[#allocation8 + $0x3dc] sm:$0xff]
    %v1804 = vld [vmem:[#allocation8 + $0x3e4] sm:$0xff]
    %v1805 = vld [vmem:[#allocation8 + $0x3ec] sm:$0xf]
    %v1806 = vld [vmem:[#allocation8 + $0x3f0] sm:$0xff]
    %v1807 = vld [vmem:[#allocation8 + $0x3f8] sm:$0xff]
    %v1808 = vld [vmem:[#allocation8 + $0x400] sm:$0xff]
    %v1809 = vld [vmem:[#allocation8 + $0x408] sm:$0xf]
    %v1810 = vld [vmem:[#allocation8 + $0x40c] sm:$0xff]
    %v1811 = vld [vmem:[#allocation8 + $0x414] sm:$0xff]
    %v1812 = vld [vmem:[#allocation8 + $0x41c] sm:$0xff]
    %v1813 = vld [vmem:[#allocation8 + $0x424] sm:$0xf]
    %v1814 = vld [vmem:[#allocation8 + $0x428] sm:$0xff]
    %v1815 = vld [vmem:[#allocation8 + $0x430] sm:$0xff]
    %v1816 = vld [vmem:[#allocation8 + $0x438] sm:$0xff]
    %v1817 = vld [vmem:[#allocation8 + $0x440] sm:$0xf]
    %v1818 = vld [vmem:[#allocation8 + $0x444] sm:$0xff]
    %v1819 = vld [vmem:[#allocation8 + $0x44c] sm:$0xff]
    %v1820 = vld [vmem:[#allocation8 + $0x454] sm:$0xff]
    %v1821 = vld [vmem:[#allocation8 + $0x45c] sm:$0xf]
    %v1822 = vld [vmem:[#allocation8 + $0x460] sm:$0xff]
    %v1823 = vld [vmem:[#allocation8 + $0x468] sm:$0xff]
    %v1824 = vld [vmem:[#allocation8 + $0x470] sm:$0xff]
    %v1825 = vld [vmem:[#allocation8 + $0x478] sm:$0xf]
    %v1826 = vld [vmem:[#allocation8 + $0x47c] sm:$0xff]
    %v1827 = vld [vmem:[#allocation8 + $0x484] sm:$0xff]
    %v1828 = vld [vmem:[#allocation8 + $0x48c] sm:$0xff]
    %v1829 = vld [vmem:[#allocation8 + $0x494] sm:$0xf]
    %v1830 = vld [vmem:[#allocation8 + $0x498] sm:$0xff]
    %v1831 = vld [vmem:[#allocation8 + $0x4a0] sm:$0xff]
    %v1832 = vld [vmem:[#allocation8 + $0x4a8] sm:$0xff]
    %v1833 = vld [vmem:[#allocation8 + $0x4b0] sm:$0xf]
    %v1834 = vld [vmem:[#allocation8 + $0x4b4] sm:$0xff]
    %v1835 = vld [vmem:[#allocation8 + $0x4bc] sm:$0xff]
    %v1836 = vld [vmem:[#allocation8 + $0x4c4] sm:$0xff]
    %v1837 = vld [vmem:[#allocation8 + $0x4cc] sm:$0xf]
    %v1838 = vld [vmem:[#allocation8 + $0x4d0] sm:$0xff]
    %v1839 = vld [vmem:[#allocation8 + $0x4d8] sm:$0xff]
    %v1840 = vld [vmem:[#allocation8 + $0x4e0] sm:$0xff]
    %v1841 = vld [vmem:[#allocation8 + $0x4e8] sm:$0xf]
    %v1842 = vld [vmem:[#allocation8 + $0x4ec] sm:$0xff]
    %v1843 = vld [vmem:[#allocation8 + $0x4f4] sm:$0xff]
    %v1844 = vld [vmem:[#allocation8 + $0x4fc] sm:$0xff]
    %v1845 = vld [vmem:[#allocation8 + $0x504] sm:$0xf]
    %v1846 = vld [vmem:[#allocation8 + $0x508] sm:$0xff]
    %v1847 = vld [vmem:[#allocation8 + $0x510] sm:$0xff]
    %v1848 = vld [vmem:[#allocation8 + $0x518] sm:$0xff]
    %v1849 = vld [vmem:[#allocation8 + $0x520] sm:$0xf]
    %v1850 = vld [vmem:[#allocation8 + $0x524] sm:$0xff]
    %v1851 = vld [vmem:[#allocation8 + $0x52c] sm:$0xff]
    %v1852 = vld [vmem:[#allocation8 + $0x534] sm:$0xff]
    %v1853 = vld [vmem:[#allocation8 + $0x53c] sm:$0xf]
    %v1854 = vld [vmem:[#allocation8 + $0x540] sm:$0xff]
    %v1855 = vld [vmem:[#allocation8 + $0x548] sm:$0xff]
    %v1856 = vld [vmem:[#allocation8 + $0x550] sm:$0xff]
    %v1857 = vld [vmem:[#allocation8 + $0x558] sm:$0xf]
    %v1858 = vld [vmem:[#allocation8 + $0x55c] sm:$0xff]
    %v1859 = vld [vmem:[#allocation8 + $0x564] sm:$0xff]
    %v1860 = vld [vmem:[#allocation8 + $0x56c] sm:$0xff]
    %v1861 = vld [vmem:[#allocation8 + $0x574] sm:$0xf]
    %v1862 = vld [vmem:[#allocation8 + $0x578] sm:$0xff]
    %v1863 = vld [vmem:[#allocation8 + $0x580] sm:$0xff]
    %v1864 = vld [vmem:[#allocation8 + $0x588] sm:$0xff]
    %v1865 = vld [vmem:[#allocation8 + $0x590] sm:$0xf]
    %v1866 = vld [vmem:[#allocation8 + $0x594] sm:$0xff]
    %v1867 = vld [vmem:[#allocation8 + $0x59c] sm:$0xff]
    %v1868 = vld [vmem:[#allocation8 + $0x5a4] sm:$0xff]
    %v1869 = vld [vmem:[#allocation8 + $0x5ac] sm:$0xf]
    %v1870 = vld [vmem:[#allocation8 + $0x5b0] sm:$0xff]
    %v1871 = vld [vmem:[#allocation8 + $0x5b8] sm:$0xff]
    %v1872 = vld [vmem:[#allocation8 + $0x5c0] sm:$0xff]
    %v1873 = vld [vmem:[#allocation8 + $0x5c8] sm:$0xf]
    %v1874 = vld [vmem:[#allocation8 + $0x5cc] sm:$0xff]
    %v1875 = vld [vmem:[#allocation8 + $0x5d4] sm:$0xff]
    %v1876 = vld [vmem:[#allocation8 + $0x5dc] sm:$0xff]
    %v1877 = vld [vmem:[#allocation8 + $0x5e4] sm:$0xf]
    %v1878 = vld [vmem:[#allocation8 + $0x5e8] sm:$0xff]
    %v1879 = vld [vmem:[#allocation8 + $0x5f0] sm:$0xff]
    %v1880 = vld [vmem:[#allocation8 + $0x5f8] sm:$0xff]
    %v1881 = vld [vmem:[#allocation8 + $0x600] sm:$0xf]
    %v1882 = vld [vmem:[#allocation8 + $0x604] sm:$0xff]
    %v1883 = vld [vmem:[#allocation8 + $0x60c] sm:$0xff]
    %v1884 = vld [vmem:[#allocation8 + $0x614] sm:$0xff]
    %v1885 = vld [vmem:[#allocation8 + $0x61c] sm:$0xf]
    %v1886 = vld [vmem:[#allocation8 + $0x620] sm:$0xff]
    %v1887 = vld [vmem:[#allocation8 + $0x628] sm:$0xff]
    %v1888 = vld [vmem:[#allocation8 + $0x630] sm:$0xff]
    %v1889 = vld [vmem:[#allocation8 + $0x638] sm:$0xf]
    %v1890 = vld [vmem:[#allocation8 + $0x63c] sm:$0xff]
    %v1891 = vld [vmem:[#allocation8 + $0x644] sm:$0xff]
    %v1892 = vld [vmem:[#allocation8 + $0x64c] sm:$0xff]
    %v1893 = vld [vmem:[#allocation8 + $0x654] sm:$0xf]
    %v1894 = vld [vmem:[#allocation8 + $0x658] sm:$0xff]
    %v1895 = vld [vmem:[#allocation8 + $0x660] sm:$0xff]
    %v1896 = vld [vmem:[#allocation8 + $0x668] sm:$0xff]
    %v1897 = vld [vmem:[#allocation8 + $0x670] sm:$0xf]
    %v1898 = vld [vmem:[#allocation8 + $0x674] sm:$0xff]
    %v1899 = vld [vmem:[#allocation8 + $0x67c] sm:$0xff]
    %v1900 = vld [vmem:[#allocation8 + $0x684] sm:$0xff]
    %v1901 = vld [vmem:[#allocation8 + $0x68c] sm:$0xf]
    %v1902 = vld [vmem:[#allocation8 + $0x690] sm:$0xff]
    %v1903 = vld [vmem:[#allocation8 + $0x698] sm:$0xff]
    %v1904 = vld [vmem:[#allocation8 + $0x6a0] sm:$0xff]
    %v1905 = vld [vmem:[#allocation8 + $0x6a8] sm:$0xf]
    %v1906 = vld [vmem:[#allocation8 + $0x6ac] sm:$0xff]
    %v1907 = vld [vmem:[#allocation8 + $0x6b4] sm:$0xff]
    %v1908 = vld [vmem:[#allocation8 + $0x6bc] sm:$0xff]
    %v1909 = vld [vmem:[#allocation8 + $0x6c4] sm:$0xf]
    %v1910 = vld [vmem:[#allocation8 + $0x6c8] sm:$0xff]
    %v1911 = vld [vmem:[#allocation8 + $0x6d0] sm:$0xff]
    %v1912 = vld [vmem:[#allocation8 + $0x6d8] sm:$0xff]
    %v1913 = vld [vmem:[#allocation8 + $0x6e0] sm:$0xf]
    %v1914 = vld [vmem:[#allocation8 + $0x6e4] sm:$0xff]
    %v1915 = vld [vmem:[#allocation8 + $0x6ec] sm:$0xff]
    %v1916 = vld [vmem:[#allocation8 + $0x6f4] sm:$0xff]
    %v1917 = vld [vmem:[#allocation8 + $0x6fc] sm:$0xf]
    %v1918 = vld [vmem:[#allocation8 + $0x700] sm:$0xff]
    %v1919 = vld [vmem:[#allocation8 + $0x708] sm:$0xff]
    %v1920 = vld [vmem:[#allocation8 + $0x710] sm:$0xff]
    %v1921 = vld [vmem:[#allocation8 + $0x718] sm:$0xf]
    %v1922 = vld [vmem:[#allocation8 + $0x71c] sm:$0xff]
    %v1923 = vld [vmem:[#allocation8 + $0x724] sm:$0xff]
    %v1924 = vld [vmem:[#allocation8 + $0x72c] sm:$0xff]
    %v1925 = vld [vmem:[#allocation8 + $0x734] sm:$0xf]
    %v1926 = vld [vmem:[#allocation8 + $0x738] sm:$0xff]
    %v1927 = vld [vmem:[#allocation8 + $0x740] sm:$0xff]
    %v1928 = vld [vmem:[#allocation8 + $0x748] sm:$0xff]
    %v1929 = vld [vmem:[#allocation8 + $0x750] sm:$0xf]
    %v1930 = vld [vmem:[#allocation8 + $0x754] sm:$0xff]
    %v1931 = vld [vmem:[#allocation8 + $0x75c] sm:$0xff]
    %v1932 = vld [vmem:[#allocation8 + $0x764] sm:$0xff]
    %v1933 = vld [vmem:[#allocation8 + $0x76c] sm:$0xf]
    %v1934 = vld [vmem:[#allocation8 + $0x770] sm:$0xff]
    %v1935 = vld [vmem:[#allocation8 + $0x778] sm:$0xff]
    %v1936 = vld [vmem:[#allocation8 + $0x780] sm:$0xff]
    %v1937 = vld [vmem:[#allocation8 + $0x788] sm:$0xf]
    %v1938 = vld [vmem:[#allocation8 + $0x78c] sm:$0xff]
    %v1939 = vld [vmem:[#allocation8 + $0x794] sm:$0xff]
    %v1940 = vld [vmem:[#allocation8 + $0x79c] sm:$0xff]
    %v1941 = vld [vmem:[#allocation8 + $0x7a4] sm:$0xf]
    %v1942 = vld [vmem:[#allocation8 + $0x7a8] sm:$0xff]
    %v1943 = vld [vmem:[#allocation8 + $0x7b0] sm:$0xff]
    %v1944 = vld [vmem:[#allocation8 + $0x7b8] sm:$0xff]
    %v1945 = vld [vmem:[#allocation8 + $0x7c0] sm:$0xf]
    %v1946 = vld [vmem:[#allocation8 + $0x7c4] sm:$0xff]
    %v1947 = vld [vmem:[#allocation8 + $0x7cc] sm:$0xff]
    %v1948 = vld [vmem:[#allocation8 + $0x7d4] sm:$0xff]
    %v1949 = vld [vmem:[#allocation8 + $0x7dc] sm:$0xf]
    %v1950 = vld [vmem:[#allocation8 + $0x7e0] sm:$0xff]
    %v1951 = vld [vmem:[#allocation8 + $0x7e8] sm:$0xff]
    %v1952 = vld [vmem:[#allocation8 + $0x7f0] sm:$0xff]
    %v1953 = vld [vmem:[#allocation8 + $0x7f8] sm:$0xf]
    %v1954 = vld [vmem:[#allocation8 + $0x7fc] sm:$0xff]
    %v1955 = vld [vmem:[#allocation8 + $0x804] sm:$0xff]
    %v1956 = vld [vmem:[#allocation8 + $0x80c] sm:$0xff]
    %v1957 = vld [vmem:[#allocation8 + $0x814] sm:$0xf]
    %v1958 = vld [vmem:[#allocation8 + $0x818] sm:$0xff]
    %v1959 = vld [vmem:[#allocation8 + $0x820] sm:$0xff]
    %v1960 = vld [vmem:[#allocation8 + $0x828] sm:$0xff]
    %v1961 = vld [vmem:[#allocation8 + $0x830] sm:$0xf]
    %v1962 = vld [vmem:[#allocation8 + $0x834] sm:$0xff]
    %v1963 = vld [vmem:[#allocation8 + $0x83c] sm:$0xff]
    %v1964 = vld [vmem:[#allocation8 + $0x844] sm:$0xff]
    %v1965 = vld [vmem:[#allocation8 + $0x84c] sm:$0xf]
    %v1966 = vld [vmem:[#allocation8 + $0x850] sm:$0xff]
    %v1967 = vld [vmem:[#allocation8 + $0x858] sm:$0xff]
    %v1968 = vld [vmem:[#allocation8 + $0x860] sm:$0xff]
    %v1969 = vld [vmem:[#allocation8 + $0x868] sm:$0xf]
    %v1970 = vld [vmem:[#allocation8 + $0x86c] sm:$0xff]
    %v1971 = vld [vmem:[#allocation8 + $0x874] sm:$0xff]
    %v1972 = vld [vmem:[#allocation8 + $0x87c] sm:$0xff]
    %v1973 = vld [vmem:[#allocation8 + $0x884] sm:$0xf]
    %v1974 = vld [vmem:[#allocation8 + $0x888] sm:$0xff]
    %v1975 = vld [vmem:[#allocation8 + $0x890] sm:$0xff]
    %v1976 = vld [vmem:[#allocation8 + $0x898] sm:$0xff]
    %v1977 = vld [vmem:[#allocation8 + $0x8a0] sm:$0xf]
    %v1978 = vld [vmem:[#allocation8 + $0x8a4] sm:$0xff]
    %v1979 = vld [vmem:[#allocation8 + $0x8ac] sm:$0xff]
    %v1980 = vld [vmem:[#allocation8 + $0x8b4] sm:$0xff]
    %v1981 = vld [vmem:[#allocation8 + $0x8bc] sm:$0xf]
    %v1982 = vld [vmem:[#allocation8 + $0x8c0] sm:$0xff]
    %v1983 = vld [vmem:[#allocation8 + $0x8c8] sm:$0xff]
    %v1984 = vld [vmem:[#allocation8 + $0x8d0] sm:$0xff]
    %v1985 = vld [vmem:[#allocation8 + $0x8d8] sm:$0xf]
    %v1986 = vld [vmem:[#allocation8 + $0x8dc] sm:$0xff]
    %v1987 = vld [vmem:[#allocation8 + $0x8e4] sm:$0xff]
    %v1988 = vld [vmem:[#allocation8 + $0x8ec] sm:$0xff]
    %v1989 = vld [vmem:[#allocation8 + $0x8f4] sm:$0xf]
    %v1990 = vld [vmem:[#allocation8 + $0x8f8] sm:$0xff]
    %v1991 = vld [vmem:[#allocation8 + $0x900] sm:$0xff]
    %v1992 = vld [vmem:[#allocation8 + $0x908] sm:$0xff]
    %v1993 = vld [vmem:[#allocation8 + $0x910] sm:$0xf]
    %v1994 = vld [vmem:[#allocation8 + $0x914] sm:$0xff]
    %v1995 = vld [vmem:[#allocation8 + $0x91c] sm:$0xff]
    %v1996 = vld [vmem:[#allocation8 + $0x924] sm:$0xff]
    %v1997 = vld [vmem:[#allocation8 + $0x92c] sm:$0xf]
    %v1998 = vld [vmem:[#allocation8 + $0x930] sm:$0xff]
    %v1999 = vld [vmem:[#allocation8 + $0x938] sm:$0xff]
    %v2000 = vld [vmem:[#allocation8 + $0x940] sm:$0xff]
    %v2001 = vld [vmem:[#allocation8 + $0x948] sm:$0xf]
    %v2002 = vld [vmem:[#allocation8 + $0x94c] sm:$0xff]
    %v2003 = vld [vmem:[#allocation8 + $0x954] sm:$0xff]
    %v2004 = vld [vmem:[#allocation8 + $0x95c] sm:$0xff]
    %v2005 = vld [vmem:[#allocation8 + $0x964] sm:$0xf]
    %v2006 = vld [vmem:[#allocation8 + $0x968] sm:$0xff]
    %v2007 = vld [vmem:[#allocation8 + $0x970] sm:$0xff]
    %v2008 = vld [vmem:[#allocation8 + $0x978] sm:$0xff]
    %v2009 = vld [vmem:[#allocation8 + $0x980] sm:$0xf]
    %v2010 = vld [vmem:[#allocation8 + $0x984] sm:$0xff]
    %v2011 = vld [vmem:[#allocation8 + $0x98c] sm:$0xff]
    %v2012 = vld [vmem:[#allocation8 + $0x994] sm:$0xff]
    %v2013 = vld [vmem:[#allocation8 + $0x99c] sm:$0xf]
    %v2014 = vld [vmem:[#allocation8 + $0x9a0] sm:$0xff]
    %v2015 = vld [vmem:[#allocation8 + $0x9a8] sm:$0xff]
    %v2016 = vld [vmem:[#allocation8 + $0x9b0] sm:$0xff]
    %v2017 = vld [vmem:[#allocation8 + $0x9b8] sm:$0xf]
    %v2018 = vld [vmem:[#allocation8 + $0x9bc] sm:$0xff]
    %v2019 = vld [vmem:[#allocation8 + $0x9c4] sm:$0xff]
    %v2020 = vld [vmem:[#allocation8 + $0x9cc] sm:$0xff]
    %v2021 = vld [vmem:[#allocation8 + $0x9d4] sm:$0xf]
    %v2022 = vld [vmem:[#allocation8 + $0x9d8] sm:$0xff]
    %v2023 = vld [vmem:[#allocation8 + $0x9e0] sm:$0xff]
    %v2024 = vld [vmem:[#allocation8 + $0x9e8] sm:$0xff]
    %v2025 = vld [vmem:[#allocation8 + $0x9f0] sm:$0xf]
    %v2026 = vld [vmem:[#allocation8 + $0x9f4] sm:$0xff]
    %v2027 = vld [vmem:[#allocation8 + $0x9fc] sm:$0xff]
    %v2028 = vld [vmem:[#allocation8 + $0xa04] sm:$0xff]
    %v2029 = vld [vmem:[#allocation8 + $0xa0c] sm:$0xf]
    %v2030 = vld [vmem:[#allocation8 + $0xa10] sm:$0xff]
    %v2031 = vld [vmem:[#allocation8 + $0xa18] sm:$0xff]
    %v2032 = vld [vmem:[#allocation8 + $0xa20] sm:$0xff]
    %v2033 = vld [vmem:[#allocation8 + $0xa28] sm:$0xf]
    %v2034 = vld [vmem:[#allocation8 + $0xa2c] sm:$0xff]
    %v2035 = vld [vmem:[#allocation8 + $0xa34] sm:$0xff]
    %v2036 = vld [vmem:[#allocation8 + $0xa3c] sm:$0xff]
    %v2037 = vld [vmem:[#allocation8 + $0xa44] sm:$0xf]
    %v2038 = vld [vmem:[#allocation8 + $0xa48] sm:$0xff]
    %v2039 = vld [vmem:[#allocation8 + $0xa50] sm:$0xff]
    %v2040 = vld [vmem:[#allocation8 + $0xa58] sm:$0xff]
    %v2041 = vld [vmem:[#allocation8 + $0xa60] sm:$0xf]
    %v2042 = vld [vmem:[#allocation8 + $0xa64] sm:$0xff]
    %v2043 = vld [vmem:[#allocation8 + $0xa6c] sm:$0xff]
    %v2044 = vld [vmem:[#allocation8 + $0xa74] sm:$0xff]
    %v2045 = vld [vmem:[#allocation8 + $0xa7c] sm:$0xf]
    %v2046 = vld [vmem:[#allocation8 + $0xa80] sm:$0xff]
    %v2047 = vld [vmem:[#allocation8 + $0xa88] sm:$0xff]
    %v2048 = vld [vmem:[#allocation8 + $0xa90] sm:$0xff]
    %v2049 = vld [vmem:[#allocation8 + $0xa98] sm:$0xf]
    %v2050 = vld [vmem:[#allocation8 + $0xa9c] sm:$0xff]
    %v2051 = vld [vmem:[#allocation8 + $0xaa4] sm:$0xff]
    %v2052 = vld [vmem:[#allocation8 + $0xaac] sm:$0xff]
    %v2053 = vld [vmem:[#allocation8 + $0xab4] sm:$0xf]
    %v2054 = vld [vmem:[#allocation8 + $0xab8] sm:$0xff]
    %v2055 = vld [vmem:[#allocation8 + $0xac0] sm:$0xff]
    %v2056 = vld [vmem:[#allocation8 + $0xac8] sm:$0xff]
    %v2057 = vld [vmem:[#allocation8 + $0xad0] sm:$0xf]
    %v2058 = vld [vmem:[#allocation8 + $0xad4] sm:$0xff]
    %v2059 = vld [vmem:[#allocation8 + $0xadc] sm:$0xff]
    %v2060 = vld [vmem:[#allocation8 + $0xae4] sm:$0xff]
    %v2061 = vld [vmem:[#allocation8 + $0xaec] sm:$0xf]
    %v2062 = vld [vmem:[#allocation8 + $0xaf0] sm:$0xff]
    %v2063 = vld [vmem:[#allocation8 + $0xaf8] sm:$0xff]
    %v2064 = vld [vmem:[#allocation8 + $0xb00] sm:$0xff]
    %v2065 = vld [vmem:[#allocation8 + $0xb08] sm:$0xf]
    %v2066 = vld [vmem:[#allocation8 + $0xb0c] sm:$0xff]
    %v2067 = vld [vmem:[#allocation8 + $0xb14] sm:$0xff]
    %v2068 = vld [vmem:[#allocation8 + $0xb1c] sm:$0xff]
    %v2069 = vld [vmem:[#allocation8 + $0xb24] sm:$0xf]
    %v2070 = vld [vmem:[#allocation8 + $0xb28] sm:$0xff]
    %v2071 = vld [vmem:[#allocation8 + $0xb30] sm:$0xff]
    %v2072 = vld [vmem:[#allocation8 + $0xb38] sm:$0xff]
    %v2073 = vld [vmem:[#allocation8 + $0xb40] sm:$0xf]
    %v2074 = vld [vmem:[#allocation8 + $0xb44] sm:$0xff]
    %v2075 = vld [vmem:[#allocation8 + $0xb4c] sm:$0xff]
    %v2076 = vld [vmem:[#allocation8 + $0xb54] sm:$0xff]
    %v2077 = vld [vmem:[#allocation8 + $0xb5c] sm:$0xf]
    %v2078 = vld [vmem:[#allocation10] sm:$0x7f]
    %v2080 = vlaneseq
    %v2081 = vshrl.u32 %v2080, 7
    %v2082 = vsub.s32 0, %v2081
    %v2083 = vrot.slane %v2078, %v2082
    %v2084 = vlaneseq
    %v2085 = vshrl.u32 %v2084, 7
    %v2086 = vsub.s32 1, %v2085
    %v2087 = vrot.slane %v2078, %v2086
    %v2088 = vlaneseq
    %v2089 = vshrl.u32 %v2088, 7
    %v2090 = vsub.s32 2, %v2089
    %v2091 = vrot.slane %v2078, %v2090
    %v2092 = vlaneseq
    %v2093 = vshrl.u32 %v2092, 7
    %v2094 = vsub.s32 3, %v2093
    %v2095 = vrot.slane %v2078, %v2094
    %v2096 = vlaneseq
    %v2097 = vshrl.u32 %v2096, 7
    %v2098 = vsub.s32 4, %v2097
    %v2099 = vrot.slane %v2078, %v2098
    %v2100 = vlaneseq
    %v2101 = vshrl.u32 %v2100, 7
    %v2102 = vsub.s32 5, %v2101
    %v2103 = vrot.slane %v2078, %v2102
    %v2104 = vlaneseq
    %v2105 = vshrl.u32 %v2104, 7
    %v2106 = vsub.s32 6, %v2105
    %v2107 = vrot.slane %v2078, %v2106
    %v2531 = vunpack.c.l.b16 %v1662
    %v2532 = vunpack.c.h.b16 %v1662
    %v2533 = vunpack.c.l.b16 %v1663
    %v2534 = vunpack.c.h.b16 %v1663
    %v2535 = vunpack.c.l.b16 %v1664
    %v2536 = vunpack.c.h.b16 %v1664
    %v2537 = vunpack.c.l.b16 %v1665
    %v2538 = vunpack.c.l.b16 %v1666
    %v2539 = vunpack.c.h.b16 %v1666
    %v2540 = vunpack.c.l.b16 %v1667
    %v2541 = vunpack.c.h.b16 %v1667
    %v2542 = vunpack.c.l.b16 %v1668
    %v2543 = vunpack.c.h.b16 %v1668
    %v2544 = vunpack.c.l.b16 %v1669
    %v2545 = vunpack.c.l.b16 %v1670
    %v2546 = vunpack.c.h.b16 %v1670
    %v2547 = vunpack.c.l.b16 %v1671
    %v2548 = vunpack.c.h.b16 %v1671
    %v2549 = vunpack.c.l.b16 %v1672
    %v2550 = vunpack.c.h.b16 %v1672
    %v2551 = vunpack.c.l.b16 %v1673
    %v2552 = vunpack.c.l.b16 %v1674
    %v2553 = vunpack.c.h.b16 %v1674
    %v2554 = vunpack.c.l.b16 %v1675
    %v2555 = vunpack.c.h.b16 %v1675
    %v2556 = vunpack.c.l.b16 %v1676
    %v2557 = vunpack.c.h.b16 %v1676
    %v2558 = vunpack.c.l.b16 %v1677
    %v2559 = vunpack.c.l.b16 %v1678
    %v2560 = vunpack.c.h.b16 %v1678
    %v2561 = vunpack.c.l.b16 %v1679
    %v2562 = vunpack.c.h.b16 %v1679
    %v2563 = vunpack.c.l.b16 %v1680
    %v2564 = vunpack.c.h.b16 %v1680
    %v2565 = vunpack.c.l.b16 %v1681
    %v2566 = vunpack.c.l.b16 %v1682
    %v2567 = vunpack.c.h.b16 %v1682
    %v2568 = vunpack.c.l.b16 %v1683
    %v2569 = vunpack.c.h.b16 %v1683
    %v2570 = vunpack.c.l.b16 %v1684
    %v2571 = vunpack.c.h.b16 %v1684
    %v2572 = vunpack.c.l.b16 %v1685
    %v2573 = vunpack.c.l.b16 %v1686
    %v2574 = vunpack.c.h.b16 %v1686
    %v2575 = vunpack.c.l.b16 %v1687
    %v2576 = vunpack.c.h.b16 %v1687
    %v2577 = vunpack.c.l.b16 %v1688
    %v2578 = vunpack.c.h.b16 %v1688
    %v2579 = vunpack.c.l.b16 %v1689
    %v2580 = vunpack.c.l.b16 %v1690
    %v2581 = vunpack.c.h.b16 %v1690
    %v2582 = vunpack.c.l.b16 %v1691
    %v2583 = vunpack.c.h.b16 %v1691
    %v2584 = vunpack.c.l.b16 %v1692
    %v2585 = vunpack.c.h.b16 %v1692
    %v2586 = vunpack.c.l.b16 %v1693
    %v2587 = vunpack.c.l.b16 %v1694
    %v2588 = vunpack.c.h.b16 %v1694
    %v2589 = vunpack.c.l.b16 %v1695
    %v2590 = vunpack.c.h.b16 %v1695
    %v2591 = vunpack.c.l.b16 %v1696
    %v2592 = vunpack.c.h.b16 %v1696
    %v2593 = vunpack.c.l.b16 %v1697
    %v2594 = vunpack.c.l.b16 %v1698
    %v2595 = vunpack.c.h.b16 %v1698
    %v2596 = vunpack.c.l.b16 %v1699
    %v2597 = vunpack.c.h.b16 %v1699
    %v2598 = vunpack.c.l.b16 %v1700
    %v2599 = vunpack.c.h.b16 %v1700
    %v2600 = vunpack.c.l.b16 %v1701
    %v2601 = vunpack.c.l.b16 %v1702
    %v2602 = vunpack.c.h.b16 %v1702
    %v2603 = vunpack.c.l.b16 %v1703
    %v2604 = vunpack.c.h.b16 %v1703
    %v2605 = vunpack.c.l.b16 %v1704
    %v2606 = vunpack.c.h.b16 %v1704
    %v2607 = vunpack.c.l.b16 %v1705
    %v2608 = vunpack.c.l.b16 %v1706
    %v2609 = vunpack.c.h.b16 %v1706
    %v2610 = vunpack.c.l.b16 %v1707
    %v2611 = vunpack.c.h.b16 %v1707
    %v2612 = vunpack.c.l.b16 %v1708
    %v2613 = vunpack.c.h.b16 %v1708
    %v2614 = vunpack.c.l.b16 %v1709
    %v2615 = vunpack.c.l.b16 %v1710
    %v2616 = vunpack.c.h.b16 %v1710
    %v2617 = vunpack.c.l.b16 %v1711
    %v2618 = vunpack.c.h.b16 %v1711
    %v2619 = vunpack.c.l.b16 %v1712
    %v2620 = vunpack.c.h.b16 %v1712
    %v2621 = vunpack.c.l.b16 %v1713
    %v2622 = vunpack.c.l.b16 %v1714
    %v2623 = vunpack.c.h.b16 %v1714
    %v2624 = vunpack.c.l.b16 %v1715
    %v2625 = vunpack.c.h.b16 %v1715
    %v2626 = vunpack.c.l.b16 %v1716
    %v2627 = vunpack.c.h.b16 %v1716
    %v2628 = vunpack.c.l.b16 %v1717
    %v2629 = vunpack.c.l.b16 %v1718
    %v2630 = vunpack.c.h.b16 %v1718
    %v2631 = vunpack.c.l.b16 %v1719
    %v2632 = vunpack.c.h.b16 %v1719
    %v2633 = vunpack.c.l.b16 %v1720
    %v2634 = vunpack.c.h.b16 %v1720
    %v2635 = vunpack.c.l.b16 %v1721
    %v2636 = vunpack.c.l.b16 %v1722
    %v2637 = vunpack.c.h.b16 %v1722
    %v2638 = vunpack.c.l.b16 %v1723
    %v2639 = vunpack.c.h.b16 %v1723
    %v2640 = vunpack.c.l.b16 %v1724
    %v2641 = vunpack.c.h.b16 %v1724
    %v2642 = vunpack.c.l.b16 %v1725
    %v2643 = vunpack.c.l.b16 %v1726
    %v2644 = vunpack.c.h.b16 %v1726
    %v2645 = vunpack.c.l.b16 %v1727
    %v2646 = vunpack.c.h.b16 %v1727
    %v2647 = vunpack.c.l.b16 %v1728
    %v2648 = vunpack.c.h.b16 %v1728
    %v2649 = vunpack.c.l.b16 %v1729
    %v2650 = vunpack.c.l.b16 %v1730
    %v2651 = vunpack.c.h.b16 %v1730
    %v2652 = vunpack.c.l.b16 %v1731
    %v2653 = vunpack.c.h.b16 %v1731
    %v2654 = vunpack.c.l.b16 %v1732
    %v2655 = vunpack.c.h.b16 %v1732
    %v2656 = vunpack.c.l.b16 %v1733
    %v2657 = vunpack.c.l.b16 %v1734
    %v2658 = vunpack.c.h.b16 %v1734
    %v2659 = vunpack.c.l.b16 %v1735
    %v2660 = vunpack.c.h.b16 %v1735
    %v2661 = vunpack.c.l.b16 %v1736
    %v2662 = vunpack.c.h.b16 %v1736
    %v2663 = vunpack.c.l.b16 %v1737
    %v2664 = vunpack.c.l.b16 %v1738
    %v2665 = vunpack.c.h.b16 %v1738
    %v2666 = vunpack.c.l.b16 %v1739
    %v2667 = vunpack.c.h.b16 %v1739
    %v2668 = vunpack.c.l.b16 %v1740
    %v2669 = vunpack.c.h.b16 %v1740
    %v2670 = vunpack.c.l.b16 %v1741
    %v2671 = vunpack.c.l.b16 %v1742
    %v2672 = vunpack.c.h.b16 %v1742
    %v2673 = vunpack.c.l.b16 %v1743
    %v2674 = vunpack.c.h.b16 %v1743
    %v2675 = vunpack.c.l.b16 %v1744
    %v2676 = vunpack.c.h.b16 %v1744
    %v2677 = vunpack.c.l.b16 %v1745
    %v2678 = vunpack.c.l.b16 %v1746
    %v2679 = vunpack.c.h.b16 %v1746
    %v2680 = vunpack.c.l.b16 %v1747
    %v2681 = vunpack.c.h.b16 %v1747
    %v2682 = vunpack.c.l.b16 %v1748
    %v2683 = vunpack.c.h.b16 %v1748
    %v2684 = vunpack.c.l.b16 %v1749
    %v2685 = vunpack.c.l.b16 %v1750
    %v2686 = vunpack.c.h.b16 %v1750
    %v2687 = vunpack.c.l.b16 %v1751
    %v2688 = vunpack.c.h.b16 %v1751
    %v2689 = vunpack.c.l.b16 %v1752
    %v2690 = vunpack.c.h.b16 %v1752
    %v2691 = vunpack.c.l.b16 %v1753
    %v2692 = vunpack.c.l.b16 %v1754
    %v2693 = vunpack.c.h.b16 %v1754
    %v2694 = vunpack.c.l.b16 %v1755
    %v2695 = vunpack.c.h.b16 %v1755
    %v2696 = vunpack.c.l.b16 %v1756
    %v2697 = vunpack.c.h.b16 %v1756
    %v2698 = vunpack.c.l.b16 %v1757
    %v2699 = vunpack.c.l.b16 %v1758
    %v2700 = vunpack.c.h.b16 %v1758
    %v2701 = vunpack.c.l.b16 %v1759
    %v2702 = vunpack.c.h.b16 %v1759
    %v2703 = vunpack.c.l.b16 %v1760
    %v2704 = vunpack.c.h.b16 %v1760
    %v2705 = vunpack.c.l.b16 %v1761
    %v2706 = vunpack.c.l.b16 %v1762
    %v2707 = vunpack.c.h.b16 %v1762
    %v2708 = vunpack.c.l.b16 %v1763
    %v2709 = vunpack.c.h.b16 %v1763
    %v2710 = vunpack.c.l.b16 %v1764
    %v2711 = vunpack.c.h.b16 %v1764
    %v2712 = vunpack.c.l.b16 %v1765
    %v2713 = vunpack.c.l.b16 %v1766
    %v2714 = vunpack.c.h.b16 %v1766
    %v2715 = vunpack.c.l.b16 %v1767
    %v2716 = vunpack.c.h.b16 %v1767
    %v2717 = vunpack.c.l.b16 %v1768
    %v2718 = vunpack.c.h.b16 %v1768
    %v2719 = vunpack.c.l.b16 %v1769
    %v2720 = vunpack.c.l.b16 %v1770
    %v2721 = vunpack.c.h.b16 %v1770
    %v2722 = vunpack.c.l.b16 %v1771
    %v2723 = vunpack.c.h.b16 %v1771
    %v2724 = vunpack.c.l.b16 %v1772
    %v2725 = vunpack.c.h.b16 %v1772
    %v2726 = vunpack.c.l.b16 %v1773
    %v2727 = vunpack.c.l.b16 %v1774
    %v2728 = vunpack.c.h.b16 %v1774
    %v2729 = vunpack.c.l.b16 %v1775
    %v2730 = vunpack.c.h.b16 %v1775
    %v2731 = vunpack.c.l.b16 %v1776
    %v2732 = vunpack.c.h.b16 %v1776
    %v2733 = vunpack.c.l.b16 %v1777
    %v2734 = vunpack.c.l.b16 %v1778
    %v2735 = vunpack.c.h.b16 %v1778
    %v2736 = vunpack.c.l.b16 %v1779
    %v2737 = vunpack.c.h.b16 %v1779
    %v2738 = vunpack.c.l.b16 %v1780
    %v2739 = vunpack.c.h.b16 %v1780
    %v2740 = vunpack.c.l.b16 %v1781
    %v2741 = vunpack.c.l.b16 %v1782
    %v2742 = vunpack.c.h.b16 %v1782
    %v2743 = vunpack.c.l.b16 %v1783
    %v2744 = vunpack.c.h.b16 %v1783
    %v2745 = vunpack.c.l.b16 %v1784
    %v2746 = vunpack.c.h.b16 %v1784
    %v2747 = vunpack.c.l.b16 %v1785
    %v2748 = vunpack.c.l.b16 %v1786
    %v2749 = vunpack.c.h.b16 %v1786
    %v2750 = vunpack.c.l.b16 %v1787
    %v2751 = vunpack.c.h.b16 %v1787
    %v2752 = vunpack.c.l.b16 %v1788
    %v2753 = vunpack.c.h.b16 %v1788
    %v2754 = vunpack.c.l.b16 %v1789
    %v2755 = vunpack.c.l.b16 %v1790
    %v2756 = vunpack.c.h.b16 %v1790
    %v2757 = vunpack.c.l.b16 %v1791
    %v2758 = vunpack.c.h.b16 %v1791
    %v2759 = vunpack.c.l.b16 %v1792
    %v2760 = vunpack.c.h.b16 %v1792
    %v2761 = vunpack.c.l.b16 %v1793
    %v2762 = vunpack.c.l.b16 %v1794
    %v2763 = vunpack.c.h.b16 %v1794
    %v2764 = vunpack.c.l.b16 %v1795
    %v2765 = vunpack.c.h.b16 %v1795
    %v2766 = vunpack.c.l.b16 %v1796
    %v2767 = vunpack.c.h.b16 %v1796
    %v2768 = vunpack.c.l.b16 %v1797
    %v2769 = vunpack.c.l.b16 %v1798
    %v2770 = vunpack.c.h.b16 %v1798
    %v2771 = vunpack.c.l.b16 %v1799
    %v2772 = vunpack.c.h.b16 %v1799
    %v2773 = vunpack.c.l.b16 %v1800
    %v2774 = vunpack.c.h.b16 %v1800
    %v2775 = vunpack.c.l.b16 %v1801
    %v2776 = vunpack.c.l.b16 %v1802
    %v2777 = vunpack.c.h.b16 %v1802
    %v2778 = vunpack.c.l.b16 %v1803
    %v2779 = vunpack.c.h.b16 %v1803
    %v2780 = vunpack.c.l.b16 %v1804
    %v2781 = vunpack.c.h.b16 %v1804
    %v2782 = vunpack.c.l.b16 %v1805
    %v2783 = vunpack.c.l.b16 %v1806
    %v2784 = vunpack.c.h.b16 %v1806
    %v2785 = vunpack.c.l.b16 %v1807
    %v2786 = vunpack.c.h.b16 %v1807
    %v2787 = vunpack.c.l.b16 %v1808
    %v2788 = vunpack.c.h.b16 %v1808
    %v2789 = vunpack.c.l.b16 %v1809
    %v2790 = vunpack.c.l.b16 %v1810
    %v2791 = vunpack.c.h.b16 %v1810
    %v2792 = vunpack.c.l.b16 %v1811
    %v2793 = vunpack.c.h.b16 %v1811
    %v2794 = vunpack.c.l.b16 %v1812
    %v2795 = vunpack.c.h.b16 %v1812
    %v2796 = vunpack.c.l.b16 %v1813
    %v2797 = vunpack.c.l.b16 %v1814
    %v2798 = vunpack.c.h.b16 %v1814
    %v2799 = vunpack.c.l.b16 %v1815
    %v2800 = vunpack.c.h.b16 %v1815
    %v2801 = vunpack.c.l.b16 %v1816
    %v2802 = vunpack.c.h.b16 %v1816
    %v2803 = vunpack.c.l.b16 %v1817
    %v2804 = vunpack.c.l.b16 %v1818
    %v2805 = vunpack.c.h.b16 %v1818
    %v2806 = vunpack.c.l.b16 %v1819
    %v2807 = vunpack.c.h.b16 %v1819
    %v2808 = vunpack.c.l.b16 %v1820
    %v2809 = vunpack.c.h.b16 %v1820
    %v2810 = vunpack.c.l.b16 %v1821
    %v2811 = vunpack.c.l.b16 %v1822
    %v2812 = vunpack.c.h.b16 %v1822
    %v2813 = vunpack.c.l.b16 %v1823
    %v2814 = vunpack.c.h.b16 %v1823
    %v2815 = vunpack.c.l.b16 %v1824
    %v2816 = vunpack.c.h.b16 %v1824
    %v2817 = vunpack.c.l.b16 %v1825
    %v2818 = vunpack.c.l.b16 %v1826
    %v2819 = vunpack.c.h.b16 %v1826
    %v2820 = vunpack.c.l.b16 %v1827
    %v2821 = vunpack.c.h.b16 %v1827
    %v2822 = vunpack.c.l.b16 %v1828
    %v2823 = vunpack.c.h.b16 %v1828
    %v2824 = vunpack.c.l.b16 %v1829
    %v2825 = vunpack.c.l.b16 %v1830
    %v2826 = vunpack.c.h.b16 %v1830
    %v2827 = vunpack.c.l.b16 %v1831
    %v2828 = vunpack.c.h.b16 %v1831
    %v2829 = vunpack.c.l.b16 %v1832
    %v2830 = vunpack.c.h.b16 %v1832
    %v2831 = vunpack.c.l.b16 %v1833
    %v2832 = vunpack.c.l.b16 %v1834
    %v2833 = vunpack.c.h.b16 %v1834
    %v2834 = vunpack.c.l.b16 %v1835
    %v2835 = vunpack.c.h.b16 %v1835
    %v2836 = vunpack.c.l.b16 %v1836
    %v2837 = vunpack.c.h.b16 %v1836
    %v2838 = vunpack.c.l.b16 %v1837
    %v2839 = vunpack.c.l.b16 %v1838
    %v2840 = vunpack.c.h.b16 %v1838
    %v2841 = vunpack.c.l.b16 %v1839
    %v2842 = vunpack.c.h.b16 %v1839
    %v2843 = vunpack.c.l.b16 %v1840
    %v2844 = vunpack.c.h.b16 %v1840
    %v2845 = vunpack.c.l.b16 %v1841
    %v2846 = vunpack.c.l.b16 %v1842
    %v2847 = vunpack.c.h.b16 %v1842
    %v2848 = vunpack.c.l.b16 %v1843
    %v2849 = vunpack.c.h.b16 %v1843
    %v2850 = vunpack.c.l.b16 %v1844
    %v2851 = vunpack.c.h.b16 %v1844
    %v2852 = vunpack.c.l.b16 %v1845
    %v2853 = vunpack.c.l.b16 %v1846
    %v2854 = vunpack.c.h.b16 %v1846
    %v2855 = vunpack.c.l.b16 %v1847
    %v2856 = vunpack.c.h.b16 %v1847
    %v2857 = vunpack.c.l.b16 %v1848
    %v2858 = vunpack.c.h.b16 %v1848
    %v2859 = vunpack.c.l.b16 %v1849
    %v2860 = vunpack.c.l.b16 %v1850
    %v2861 = vunpack.c.h.b16 %v1850
    %v2862 = vunpack.c.l.b16 %v1851
    %v2863 = vunpack.c.h.b16 %v1851
    %v2864 = vunpack.c.l.b16 %v1852
    %v2865 = vunpack.c.h.b16 %v1852
    %v2866 = vunpack.c.l.b16 %v1853
    %v2867 = vunpack.c.l.b16 %v1854
    %v2868 = vunpack.c.h.b16 %v1854
    %v2869 = vunpack.c.l.b16 %v1855
    %v2870 = vunpack.c.h.b16 %v1855
    %v2871 = vunpack.c.l.b16 %v1856
    %v2872 = vunpack.c.h.b16 %v1856
    %v2873 = vunpack.c.l.b16 %v1857
    %v2874 = vunpack.c.l.b16 %v1858
    %v2875 = vunpack.c.h.b16 %v1858
    %v2876 = vunpack.c.l.b16 %v1859
    %v2877 = vunpack.c.h.b16 %v1859
    %v2878 = vunpack.c.l.b16 %v1860
    %v2879 = vunpack.c.h.b16 %v1860
    %v2880 = vunpack.c.l.b16 %v1861
    %v2881 = vunpack.c.l.b16 %v1862
    %v2882 = vunpack.c.h.b16 %v1862
    %v2883 = vunpack.c.l.b16 %v1863
    %v2884 = vunpack.c.h.b16 %v1863
    %v2885 = vunpack.c.l.b16 %v1864
    %v2886 = vunpack.c.h.b16 %v1864
    %v2887 = vunpack.c.l.b16 %v1865
    %v2888 = vunpack.c.l.b16 %v1866
    %v2889 = vunpack.c.h.b16 %v1866
    %v2890 = vunpack.c.l.b16 %v1867
    %v2891 = vunpack.c.h.b16 %v1867
    %v2892 = vunpack.c.l.b16 %v1868
    %v2893 = vunpack.c.h.b16 %v1868
    %v2894 = vunpack.c.l.b16 %v1869
    %v2895 = vunpack.c.l.b16 %v1870
    %v2896 = vunpack.c.h.b16 %v1870
    %v2897 = vunpack.c.l.b16 %v1871
    %v2898 = vunpack.c.h.b16 %v1871
    %v2899 = vunpack.c.l.b16 %v1872
    %v2900 = vunpack.c.h.b16 %v1872
    %v2901 = vunpack.c.l.b16 %v1873
    %v2902 = vunpack.c.l.b16 %v1874
    %v2903 = vunpack.c.h.b16 %v1874
    %v2904 = vunpack.c.l.b16 %v1875
    %v2905 = vunpack.c.h.b16 %v1875
    %v2906 = vunpack.c.l.b16 %v1876
    %v2907 = vunpack.c.h.b16 %v1876
    %v2908 = vunpack.c.l.b16 %v1877
    %v2909 = vunpack.c.l.b16 %v1878
    %v2910 = vunpack.c.h.b16 %v1878
    %v2911 = vunpack.c.l.b16 %v1879
    %v2912 = vunpack.c.h.b16 %v1879
    %v2913 = vunpack.c.l.b16 %v1880
    %v2914 = vunpack.c.h.b16 %v1880
    %v2915 = vunpack.c.l.b16 %v1881
    %v2916 = vunpack.c.l.b16 %v1882
    %v2917 = vunpack.c.h.b16 %v1882
    %v2918 = vunpack.c.l.b16 %v1883
    %v2919 = vunpack.c.h.b16 %v1883
    %v2920 = vunpack.c.l.b16 %v1884
    %v2921 = vunpack.c.h.b16 %v1884
    %v2922 = vunpack.c.l.b16 %v1885
    %v2923 = vunpack.c.l.b16 %v1886
    %v2924 = vunpack.c.h.b16 %v1886
    %v2925 = vunpack.c.l.b16 %v1887
    %v2926 = vunpack.c.h.b16 %v1887
    %v2927 = vunpack.c.l.b16 %v1888
    %v2928 = vunpack.c.h.b16 %v1888
    %v2929 = vunpack.c.l.b16 %v1889
    %v2930 = vunpack.c.l.b16 %v1890
    %v2931 = vunpack.c.h.b16 %v1890
    %v2932 = vunpack.c.l.b16 %v1891
    %v2933 = vunpack.c.h.b16 %v1891
    %v2934 = vunpack.c.l.b16 %v1892
    %v2935 = vunpack.c.h.b16 %v1892
    %v2936 = vunpack.c.l.b16 %v1893
    %v2937 = vunpack.c.l.b16 %v1894
    %v2938 = vunpack.c.h.b16 %v1894
    %v2939 = vunpack.c.l.b16 %v1895
    %v2940 = vunpack.c.h.b16 %v1895
    %v2941 = vunpack.c.l.b16 %v1896
    %v2942 = vunpack.c.h.b16 %v1896
    %v2943 = vunpack.c.l.b16 %v1897
    %v2944 = vunpack.c.l.b16 %v1898
    %v2945 = vunpack.c.h.b16 %v1898
    %v2946 = vunpack.c.l.b16 %v1899
    %v2947 = vunpack.c.h.b16 %v1899
    %v2948 = vunpack.c.l.b16 %v1900
    %v2949 = vunpack.c.h.b16 %v1900
    %v2950 = vunpack.c.l.b16 %v1901
    %v2951 = vunpack.c.l.b16 %v1902
    %v2952 = vunpack.c.h.b16 %v1902
    %v2953 = vunpack.c.l.b16 %v1903
    %v2954 = vunpack.c.h.b16 %v1903
    %v2955 = vunpack.c.l.b16 %v1904
    %v2956 = vunpack.c.h.b16 %v1904
    %v2957 = vunpack.c.l.b16 %v1905
    %v2958 = vunpack.c.l.b16 %v1906
    %v2959 = vunpack.c.h.b16 %v1906
    %v2960 = vunpack.c.l.b16 %v1907
    %v2961 = vunpack.c.h.b16 %v1907
    %v2962 = vunpack.c.l.b16 %v1908
    %v2963 = vunpack.c.h.b16 %v1908
    %v2964 = vunpack.c.l.b16 %v1909
    %v2965 = vunpack.c.l.b16 %v1910
    %v2966 = vunpack.c.h.b16 %v1910
    %v2967 = vunpack.c.l.b16 %v1911
    %v2968 = vunpack.c.h.b16 %v1911
    %v2969 = vunpack.c.l.b16 %v1912
    %v2970 = vunpack.c.h.b16 %v1912
    %v2971 = vunpack.c.l.b16 %v1913
    %v2972 = vunpack.c.l.b16 %v1914
    %v2973 = vunpack.c.h.b16 %v1914
    %v2974 = vunpack.c.l.b16 %v1915
    %v2975 = vunpack.c.h.b16 %v1915
    %v2976 = vunpack.c.l.b16 %v1916
    %v2977 = vunpack.c.h.b16 %v1916
    %v2978 = vunpack.c.l.b16 %v1917
    %v2979 = vunpack.c.l.b16 %v1918
    %v2980 = vunpack.c.h.b16 %v1918
    %v2981 = vunpack.c.l.b16 %v1919
    %v2982 = vunpack.c.h.b16 %v1919
    %v2983 = vunpack.c.l.b16 %v1920
    %v2984 = vunpack.c.h.b16 %v1920
    %v2985 = vunpack.c.l.b16 %v1921
    %v2986 = vunpack.c.l.b16 %v1922
    %v2987 = vunpack.c.h.b16 %v1922
    %v2988 = vunpack.c.l.b16 %v1923
    %v2989 = vunpack.c.h.b16 %v1923
    %v2990 = vunpack.c.l.b16 %v1924
    %v2991 = vunpack.c.h.b16 %v1924
    %v2992 = vunpack.c.l.b16 %v1925
    %v2993 = vunpack.c.l.b16 %v1926
    %v2994 = vunpack.c.h.b16 %v1926
    %v2995 = vunpack.c.l.b16 %v1927
    %v2996 = vunpack.c.h.b16 %v1927
    %v2997 = vunpack.c.l.b16 %v1928
    %v2998 = vunpack.c.h.b16 %v1928
    %v2999 = vunpack.c.l.b16 %v1929
    %v3000 = vunpack.c.l.b16 %v1930
    %v3001 = vunpack.c.h.b16 %v1930
    %v3002 = vunpack.c.l.b16 %v1931
    %v3003 = vunpack.c.h.b16 %v1931
    %v3004 = vunpack.c.l.b16 %v1932
    %v3005 = vunpack.c.h.b16 %v1932
    %v3006 = vunpack.c.l.b16 %v1933
    %v3007 = vunpack.c.l.b16 %v1934
    %v3008 = vunpack.c.h.b16 %v1934
    %v3009 = vunpack.c.l.b16 %v1935
    %v3010 = vunpack.c.h.b16 %v1935
    %v3011 = vunpack.c.l.b16 %v1936
    %v3012 = vunpack.c.h.b16 %v1936
    %v3013 = vunpack.c.l.b16 %v1937
    %v3014 = vunpack.c.l.b16 %v1938
    %v3015 = vunpack.c.h.b16 %v1938
    %v3016 = vunpack.c.l.b16 %v1939
    %v3017 = vunpack.c.h.b16 %v1939
    %v3018 = vunpack.c.l.b16 %v1940
    %v3019 = vunpack.c.h.b16 %v1940
    %v3020 = vunpack.c.l.b16 %v1941
    %v3021 = vunpack.c.l.b16 %v1942
    %v3022 = vunpack.c.h.b16 %v1942
    %v3023 = vunpack.c.l.b16 %v1943
    %v3024 = vunpack.c.h.b16 %v1943
    %v3025 = vunpack.c.l.b16 %v1944
    %v3026 = vunpack.c.h.b16 %v1944
    %v3027 = vunpack.c.l.b16 %v1945
    %v3028 = vunpack.c.l.b16 %v1946
    %v3029 = vunpack.c.h.b16 %v1946
    %v3030 = vunpack.c.l.b16 %v1947
    %v3031 = vunpack.c.h.b16 %v1947
    %v3032 = vunpack.c.l.b16 %v1948
    %v3033 = vunpack.c.h.b16 %v1948
    %v3034 = vunpack.c.l.b16 %v1949
    %v3035 = vunpack.c.l.b16 %v1950
    %v3036 = vunpack.c.h.b16 %v1950
    %v3037 = vunpack.c.l.b16 %v1951
    %v3038 = vunpack.c.h.b16 %v1951
    %v3039 = vunpack.c.l.b16 %v1952
    %v3040 = vunpack.c.h.b16 %v1952
    %v3041 = vunpack.c.l.b16 %v1953
    %v3042 = vunpack.c.l.b16 %v1954
    %v3043 = vunpack.c.h.b16 %v1954
    %v3044 = vunpack.c.l.b16 %v1955
    %v3045 = vunpack.c.h.b16 %v1955
    %v3046 = vunpack.c.l.b16 %v1956
    %v3047 = vunpack.c.h.b16 %v1956
    %v3048 = vunpack.c.l.b16 %v1957
    %v3049 = vunpack.c.l.b16 %v1958
    %v3050 = vunpack.c.h.b16 %v1958
    %v3051 = vunpack.c.l.b16 %v1959
    %v3052 = vunpack.c.h.b16 %v1959
    %v3053 = vunpack.c.l.b16 %v1960
    %v3054 = vunpack.c.h.b16 %v1960
    %v3055 = vunpack.c.l.b16 %v1961
    %v3056 = vunpack.c.l.b16 %v1962
    %v3057 = vunpack.c.h.b16 %v1962
    %v3058 = vunpack.c.l.b16 %v1963
    %v3059 = vunpack.c.h.b16 %v1963
    %v3060 = vunpack.c.l.b16 %v1964
    %v3061 = vunpack.c.h.b16 %v1964
    %v3062 = vunpack.c.l.b16 %v1965
    %v3063 = vunpack.c.l.b16 %v1966
    %v3064 = vunpack.c.h.b16 %v1966
    %v3065 = vunpack.c.l.b16 %v1967
    %v3066 = vunpack.c.h.b16 %v1967
    %v3067 = vunpack.c.l.b16 %v1968
    %v3068 = vunpack.c.h.b16 %v1968
    %v3069 = vunpack.c.l.b16 %v1969
    %v3070 = vunpack.c.l.b16 %v1970
    %v3071 = vunpack.c.h.b16 %v1970
    %v3072 = vunpack.c.l.b16 %v1971
    %v3073 = vunpack.c.h.b16 %v1971
    %v3074 = vunpack.c.l.b16 %v1972
    %v3075 = vunpack.c.h.b16 %v1972
    %v3076 = vunpack.c.l.b16 %v1973
    %v3077 = vunpack.c.l.b16 %v1974
    %v3078 = vunpack.c.h.b16 %v1974
    %v3079 = vunpack.c.l.b16 %v1975
    %v3080 = vunpack.c.h.b16 %v1975
    %v3081 = vunpack.c.l.b16 %v1976
    %v3082 = vunpack.c.h.b16 %v1976
    %v3083 = vunpack.c.l.b16 %v1977
    %v3084 = vunpack.c.l.b16 %v1978
    %v3085 = vunpack.c.h.b16 %v1978
    %v3086 = vunpack.c.l.b16 %v1979
    %v3087 = vunpack.c.h.b16 %v1979
    %v3088 = vunpack.c.l.b16 %v1980
    %v3089 = vunpack.c.h.b16 %v1980
    %v3090 = vunpack.c.l.b16 %v1981
    %v3091 = vunpack.c.l.b16 %v1982
    %v3092 = vunpack.c.h.b16 %v1982
    %v3093 = vunpack.c.l.b16 %v1983
    %v3094 = vunpack.c.h.b16 %v1983
    %v3095 = vunpack.c.l.b16 %v1984
    %v3096 = vunpack.c.h.b16 %v1984
    %v3097 = vunpack.c.l.b16 %v1985
    %v3098 = vunpack.c.l.b16 %v1986
    %v3099 = vunpack.c.h.b16 %v1986
    %v3100 = vunpack.c.l.b16 %v1987
    %v3101 = vunpack.c.h.b16 %v1987
    %v3102 = vunpack.c.l.b16 %v1988
    %v3103 = vunpack.c.h.b16 %v1988
    %v3104 = vunpack.c.l.b16 %v1989
    %v3105 = vunpack.c.l.b16 %v1990
    %v3106 = vunpack.c.h.b16 %v1990
    %v3107 = vunpack.c.l.b16 %v1991
    %v3108 = vunpack.c.h.b16 %v1991
    %v3109 = vunpack.c.l.b16 %v1992
    %v3110 = vunpack.c.h.b16 %v1992
    %v3111 = vunpack.c.l.b16 %v1993
    %v3112 = vunpack.c.l.b16 %v1994
    %v3113 = vunpack.c.h.b16 %v1994
    %v3114 = vunpack.c.l.b16 %v1995
    %v3115 = vunpack.c.h.b16 %v1995
    %v3116 = vunpack.c.l.b16 %v1996
    %v3117 = vunpack.c.h.b16 %v1996
    %v3118 = vunpack.c.l.b16 %v1997
    %v3119 = vunpack.c.l.b16 %v1998
    %v3120 = vunpack.c.h.b16 %v1998
    %v3121 = vunpack.c.l.b16 %v1999
    %v3122 = vunpack.c.h.b16 %v1999
    %v3123 = vunpack.c.l.b16 %v2000
    %v3124 = vunpack.c.h.b16 %v2000
    %v3125 = vunpack.c.l.b16 %v2001
    %v3126 = vunpack.c.l.b16 %v2002
    %v3127 = vunpack.c.h.b16 %v2002
    %v3128 = vunpack.c.l.b16 %v2003
    %v3129 = vunpack.c.h.b16 %v2003
    %v3130 = vunpack.c.l.b16 %v2004
    %v3131 = vunpack.c.h.b16 %v2004
    %v3132 = vunpack.c.l.b16 %v2005
    %v3133 = vunpack.c.l.b16 %v2006
    %v3134 = vunpack.c.h.b16 %v2006
    %v3135 = vunpack.c.l.b16 %v2007
    %v3136 = vunpack.c.h.b16 %v2007
    %v3137 = vunpack.c.l.b16 %v2008
    %v3138 = vunpack.c.h.b16 %v2008
    %v3139 = vunpack.c.l.b16 %v2009
    %v3140 = vunpack.c.l.b16 %v2010
    %v3141 = vunpack.c.h.b16 %v2010
    %v3142 = vunpack.c.l.b16 %v2011
    %v3143 = vunpack.c.h.b16 %v2011
    %v3144 = vunpack.c.l.b16 %v2012
    %v3145 = vunpack.c.h.b16 %v2012
    %v3146 = vunpack.c.l.b16 %v2013
    %v3147 = vunpack.c.l.b16 %v2014
    %v3148 = vunpack.c.h.b16 %v2014
    %v3149 = vunpack.c.l.b16 %v2015
    %v3150 = vunpack.c.h.b16 %v2015
    %v3151 = vunpack.c.l.b16 %v2016
    %v3152 = vunpack.c.h.b16 %v2016
    %v3153 = vunpack.c.l.b16 %v2017
    %v3154 = vunpack.c.l.b16 %v2018
    %v3155 = vunpack.c.h.b16 %v2018
    %v3156 = vunpack.c.l.b16 %v2019
    %v3157 = vunpack.c.h.b16 %v2019
    %v3158 = vunpack.c.l.b16 %v2020
    %v3159 = vunpack.c.h.b16 %v2020
    %v3160 = vunpack.c.l.b16 %v2021
    %v3161 = vunpack.c.l.b16 %v2022
    %v3162 = vunpack.c.h.b16 %v2022
    %v3163 = vunpack.c.l.b16 %v2023
    %v3164 = vunpack.c.h.b16 %v2023
    %v3165 = vunpack.c.l.b16 %v2024
    %v3166 = vunpack.c.h.b16 %v2024
    %v3167 = vunpack.c.l.b16 %v2025
    %v3168 = vunpack.c.l.b16 %v2026
    %v3169 = vunpack.c.h.b16 %v2026
    %v3170 = vunpack.c.l.b16 %v2027
    %v3171 = vunpack.c.h.b16 %v2027
    %v3172 = vunpack.c.l.b16 %v2028
    %v3173 = vunpack.c.h.b16 %v2028
    %v3174 = vunpack.c.l.b16 %v2029
    %v3175 = vunpack.c.l.b16 %v2030
    %v3176 = vunpack.c.h.b16 %v2030
    %v3177 = vunpack.c.l.b16 %v2031
    %v3178 = vunpack.c.h.b16 %v2031
    %v3179 = vunpack.c.l.b16 %v2032
    %v3180 = vunpack.c.h.b16 %v2032
    %v3181 = vunpack.c.l.b16 %v2033
    %v3182 = vunpack.c.l.b16 %v2034
    %v3183 = vunpack.c.h.b16 %v2034
    %v3184 = vunpack.c.l.b16 %v2035
    %v3185 = vunpack.c.h.b16 %v2035
    %v3186 = vunpack.c.l.b16 %v2036
    %v3187 = vunpack.c.h.b16 %v2036
    %v3188 = vunpack.c.l.b16 %v2037
    %v3189 = vunpack.c.l.b16 %v2038
    %v3190 = vunpack.c.h.b16 %v2038
    %v3191 = vunpack.c.l.b16 %v2039
    %v3192 = vunpack.c.h.b16 %v2039
    %v3193 = vunpack.c.l.b16 %v2040
    %v3194 = vunpack.c.h.b16 %v2040
    %v3195 = vunpack.c.l.b16 %v2041
    %v3196 = vunpack.c.l.b16 %v2042
    %v3197 = vunpack.c.h.b16 %v2042
    %v3198 = vunpack.c.l.b16 %v2043
    %v3199 = vunpack.c.h.b16 %v2043
    %v3200 = vunpack.c.l.b16 %v2044
    %v3201 = vunpack.c.h.b16 %v2044
    %v3202 = vunpack.c.l.b16 %v2045
    %v3203 = vunpack.c.l.b16 %v2046
    %v3204 = vunpack.c.h.b16 %v2046
    %v3205 = vunpack.c.l.b16 %v2047
    %v3206 = vunpack.c.h.b16 %v2047
    %v3207 = vunpack.c.l.b16 %v2048
    %v3208 = vunpack.c.h.b16 %v2048
    %v3209 = vunpack.c.l.b16 %v2049
    %v3210 = vunpack.c.l.b16 %v2050
    %v3211 = vunpack.c.h.b16 %v2050
    %v3212 = vunpack.c.l.b16 %v2051
    %v3213 = vunpack.c.h.b16 %v2051
    %v3214 = vunpack.c.l.b16 %v2052
    %v3215 = vunpack.c.h.b16 %v2052
    %v3216 = vunpack.c.l.b16 %v2053
    %v3217 = vunpack.c.l.b16 %v2054
    %v3218 = vunpack.c.h.b16 %v2054
    %v3219 = vunpack.c.l.b16 %v2055
    %v3220 = vunpack.c.h.b16 %v2055
    %v3221 = vunpack.c.l.b16 %v2056
    %v3222 = vunpack.c.h.b16 %v2056
    %v3223 = vunpack.c.l.b16 %v2057
    %v3224 = vunpack.c.l.b16 %v2058
    %v3225 = vunpack.c.h.b16 %v2058
    %v3226 = vunpack.c.l.b16 %v2059
    %v3227 = vunpack.c.h.b16 %v2059
    %v3228 = vunpack.c.l.b16 %v2060
    %v3229 = vunpack.c.h.b16 %v2060
    %v3230 = vunpack.c.l.b16 %v2061
    %v3231 = vunpack.c.l.b16 %v2062
    %v3232 = vunpack.c.h.b16 %v2062
    %v3233 = vunpack.c.l.b16 %v2063
    %v3234 = vunpack.c.h.b16 %v2063
    %v3235 = vunpack.c.l.b16 %v2064
    %v3236 = vunpack.c.h.b16 %v2064
    %v3237 = vunpack.c.l.b16 %v2065
    %v3238 = vunpack.c.l.b16 %v2066
    %v3239 = vunpack.c.h.b16 %v2066
    %v3240 = vunpack.c.l.b16 %v2067
    %v3241 = vunpack.c.h.b16 %v2067
    %v3242 = vunpack.c.l.b16 %v2068
    %v3243 = vunpack.c.h.b16 %v2068
    %v3244 = vunpack.c.l.b16 %v2069
    %v3245 = vunpack.c.l.b16 %v2070
    %v3246 = vunpack.c.h.b16 %v2070
    %v3247 = vunpack.c.l.b16 %v2071
    %v3248 = vunpack.c.h.b16 %v2071
    %v3249 = vunpack.c.l.b16 %v2072
    %v3250 = vunpack.c.h.b16 %v2072
    %v3251 = vunpack.c.l.b16 %v2073
    %v3252 = vunpack.c.l.b16 %v2074
    %v3253 = vunpack.c.h.b16 %v2074
    %v3254 = vunpack.c.l.b16 %v2075
    %v3255 = vunpack.c.h.b16 %v2075
    %v3256 = vunpack.c.l.b16 %v2076
    %v3257 = vunpack.c.h.b16 %v2076
    %v3258 = vunpack.c.l.b16 %v2077
    %v3259 = vpack.c.b16 %v2538, %v2531
    %v3260 = vpack.c.b16 %v2539, %v2532
    %v3261 = vpack.c.b16 %v2540, %v2533
    %v3262 = vpack.c.b16 %v2541, %v2534
    %v3263 = vpack.c.b16 %v2542, %v2535
    %v3264 = vpack.c.b16 %v2543, %v2536
    %v3265 = vpack.c.b16 %v2544, %v2537
    %v3266 = vpack.c.b16 %v2552, %v2545
    %v3267 = vpack.c.b16 %v2553, %v2546
    %v3268 = vpack.c.b16 %v2554, %v2547
    %v3269 = vpack.c.b16 %v2555, %v2548
    %v3270 = vpack.c.b16 %v2556, %v2549
    %v3271 = vpack.c.b16 %v2557, %v2550
    %v3272 = vpack.c.b16 %v2558, %v2551
    %v3273 = vpack.c.b16 %v2566, %v2559
    %v3274 = vpack.c.b16 %v2567, %v2560
    %v3275 = vpack.c.b16 %v2568, %v2561
    %v3276 = vpack.c.b16 %v2569, %v2562
    %v3277 = vpack.c.b16 %v2570, %v2563
    %v3278 = vpack.c.b16 %v2571, %v2564
    %v3279 = vpack.c.b16 %v2572, %v2565
    %v3280 = vpack.c.b16 %v2580, %v2573
    %v3281 = vpack.c.b16 %v2581, %v2574
    %v3282 = vpack.c.b16 %v2582, %v2575
    %v3283 = vpack.c.b16 %v2583, %v2576
    %v3284 = vpack.c.b16 %v2584, %v2577
    %v3285 = vpack.c.b16 %v2585, %v2578
    %v3286 = vpack.c.b16 %v2586, %v2579
    %v3287 = vpack.c.b16 %v2594, %v2587
    %v3288 = vpack.c.b16 %v2595, %v2588
    %v3289 = vpack.c.b16 %v2596, %v2589
    %v3290 = vpack.c.b16 %v2597, %v2590
    %v3291 = vpack.c.b16 %v2598, %v2591
    %v3292 = vpack.c.b16 %v2599, %v2592
    %v3293 = vpack.c.b16 %v2600, %v2593
    %v3294 = vpack.c.b16 %v2608, %v2601
    %v3295 = vpack.c.b16 %v2609, %v2602
    %v3296 = vpack.c.b16 %v2610, %v2603
    %v3297 = vpack.c.b16 %v2611, %v2604
    %v3298 = vpack.c.b16 %v2612, %v2605
    %v3299 = vpack.c.b16 %v2613, %v2606
    %v3300 = vpack.c.b16 %v2614, %v2607
    %v3301 = vpack.c.b16 %v2622, %v2615
    %v3302 = vpack.c.b16 %v2623, %v2616
    %v3303 = vpack.c.b16 %v2624, %v2617
    %v3304 = vpack.c.b16 %v2625, %v2618
    %v3305 = vpack.c.b16 %v2626, %v2619
    %v3306 = vpack.c.b16 %v2627, %v2620
    %v3307 = vpack.c.b16 %v2628, %v2621
    %v3308 = vpack.c.b16 %v2636, %v2629
    %v3309 = vpack.c.b16 %v2637, %v2630
    %v3310 = vpack.c.b16 %v2638, %v2631
    %v3311 = vpack.c.b16 %v2639, %v2632
    %v3312 = vpack.c.b16 %v2640, %v2633
    %v3313 = vpack.c.b16 %v2641, %v2634
    %v3314 = vpack.c.b16 %v2642, %v2635
    %v3315 = vpack.c.b16 %v2650, %v2643
    %v3316 = vpack.c.b16 %v2651, %v2644
    %v3317 = vpack.c.b16 %v2652, %v2645
    %v3318 = vpack.c.b16 %v2653, %v2646
    %v3319 = vpack.c.b16 %v2654, %v2647
    %v3320 = vpack.c.b16 %v2655, %v2648
    %v3321 = vpack.c.b16 %v2656, %v2649
    %v3322 = vpack.c.b16 %v2664, %v2657
    %v3323 = vpack.c.b16 %v2665, %v2658
    %v3324 = vpack.c.b16 %v2666, %v2659
    %v3325 = vpack.c.b16 %v2667, %v2660
    %v3326 = vpack.c.b16 %v2668, %v2661
    %v3327 = vpack.c.b16 %v2669, %v2662
    %v3328 = vpack.c.b16 %v2670, %v2663
    %v3329 = vpack.c.b16 %v2678, %v2671
    %v3330 = vpack.c.b16 %v2679, %v2672
    %v3331 = vpack.c.b16 %v2680, %v2673
    %v3332 = vpack.c.b16 %v2681, %v2674
    %v3333 = vpack.c.b16 %v2682, %v2675
    %v3334 = vpack.c.b16 %v2683, %v2676
    %v3335 = vpack.c.b16 %v2684, %v2677
    %v3336 = vpack.c.b16 %v2692, %v2685
    %v3337 = vpack.c.b16 %v2693, %v2686
    %v3338 = vpack.c.b16 %v2694, %v2687
    %v3339 = vpack.c.b16 %v2695, %v2688
    %v3340 = vpack.c.b16 %v2696, %v2689
    %v3341 = vpack.c.b16 %v2697, %v2690
    %v3342 = vpack.c.b16 %v2698, %v2691
    %v3343 = vpack.c.b16 %v2706, %v2699
    %v3344 = vpack.c.b16 %v2707, %v2700
    %v3345 = vpack.c.b16 %v2708, %v2701
    %v3346 = vpack.c.b16 %v2709, %v2702
    %v3347 = vpack.c.b16 %v2710, %v2703
    %v3348 = vpack.c.b16 %v2711, %v2704
    %v3349 = vpack.c.b16 %v2712, %v2705
    %v3350 = vpack.c.b16 %v2720, %v2713
    %v3351 = vpack.c.b16 %v2721, %v2714
    %v3352 = vpack.c.b16 %v2722, %v2715
    %v3353 = vpack.c.b16 %v2723, %v2716
    %v3354 = vpack.c.b16 %v2724, %v2717
    %v3355 = vpack.c.b16 %v2725, %v2718
    %v3356 = vpack.c.b16 %v2726, %v2719
    %v3357 = vpack.c.b16 %v2734, %v2727
    %v3358 = vpack.c.b16 %v2735, %v2728
    %v3359 = vpack.c.b16 %v2736, %v2729
    %v3360 = vpack.c.b16 %v2737, %v2730
    %v3361 = vpack.c.b16 %v2738, %v2731
    %v3362 = vpack.c.b16 %v2739, %v2732
    %v3363 = vpack.c.b16 %v2740, %v2733
    %v3364 = vpack.c.b16 %v2748, %v2741
    %v3365 = vpack.c.b16 %v2749, %v2742
    %v3366 = vpack.c.b16 %v2750, %v2743
    %v3367 = vpack.c.b16 %v2751, %v2744
    %v3368 = vpack.c.b16 %v2752, %v2745
    %v3369 = vpack.c.b16 %v2753, %v2746
    %v3370 = vpack.c.b16 %v2754, %v2747
    %v3371 = vpack.c.b16 %v2762, %v2755
    %v3372 = vpack.c.b16 %v2763, %v2756
    %v3373 = vpack.c.b16 %v2764, %v2757
    %v3374 = vpack.c.b16 %v2765, %v2758
    %v3375 = vpack.c.b16 %v2766, %v2759
    %v3376 = vpack.c.b16 %v2767, %v2760
    %v3377 = vpack.c.b16 %v2768, %v2761
    %v3378 = vpack.c.b16 %v2776, %v2769
    %v3379 = vpack.c.b16 %v2777, %v2770
    %v3380 = vpack.c.b16 %v2778, %v2771
    %v3381 = vpack.c.b16 %v2779, %v2772
    %v3382 = vpack.c.b16 %v2780, %v2773
    %v3383 = vpack.c.b16 %v2781, %v2774
    %v3384 = vpack.c.b16 %v2782, %v2775
    %v3385 = vpack.c.b16 %v2790, %v2783
    %v3386 = vpack.c.b16 %v2791, %v2784
    %v3387 = vpack.c.b16 %v2792, %v2785
    %v3388 = vpack.c.b16 %v2793, %v2786
    %v3389 = vpack.c.b16 %v2794, %v2787
    %v3390 = vpack.c.b16 %v2795, %v2788
    %v3391 = vpack.c.b16 %v2796, %v2789
    %v3392 = vpack.c.b16 %v2804, %v2797
    %v3393 = vpack.c.b16 %v2805, %v2798
    %v3394 = vpack.c.b16 %v2806, %v2799
    %v3395 = vpack.c.b16 %v2807, %v2800
    %v3396 = vpack.c.b16 %v2808, %v2801
    %v3397 = vpack.c.b16 %v2809, %v2802
    %v3398 = vpack.c.b16 %v2810, %v2803
    %v3399 = vpack.c.b16 %v2818, %v2811
    %v3400 = vpack.c.b16 %v2819, %v2812
    %v3401 = vpack.c.b16 %v2820, %v2813
    %v3402 = vpack.c.b16 %v2821, %v2814
    %v3403 = vpack.c.b16 %v2822, %v2815
    %v3404 = vpack.c.b16 %v2823, %v2816
    %v3405 = vpack.c.b16 %v2824, %v2817
    %v3406 = vpack.c.b16 %v2832, %v2825
    %v3407 = vpack.c.b16 %v2833, %v2826
    %v3408 = vpack.c.b16 %v2834, %v2827
    %v3409 = vpack.c.b16 %v2835, %v2828
    %v3410 = vpack.c.b16 %v2836, %v2829
    %v3411 = vpack.c.b16 %v2837, %v2830
    %v3412 = vpack.c.b16 %v2838, %v2831
    %v3413 = vpack.c.b16 %v2846, %v2839
    %v3414 = vpack.c.b16 %v2847, %v2840
    %v3415 = vpack.c.b16 %v2848, %v2841
    %v3416 = vpack.c.b16 %v2849, %v2842
    %v3417 = vpack.c.b16 %v2850, %v2843
    %v3418 = vpack.c.b16 %v2851, %v2844
    %v3419 = vpack.c.b16 %v2852, %v2845
    %v3420 = vpack.c.b16 %v2860, %v2853
    %v3421 = vpack.c.b16 %v2861, %v2854
    %v3422 = vpack.c.b16 %v2862, %v2855
    %v3423 = vpack.c.b16 %v2863, %v2856
    %v3424 = vpack.c.b16 %v2864, %v2857
    %v3425 = vpack.c.b16 %v2865, %v2858
    %v3426 = vpack.c.b16 %v2866, %v2859
    %v3427 = vpack.c.b16 %v2874, %v2867
    %v3428 = vpack.c.b16 %v2875, %v2868
    %v3429 = vpack.c.b16 %v2876, %v2869
    %v3430 = vpack.c.b16 %v2877, %v2870
    %v3431 = vpack.c.b16 %v2878, %v2871
    %v3432 = vpack.c.b16 %v2879, %v2872
    %v3433 = vpack.c.b16 %v2880, %v2873
    %v3434 = vpack.c.b16 %v2888, %v2881
    %v3435 = vpack.c.b16 %v2889, %v2882
    %v3436 = vpack.c.b16 %v2890, %v2883
    %v3437 = vpack.c.b16 %v2891, %v2884
    %v3438 = vpack.c.b16 %v2892, %v2885
    %v3439 = vpack.c.b16 %v2893, %v2886
    %v3440 = vpack.c.b16 %v2894, %v2887
    %v3441 = vpack.c.b16 %v2902, %v2895
    %v3442 = vpack.c.b16 %v2903, %v2896
    %v3443 = vpack.c.b16 %v2904, %v2897
    %v3444 = vpack.c.b16 %v2905, %v2898
    %v3445 = vpack.c.b16 %v2906, %v2899
    %v3446 = vpack.c.b16 %v2907, %v2900
    %v3447 = vpack.c.b16 %v2908, %v2901
    %v3448 = vpack.c.b16 %v2916, %v2909
    %v3449 = vpack.c.b16 %v2917, %v2910
    %v3450 = vpack.c.b16 %v2918, %v2911
    %v3451 = vpack.c.b16 %v2919, %v2912
    %v3452 = vpack.c.b16 %v2920, %v2913
    %v3453 = vpack.c.b16 %v2921, %v2914
    %v3454 = vpack.c.b16 %v2922, %v2915
    %v3455 = vpack.c.b16 %v2930, %v2923
    %v3456 = vpack.c.b16 %v2931, %v2924
    %v3457 = vpack.c.b16 %v2932, %v2925
    %v3458 = vpack.c.b16 %v2933, %v2926
    %v3459 = vpack.c.b16 %v2934, %v2927
    %v3460 = vpack.c.b16 %v2935, %v2928
    %v3461 = vpack.c.b16 %v2936, %v2929
    %v3462 = vpack.c.b16 %v2944, %v2937
    %v3463 = vpack.c.b16 %v2945, %v2938
    %v3464 = vpack.c.b16 %v2946, %v2939
    %v3465 = vpack.c.b16 %v2947, %v2940
    %v3466 = vpack.c.b16 %v2948, %v2941
    %v3467 = vpack.c.b16 %v2949, %v2942
    %v3468 = vpack.c.b16 %v2950, %v2943
    %v3469 = vpack.c.b16 %v2958, %v2951
    %v3470 = vpack.c.b16 %v2959, %v2952
    %v3471 = vpack.c.b16 %v2960, %v2953
    %v3472 = vpack.c.b16 %v2961, %v2954
    %v3473 = vpack.c.b16 %v2962, %v2955
    %v3474 = vpack.c.b16 %v2963, %v2956
    %v3475 = vpack.c.b16 %v2964, %v2957
    %v3476 = vpack.c.b16 %v2972, %v2965
    %v3477 = vpack.c.b16 %v2973, %v2966
    %v3478 = vpack.c.b16 %v2974, %v2967
    %v3479 = vpack.c.b16 %v2975, %v2968
    %v3480 = vpack.c.b16 %v2976, %v2969
    %v3481 = vpack.c.b16 %v2977, %v2970
    %v3482 = vpack.c.b16 %v2978, %v2971
    %v3483 = vpack.c.b16 %v2986, %v2979
    %v3484 = vpack.c.b16 %v2987, %v2980
    %v3485 = vpack.c.b16 %v2988, %v2981
    %v3486 = vpack.c.b16 %v2989, %v2982
    %v3487 = vpack.c.b16 %v2990, %v2983
    %v3488 = vpack.c.b16 %v2991, %v2984
    %v3489 = vpack.c.b16 %v2992, %v2985
    %v3490 = vpack.c.b16 %v3000, %v2993
    %v3491 = vpack.c.b16 %v3001, %v2994
    %v3492 = vpack.c.b16 %v3002, %v2995
    %v3493 = vpack.c.b16 %v3003, %v2996
    %v3494 = vpack.c.b16 %v3004, %v2997
    %v3495 = vpack.c.b16 %v3005, %v2998
    %v3496 = vpack.c.b16 %v3006, %v2999
    %v3497 = vpack.c.b16 %v3014, %v3007
    %v3498 = vpack.c.b16 %v3015, %v3008
    %v3499 = vpack.c.b16 %v3016, %v3009
    %v3500 = vpack.c.b16 %v3017, %v3010
    %v3501 = vpack.c.b16 %v3018, %v3011
    %v3502 = vpack.c.b16 %v3019, %v3012
    %v3503 = vpack.c.b16 %v3020, %v3013
    %v3504 = vpack.c.b16 %v3028, %v3021
    %v3505 = vpack.c.b16 %v3029, %v3022
    %v3506 = vpack.c.b16 %v3030, %v3023
    %v3507 = vpack.c.b16 %v3031, %v3024
    %v3508 = vpack.c.b16 %v3032, %v3025
    %v3509 = vpack.c.b16 %v3033, %v3026
    %v3510 = vpack.c.b16 %v3034, %v3027
    %v3511 = vpack.c.b16 %v3042, %v3035
    %v3512 = vpack.c.b16 %v3043, %v3036
    %v3513 = vpack.c.b16 %v3044, %v3037
    %v3514 = vpack.c.b16 %v3045, %v3038
    %v3515 = vpack.c.b16 %v3046, %v3039
    %v3516 = vpack.c.b16 %v3047, %v3040
    %v3517 = vpack.c.b16 %v3048, %v3041
    %v3518 = vpack.c.b16 %v3056, %v3049
    %v3519 = vpack.c.b16 %v3057, %v3050
    %v3520 = vpack.c.b16 %v3058, %v3051
    %v3521 = vpack.c.b16 %v3059, %v3052
    %v3522 = vpack.c.b16 %v3060, %v3053
    %v3523 = vpack.c.b16 %v3061, %v3054
    %v3524 = vpack.c.b16 %v3062, %v3055
    %v3525 = vpack.c.b16 %v3070, %v3063
    %v3526 = vpack.c.b16 %v3071, %v3064
    %v3527 = vpack.c.b16 %v3072, %v3065
    %v3528 = vpack.c.b16 %v3073, %v3066
    %v3529 = vpack.c.b16 %v3074, %v3067
    %v3530 = vpack.c.b16 %v3075, %v3068
    %v3531 = vpack.c.b16 %v3076, %v3069
    %v3532 = vpack.c.b16 %v3084, %v3077
    %v3533 = vpack.c.b16 %v3085, %v3078
    %v3534 = vpack.c.b16 %v3086, %v3079
    %v3535 = vpack.c.b16 %v3087, %v3080
    %v3536 = vpack.c.b16 %v3088, %v3081
    %v3537 = vpack.c.b16 %v3089, %v3082
    %v3538 = vpack.c.b16 %v3090, %v3083
    %v3539 = vpack.c.b16 %v3098, %v3091
    %v3540 = vpack.c.b16 %v3099, %v3092
    %v3541 = vpack.c.b16 %v3100, %v3093
    %v3542 = vpack.c.b16 %v3101, %v3094
    %v3543 = vpack.c.b16 %v3102, %v3095
    %v3544 = vpack.c.b16 %v3103, %v3096
    %v3545 = vpack.c.b16 %v3104, %v3097
    %v3546 = vpack.c.b16 %v3112, %v3105
    %v3547 = vpack.c.b16 %v3113, %v3106
    %v3548 = vpack.c.b16 %v3114, %v3107
    %v3549 = vpack.c.b16 %v3115, %v3108
    %v3550 = vpack.c.b16 %v3116, %v3109
    %v3551 = vpack.c.b16 %v3117, %v3110
    %v3552 = vpack.c.b16 %v3118, %v3111
    %v3553 = vpack.c.b16 %v3126, %v3119
    %v3554 = vpack.c.b16 %v3127, %v3120
    %v3555 = vpack.c.b16 %v3128, %v3121
    %v3556 = vpack.c.b16 %v3129, %v3122
    %v3557 = vpack.c.b16 %v3130, %v3123
    %v3558 = vpack.c.b16 %v3131, %v3124
    %v3559 = vpack.c.b16 %v3132, %v3125
    %v3560 = vpack.c.b16 %v3140, %v3133
    %v3561 = vpack.c.b16 %v3141, %v3134
    %v3562 = vpack.c.b16 %v3142, %v3135
    %v3563 = vpack.c.b16 %v3143, %v3136
    %v3564 = vpack.c.b16 %v3144, %v3137
    %v3565 = vpack.c.b16 %v3145, %v3138
    %v3566 = vpack.c.b16 %v3146, %v3139
    %v3567 = vpack.c.b16 %v3154, %v3147
    %v3568 = vpack.c.b16 %v3155, %v3148
    %v3569 = vpack.c.b16 %v3156, %v3149
    %v3570 = vpack.c.b16 %v3157, %v3150
    %v3571 = vpack.c.b16 %v3158, %v3151
    %v3572 = vpack.c.b16 %v3159, %v3152
    %v3573 = vpack.c.b16 %v3160, %v3153
    %v3574 = vpack.c.b16 %v3168, %v3161
    %v3575 = vpack.c.b16 %v3169, %v3162
    %v3576 = vpack.c.b16 %v3170, %v3163
    %v3577 = vpack.c.b16 %v3171, %v3164
    %v3578 = vpack.c.b16 %v3172, %v3165
    %v3579 = vpack.c.b16 %v3173, %v3166
    %v3580 = vpack.c.b16 %v3174, %v3167
    %v3581 = vpack.c.b16 %v3182, %v3175
    %v3582 = vpack.c.b16 %v3183, %v3176
    %v3583 = vpack.c.b16 %v3184, %v3177
    %v3584 = vpack.c.b16 %v3185, %v3178
    %v3585 = vpack.c.b16 %v3186, %v3179
    %v3586 = vpack.c.b16 %v3187, %v3180
    %v3587 = vpack.c.b16 %v3188, %v3181
    %v3588 = vpack.c.b16 %v3196, %v3189
    %v3589 = vpack.c.b16 %v3197, %v3190
    %v3590 = vpack.c.b16 %v3198, %v3191
    %v3591 = vpack.c.b16 %v3199, %v3192
    %v3592 = vpack.c.b16 %v3200, %v3193
    %v3593 = vpack.c.b16 %v3201, %v3194
    %v3594 = vpack.c.b16 %v3202, %v3195
    %v3595 = vpack.c.b16 %v3210, %v3203
    %v3596 = vpack.c.b16 %v3211, %v3204
    %v3597 = vpack.c.b16 %v3212, %v3205
    %v3598 = vpack.c.b16 %v3213, %v3206
    %v3599 = vpack.c.b16 %v3214, %v3207
    %v3600 = vpack.c.b16 %v3215, %v3208
    %v3601 = vpack.c.b16 %v3216, %v3209
    %v3602 = vpack.c.b16 %v3224, %v3217
    %v3603 = vpack.c.b16 %v3225, %v3218
    %v3604 = vpack.c.b16 %v3226, %v3219
    %v3605 = vpack.c.b16 %v3227, %v3220
    %v3606 = vpack.c.b16 %v3228, %v3221
    %v3607 = vpack.c.b16 %v3229, %v3222
    %v3608 = vpack.c.b16 %v3230, %v3223
    %v3609 = vpack.c.b16 %v3238, %v3231
    %v3610 = vpack.c.b16 %v3239, %v3232
    %v3611 = vpack.c.b16 %v3240, %v3233
    %v3612 = vpack.c.b16 %v3241, %v3234
    %v3613 = vpack.c.b16 %v3242, %v3235
    %v3614 = vpack.c.b16 %v3243, %v3236
    %v3615 = vpack.c.b16 %v3244, %v3237
    %v3616 = vpack.c.b16 %v3252, %v3245
    %v3617 = vpack.c.b16 %v3253, %v3246
    %v3618 = vpack.c.b16 %v3254, %v3247
    %v3619 = vpack.c.b16 %v3255, %v3248
    %v3620 = vpack.c.b16 %v3256, %v3249
    %v3621 = vpack.c.b16 %v3257, %v3250
    %v3622 = vpack.c.b16 %v3258, %v3251
    %vm3987 = vcmask 523264
    %v3989 = vsel %vm3987, %v1661, 0
    %3991 = vmatprep.subr.bf16.mxu0 %v3260
    %3992 = vmatpush1.bf16.msra.mxu0 %v3259
    %3993 = vmatprep.subr.bf16.mxu0 %v3267
    %3994 = vmatpush1.bf16.msra.mxu0 %v3266
    %3995 = vmatprep.subr.bf16.mxu0 %v3274
    %3996 = vmatpush1.bf16.msra.mxu0 %v3273
    %3997 = vmatprep.subr.bf16.mxu0 %v3281
    %3998 = vmatpush1.bf16.msra.mxu0 %v3280
    %3999 = vmatprep.subr.bf16.mxu0 %v3288
    %4000 = vmatpush1.bf16.msra.mxu0 %v3287
    %4001 = vmatprep.subr.bf16.mxu0 %v3295
    %4002 = vmatpush1.bf16.msra.mxu0 %v3294
    %4003 = vmatprep.subr.bf16.mxu0 %v3302
    %4004 = vmatpush1.bf16.msra.mxu0 %v3301
    %4005 = vmatprep.subr.bf16.mxu0 %v3309
    %4006 = vmatpush1.bf16.msra.mxu0 %v3308
    %4007 = vmatprep.subr.bf16.mxu0 %v3316
    %4008 = vmatpush1.bf16.msra.mxu0 %v3315
    %4009 = vmatprep.subr.bf16.mxu0 %v3323
    %4010 = vmatpush1.bf16.msra.mxu0 %v3322
    %4011 = vmatprep.subr.bf16.mxu0 %v3330
    %4012 = vmatpush1.bf16.msra.mxu0 %v3329
    %4013 = vmatprep.subr.bf16.mxu0 %v3337
    %4014 = vmatpush1.bf16.msra.mxu0 %v3336
    %4015 = vmatprep.subr.bf16.mxu0 %v3344
    %4016 = vmatpush1.bf16.msra.mxu0 %v3343
    %4017 = vmatprep.subr.bf16.mxu0 %v3351
    %4018 = vmatpush1.bf16.msra.mxu0 %v3350
    %4019 = vmatprep.subr.bf16.mxu0 %v3358
    %4020 = vmatpush1.bf16.msra.mxu0 %v3357
    %4021 = vmatprep.subr.bf16.mxu0 %v3365
    %4022 = vmatpush1.bf16.msra.mxu0 %v3364
    %4023 = vmatprep.mubr.bf16.mxu0 %v1656
    %4024 = vmatmul.mubr.bf16.gmra.mrb[0].mxu0 %v1655
    %v4025 = vpop.f32.mrb[0].mxu0
    %v4026 = vadd.f32 %v2083, %v4025
    %v4027 = vpop.f32.mrb[0].mxu0
    %v4028 = vadd.f32 %v2087, %v4027
    %v4029 = vpop.f32.mrb[0].mxu0
    %v4030 = vpop.f32.mrb[0].mxu0
    %4031 = vdwg.mxu0
    %4032 = vmatprep.subr.bf16.mxu0 %v3372
    %4033 = vmatpush1.bf16.msra.mxu0 %v3371
    %4034 = vmatprep.subr.bf16.mxu0 %v3379
    %4035 = vmatpush1.bf16.msra.mxu0 %v3378
    %4036 = vmatprep.subr.bf16.mxu0 %v3386
    %4037 = vmatpush1.bf16.msra.mxu0 %v3385
    %4038 = vmatprep.subr.bf16.mxu0 %v3393
    %4039 = vmatpush1.bf16.msra.mxu0 %v3392
    %4040 = vmatprep.subr.bf16.mxu0 %v3400
    %4041 = vmatpush1.bf16.msra.mxu0 %v3399
    %4042 = vmatprep.subr.bf16.mxu0 %v3407
    %4043 = vmatpush1.bf16.msra.mxu0 %v3406
    %4044 = vmatprep.subr.bf16.mxu0 %v3414
    %4045 = vmatpush1.bf16.msra.mxu0 %v3413
    %4046 = vmatprep.subr.bf16.mxu0 %v3421
    %4047 = vmatpush1.bf16.msra.mxu0 %v3420
    %4048 = vmatprep.subr.bf16.mxu0 %v3428
    %4049 = vmatpush1.bf16.msra.mxu0 %v3427
    %4050 = vmatprep.subr.bf16.mxu0 %v3435
    %4051 = vmatpush1.bf16.msra.mxu0 %v3434
    %4052 = vmatprep.subr.bf16.mxu0 %v3442
    %4053 = vmatpush1.bf16.msra.mxu0 %v3441
    %4054 = vmatprep.subr.bf16.mxu0 %v3449
    %4055 = vmatpush1.bf16.msra.mxu0 %v3448
    %4056 = vmatprep.subr.bf16.mxu0 %v3456
    %4057 = vmatpush1.bf16.msra.mxu0 %v3455
    %4058 = vmatprep.subr.bf16.mxu0 %v3463
    %4059 = vmatpush1.bf16.msra.mxu0 %v3462
    %4060 = vmatprep.subr.bf16.mxu0 %v3470
    %4061 = vmatpush1.bf16.msra.mxu0 %v3469
    %4062 = vmatprep.subr.bf16.mxu0 %v3477
    %4063 = vmatpush1.bf16.msra.mxu0 %v3476
    %4064 = vmatprep.mubr.bf16.mxu0 %v1658
    %4065 = vmatmul.mubr.bf16.gmra.mrb[0].mxu0 %v1657
    %v4066 = vpop.f32.mrb[0].mxu0
    %v4067 = vadd.f32 %v4026, %v4066
    %v4068 = vpop.f32.mrb[0].mxu0
    %v4069 = vadd.f32 %v4028, %v4068
    %v4070 = vpop.f32.mrb[0].mxu0
    %v4071 = vpop.f32.mrb[0].mxu0
    %4072 = vdwg.mxu0
    %4073 = vmatprep.subr.bf16.mxu0 %v3484
    %4074 = vmatpush1.bf16.msra.mxu0 %v3483
    %4075 = vmatprep.subr.bf16.mxu0 %v3491
    %4076 = vmatpush1.bf16.msra.mxu0 %v3490
    %4077 = vmatprep.subr.bf16.mxu0 %v3498
    %4078 = vmatpush1.bf16.msra.mxu0 %v3497
    %4079 = vmatprep.subr.bf16.mxu0 %v3505
    %4080 = vmatpush1.bf16.msra.mxu0 %v3504
    %4081 = vmatprep.subr.bf16.mxu0 %v3512
    %4082 = vmatpush1.bf16.msra.mxu0 %v3511
    %4083 = vmatprep.subr.bf16.mxu0 %v3519
    %4084 = vmatpush1.bf16.msra.mxu0 %v3518
    %4085 = vmatprep.subr.bf16.mxu0 %v3526
    %4086 = vmatpush1.bf16.msra.mxu0 %v3525
    %4087 = vmatprep.subr.bf16.mxu0 %v3533
    %4088 = vmatpush1.bf16.msra.mxu0 %v3532
    %4089 = vmatprep.subr.bf16.mxu0 %v3540
    %4090 = vmatpush1.bf16.msra.mxu0 %v3539
    %4091 = vmatprep.subr.bf16.mxu0 %v3547
    %4092 = vmatpush1.bf16.msra.mxu0 %v3546
    %4093 = vmatprep.subr.bf16.mxu0 %v3554
    %4094 = vmatpush1.bf16.msra.mxu0 %v3553
    %4095 = vmatprep.subr.bf16.mxu0 %v3561
    %4096 = vmatpush1.bf16.msra.mxu0 %v3560
    %4097 = vmatprep.subr.bf16.mxu0 %v3568
    %4098 = vmatpush1.bf16.msra.mxu0 %v3567
    %4099 = vmatprep.subr.bf16.mxu0 %v3575
    %4100 = vmatpush1.bf16.msra.mxu0 %v3574
    %4101 = vmatprep.subr.bf16.mxu0 %v3582
    %4102 = vmatpush1.bf16.msra.mxu0 %v3581
    %4103 = vmatprep.subr.bf16.mxu0 %v3589
    %4104 = vmatpush1.bf16.msra.mxu0 %v3588
    %4105 = vmatprep.mubr.bf16.mxu0 %v1660
    %4106 = vmatmul.mubr.bf16.gmra.mrb[0].mxu0 %v1659
    %v4107 = vpop.f32.mrb[0].mxu0
    %v4108 = vadd.f32 %v4067, %v4107
    %v4109 = vpop.f32.mrb[0].mxu0
    %v4110 = vadd.f32 %v4069, %v4109
    %v4111 = vpop.f32.mrb[0].mxu0
    %v4112 = vpop.f32.mrb[0].mxu0
    %4113 = vdwg.mxu0
    %4114 = vmatprep.subr.bf16.mxu0 %v3596
    %4115 = vmatpush1.bf16.msra.mxu0 %v3595
    %4116 = vmatprep.subr.bf16.mxu0 %v3603
    %4117 = vmatpush1.bf16.msra.mxu0 %v3602
    %4118 = vmatprep.subr.bf16.mxu0 %v3610
    %4119 = vmatpush1.bf16.msra.mxu0 %v3609
    %4120 = vmatprep.subr.bf16.mxu0 %v3617
    %4121 = vmatpush1.bf16.msra.mxu0 %v3616
    %4122 = vmatprep.subr.bf16.mxu0 0
    %4123 = vmatpush1.bf16.msra.mxu0 0
    %4124 = vmatprep.subr.bf16.mxu0 0
    %4125 = vmatpush1.bf16.msra.mxu0 0
    %4126 = vmatprep.subr.bf16.mxu0 0
    %4127 = vmatpush1.bf16.msra.mxu0 0
    %4128 = vmatprep.subr.bf16.mxu0 0
    %4129 = vmatpush1.bf16.msra.mxu0 0
    %4130 = vmatprep.subr.bf16.mxu0 0
    %4131 = vmatpush1.bf16.msra.mxu0 0
    %4132 = vmatprep.subr.bf16.mxu0 0
    %4133 = vmatpush1.bf16.msra.mxu0 0
    %4134 = vmatprep.subr.bf16.mxu0 0
    %4135 = vmatpush1.bf16.msra.mxu0 0
    %4136 = vmatprep.subr.bf16.mxu0 0
    %4137 = vmatpush1.bf16.msra.mxu0 0
    %4138 = vmatprep.subr.bf16.mxu0 0
    %4139 = vmatpush1.bf16.msra.mxu0 0
    %4140 = vmatprep.subr.bf16.mxu0 0
    %4141 = vmatpush1.bf16.msra.mxu0 0
    %4142 = vmatprep.subr.bf16.mxu0 0
    %4143 = vmatpush1.bf16.msra.mxu0 0
    %4144 = vmatprep.subr.bf16.mxu0 0
    %4145 = vmatpush1.bf16.msra.mxu0 0
    %4146 = vmatprep.mubr.bf16.mxu0 0
    %4147 = vmatmul.mubr.bf16.gmra.mrb[0].mxu0 %v3989
    %v4148 = vpop.f32.mrb[0].mxu0
    %v4149 = vadd.f32 %v4108, %v4148
    %v4150 = vpop.f32.mrb[0].mxu0
    %v4151 = vadd.f32 %v4110, %v4150
    %v4152 = vpop.f32.mrb[0].mxu0
    %v4153 = vpop.f32.mrb[0].mxu0
    %4154 = vdwg.mxu0
    %4155 = vmatprep.subr.bf16.mxu0 %v3262
    %4156 = vmatpush1.bf16.msra.mxu0 %v3261
    %4157 = vmatprep.subr.bf16.mxu0 %v3269
    %4158 = vmatpush1.bf16.msra.mxu0 %v3268
    %4159 = vmatprep.subr.bf16.mxu0 %v3276
    %4160 = vmatpush1.bf16.msra.mxu0 %v3275
    %4161 = vmatprep.subr.bf16.mxu0 %v3283
    %4162 = vmatpush1.bf16.msra.mxu0 %v3282
    %4163 = vmatprep.subr.bf16.mxu0 %v3290
    %4164 = vmatpush1.bf16.msra.mxu0 %v3289
    %4165 = vmatprep.subr.bf16.mxu0 %v3297
    %4166 = vmatpush1.bf16.msra.mxu0 %v3296
    %4167 = vmatprep.subr.bf16.mxu0 %v3304
    %4168 = vmatpush1.bf16.msra.mxu0 %v3303
    %4169 = vmatprep.subr.bf16.mxu0 %v3311
    %4170 = vmatpush1.bf16.msra.mxu0 %v3310
    %4171 = vmatprep.subr.bf16.mxu0 %v3318
    %4172 = vmatpush1.bf16.msra.mxu0 %v3317
    %4173 = vmatprep.subr.bf16.mxu0 %v3325
    %4174 = vmatpush1.bf16.msra.mxu0 %v3324
    %4175 = vmatprep.subr.bf16.mxu0 %v3332
    %4176 = vmatpush1.bf16.msra.mxu0 %v3331
    %4177 = vmatprep.subr.bf16.mxu0 %v3339
    %4178 = vmatpush1.bf16.msra.mxu0 %v3338
    %4179 = vmatprep.subr.bf16.mxu0 %v3346
    %4180 = vmatpush1.bf16.msra.mxu0 %v3345
    %4181 = vmatprep.subr.bf16.mxu0 %v3353
    %4182 = vmatpush1.bf16.msra.mxu0 %v3352
    %4183 = vmatprep.subr.bf16.mxu0 %v3360
    %4184 = vmatpush1.bf16.msra.mxu0 %v3359
    %4185 = vmatprep.subr.bf16.mxu0 %v3367
    %4186 = vmatpush1.bf16.msra.mxu0 %v3366
    %4187 = vmatprep.mubr.bf16.mxu0 %v1656
    %4188 = vmatmul.mubr.bf16.gmra.mrb[0].mxu0 %v1655
    %v4189 = vpop.f32.mrb[0].mxu0
    %v4190 = vadd.f32 %v2091, %v4189
    %v4191 = vpop.f32.mrb[0].mxu0
    %v4192 = vadd.f32 %v2095, %v4191
    %v4193 = vpop.f32.mrb[0].mxu0
    %v4194 = vpop.f32.mrb[0].mxu0
    %4195 = vdwg.mxu0
    %4196 = vmatprep.subr.bf16.mxu0 %v3374
    %4197 = vmatpush1.bf16.msra.mxu0 %v3373
    %4198 = vmatprep.subr.bf16.mxu0 %v3381
    %4199 = vmatpush1.bf16.msra.mxu0 %v3380
    %4200 = vmatprep.subr.bf16.mxu0 %v3388
    %4201 = vmatpush1.bf16.msra.mxu0 %v3387
    %4202 = vmatprep.subr.bf16.mxu0 %v3395
    %4203 = vmatpush1.bf16.msra.mxu0 %v3394
    %4204 = vmatprep.subr.bf16.mxu0 %v3402
    %4205 = vmatpush1.bf16.msra.mxu0 %v3401
    %4206 = vmatprep.subr.bf16.mxu0 %v3409
    %4207 = vmatpush1.bf16.msra.mxu0 %v3408
    %4208 = vmatprep.subr.bf16.mxu0 %v3416
    %4209 = vmatpush1.bf16.msra.mxu0 %v3415
    %4210 = vmatprep.subr.bf16.mxu0 %v3423
    %4211 = vmatpush1.bf16.msra.mxu0 %v3422
    %4212 = vmatprep.subr.bf16.mxu0 %v3430
    %4213 = vmatpush1.bf16.msra.mxu0 %v3429
    %4214 = vmatprep.subr.bf16.mxu0 %v3437
    %4215 = vmatpush1.bf16.msra.mxu0 %v3436
    %4216 = vmatprep.subr.bf16.mxu0 %v3444
    %4217 = vmatpush1.bf16.msra.mxu0 %v3443
    %4218 = vmatprep.subr.bf16.mxu0 %v3451
    %4219 = vmatpush1.bf16.msra.mxu0 %v3450
    %4220 = vmatprep.subr.bf16.mxu0 %v3458
    %4221 = vmatpush1.bf16.msra.mxu0 %v3457
    %4222 = vmatprep.subr.bf16.mxu0 %v3465
    %4223 = vmatpush1.bf16.msra.mxu0 %v3464
    %4224 = vmatprep.subr.bf16.mxu0 %v3472
    %4225 = vmatpush1.bf16.msra.mxu0 %v3471
    %4226 = vmatprep.subr.bf16.mxu0 %v3479
    %4227 = vmatpush1.bf16.msra.mxu0 %v3478
    %4228 = vmatprep.mubr.bf16.mxu0 %v1658
    %4229 = vmatmul.mubr.bf16.gmra.mrb[0].mxu0 %v1657
    %v4230 = vpop.f32.mrb[0].mxu0
    %v4231 = vadd.f32 %v4190, %v4230
    %v4232 = vpop.f32.mrb[0].mxu0
    %v4233 = vadd.f32 %v4192, %v4232
    %v4234 = vpop.f32.mrb[0].mxu0
    %v4235 = vpop.f32.mrb[0].mxu0
    %4236 = vdwg.mxu0
    %4237 = vmatprep.subr.bf16.mxu0 %v3486
    %4238 = vmatpush1.bf16.msra.mxu0 %v3485
    %4239 = vmatprep.subr.bf16.mxu0 %v3493
    %4240 = vmatpush1.bf16.msra.mxu0 %v3492
    %4241 = vmatprep.subr.bf16.mxu0 %v3500
    %4242 = vmatpush1.bf16.msra.mxu0 %v3499
    %4243 = vmatprep.subr.bf16.mxu0 %v3507
    %4244 = vmatpush1.bf16.msra.mxu0 %v3506
    %4245 = vmatprep.subr.bf16.mxu0 %v3514
    %4246 = vmatpush1.bf16.msra.mxu0 %v3513
    %4247 = vmatprep.subr.bf16.mxu0 %v3521
    %4248 = vmatpush1.bf16.msra.mxu0 %v3520
    %4249 = vmatprep.subr.bf16.mxu0 %v3528
    %4250 = vmatpush1.bf16.msra.mxu0 %v3527
    %4251 = vmatprep.subr.bf16.mxu0 %v3535
    %4252 = vmatpush1.bf16.msra.mxu0 %v3534
    %4253 = vmatprep.subr.bf16.mxu0 %v3542
    %4254 = vmatpush1.bf16.msra.mxu0 %v3541
    %4255 = vmatprep.subr.bf16.mxu0 %v3549
    %4256 = vmatpush1.bf16.msra.mxu0 %v3548
    %4257 = vmatprep.subr.bf16.mxu0 %v3556
    %4258 = vmatpush1.bf16.msra.mxu0 %v3555
    %4259 = vmatprep.subr.bf16.mxu0 %v3563
    %4260 = vmatpush1.bf16.msra.mxu0 %v3562
    %4261 = vmatprep.subr.bf16.mxu0 %v3570
    %4262 = vmatpush1.bf16.msra.mxu0 %v3569
    %4263 = vmatprep.subr.bf16.mxu0 %v3577
    %4264 = vmatpush1.bf16.msra.mxu0 %v3576
    %4265 = vmatprep.subr.bf16.mxu0 %v3584
    %4266 = vmatpush1.bf16.msra.mxu0 %v3583
    %4267 = vmatprep.subr.bf16.mxu0 %v3591
    %4268 = vmatpush1.bf16.msra.mxu0 %v3590
    %4269 = vmatprep.mubr.bf16.mxu0 %v1660
    %4270 = vmatmul.mubr.bf16.gmra.mrb[0].mxu0 %v1659
    %v4271 = vpop.f32.mrb[0].mxu0
    %v4272 = vadd.f32 %v4231, %v4271
    %v4273 = vpop.f32.mrb[0].mxu0
    %v4274 = vadd.f32 %v4233, %v4273
    %v4275 = vpop.f32.mrb[0].mxu0
    %v4276 = vpop.f32.mrb[0].mxu0
    %4277 = vdwg.mxu0
    %4278 = vmatprep.subr.bf16.mxu0 %v3598
    %4279 = vmatpush1.bf16.msra.mxu0 %v3597
    %4280 = vmatprep.subr.bf16.mxu0 %v3605
    %4281 = vmatpush1.bf16.msra.mxu0 %v3604
    %4282 = vmatprep.subr.bf16.mxu0 %v3612
    %4283 = vmatpush1.bf16.msra.mxu0 %v3611
    %4284 = vmatprep.subr.bf16.mxu0 %v3619
    %4285 = vmatpush1.bf16.msra.mxu0 %v3618
    %4286 = vmatprep.subr.bf16.mxu0 0
    %4287 = vmatpush1.bf16.msra.mxu0 0
    %4288 = vmatprep.subr.bf16.mxu0 0
    %4289 = vmatpush1.bf16.msra.mxu0 0
    %4290 = vmatprep.subr.bf16.mxu0 0
    %4291 = vmatpush1.bf16.msra.mxu0 0
    %4292 = vmatprep.subr.bf16.mxu0 0
    %4293 = vmatpush1.bf16.msra.mxu0 0
    %4294 = vmatprep.subr.bf16.mxu0 0
    %4295 = vmatpush1.bf16.msra.mxu0 0
    %4296 = vmatprep.subr.bf16.mxu0 0
    %4297 = vmatpush1.bf16.msra.mxu0 0
    %4298 = vmatprep.subr.bf16.mxu0 0
    %4299 = vmatpush1.bf16.msra.mxu0 0
    %4300 = vmatprep.subr.bf16.mxu0 0
    %4301 = vmatpush1.bf16.msra.mxu0 0
    %4302 = vmatprep.subr.bf16.mxu0 0
    %4303 = vmatpush1.bf16.msra.mxu0 0
    %4304 = vmatprep.subr.bf16.mxu0 0
    %4305 = vmatpush1.bf16.msra.mxu0 0
    %4306 = vmatprep.subr.bf16.mxu0 0
    %4307 = vmatpush1.bf16.msra.mxu0 0
    %4308 = vmatprep.subr.bf16.mxu0 0
    %4309 = vmatpush1.bf16.msra.mxu0 0
    %4310 = vmatprep.mubr.bf16.mxu0 0
    %4311 = vmatmul.mubr.bf16.gmra.mrb[0].mxu0 %v3989
    %v4312 = vpop.f32.mrb[0].mxu0
    %v4313 = vadd.f32 %v4272, %v4312
    %v4314 = vpop.f32.mrb[0].mxu0
    %v4315 = vadd.f32 %v4274, %v4314
    %v4316 = vpop.f32.mrb[0].mxu0
    %v4317 = vpop.f32.mrb[0].mxu0
    %4318 = vdwg.mxu0
    %4319 = vmatprep.subr.bf16.mxu0 %v3264
    %4320 = vmatpush1.bf16.msra.mxu0 %v3263
    %4321 = vmatprep.subr.bf16.mxu0 %v3271
    %4322 = vmatpush1.bf16.msra.mxu0 %v3270
    %4323 = vmatprep.subr.bf16.mxu0 %v3278
    %4324 = vmatpush1.bf16.msra.mxu0 %v3277
    %4325 = vmatprep.subr.bf16.mxu0 %v3285
    %4326 = vmatpush1.bf16.msra.mxu0 %v3284
    %4327 = vmatprep.subr.bf16.mxu0 %v3292
    %4328 = vmatpush1.bf16.msra.mxu0 %v3291
    %4329 = vmatprep.subr.bf16.mxu0 %v3299
    %4330 = vmatpush1.bf16.msra.mxu0 %v3298
    %4331 = vmatprep.subr.bf16.mxu0 %v3306
    %4332 = vmatpush1.bf16.msra.mxu0 %v3305
    %4333 = vmatprep.subr.bf16.mxu0 %v3313
    %4334 = vmatpush1.bf16.msra.mxu0 %v3312
    %4335 = vmatprep.subr.bf16.mxu0 %v3320
    %4336 = vmatpush1.bf16.msra.mxu0 %v3319
    %4337 = vmatprep.subr.bf16.mxu0 %v3327
    %4338 = vmatpush1.bf16.msra.mxu0 %v3326
    %4339 = vmatprep.subr.bf16.mxu0 %v3334
    %4340 = vmatpush1.bf16.msra.mxu0 %v3333
    %4341 = vmatprep.subr.bf16.mxu0 %v3341
    %4342 = vmatpush1.bf16.msra.mxu0 %v3340
    %4343 = vmatprep.subr.bf16.mxu0 %v3348
    %4344 = vmatpush1.bf16.msra.mxu0 %v3347
    %4345 = vmatprep.subr.bf16.mxu0 %v3355
    %4346 = vmatpush1.bf16.msra.mxu0 %v3354
    %4347 = vmatprep.subr.bf16.mxu0 %v3362
    %4348 = vmatpush1.bf16.msra.mxu0 %v3361
    %4349 = vmatprep.subr.bf16.mxu0 %v3369
    %4350 = vmatpush1.bf16.msra.mxu0 %v3368
    %4351 = vmatprep.mubr.bf16.mxu0 %v1656
    %4352 = vmatmul.mubr.bf16.gmra.mrb[0].mxu0 %v1655
    %v4353 = vpop.f32.mrb[0].mxu0
    %v4354 = vadd.f32 %v2099, %v4353
    %v4355 = vpop.f32.mrb[0].mxu0
    %v4356 = vadd.f32 %v2103, %v4355
    %v4357 = vpop.f32.mrb[0].mxu0
    %v4358 = vpop.f32.mrb[0].mxu0
    %4359 = vdwg.mxu0
    %4360 = vmatprep.subr.bf16.mxu0 %v3376
    %4361 = vmatpush1.bf16.msra.mxu0 %v3375
    %4362 = vmatprep.subr.bf16.mxu0 %v3383
    %4363 = vmatpush1.bf16.msra.mxu0 %v3382
    %4364 = vmatprep.subr.bf16.mxu0 %v3390
    %4365 = vmatpush1.bf16.msra.mxu0 %v3389
    %4366 = vmatprep.subr.bf16.mxu0 %v3397
    %4367 = vmatpush1.bf16.msra.mxu0 %v3396
    %4368 = vmatprep.subr.bf16.mxu0 %v3404
    %4369 = vmatpush1.bf16.msra.mxu0 %v3403
    %4370 = vmatprep.subr.bf16.mxu0 %v3411
    %4371 = vmatpush1.bf16.msra.mxu0 %v3410
    %4372 = vmatprep.subr.bf16.mxu0 %v3418
    %4373 = vmatpush1.bf16.msra.mxu0 %v3417
    %4374 = vmatprep.subr.bf16.mxu0 %v3425
    %4375 = vmatpush1.bf16.msra.mxu0 %v3424
    %4376 = vmatprep.subr.bf16.mxu0 %v3432
    %4377 = vmatpush1.bf16.msra.mxu0 %v3431
    %4378 = vmatprep.subr.bf16.mxu0 %v3439
    %4379 = vmatpush1.bf16.msra.mxu0 %v3438
    %4380 = vmatprep.subr.bf16.mxu0 %v3446
    %4381 = vmatpush1.bf16.msra.mxu0 %v3445
    %4382 = vmatprep.subr.bf16.mxu0 %v3453
    %4383 = vmatpush1.bf16.msra.mxu0 %v3452
    %4384 = vmatprep.subr.bf16.mxu0 %v3460
    %4385 = vmatpush1.bf16.msra.mxu0 %v3459
    %4386 = vmatprep.subr.bf16.mxu0 %v3467
    %4387 = vmatpush1.bf16.msra.mxu0 %v3466
    %4388 = vmatprep.subr.bf16.mxu0 %v3474
    %4389 = vmatpush1.bf16.msra.mxu0 %v3473
    %4390 = vmatprep.subr.bf16.mxu0 %v3481
    %4391 = vmatpush1.bf16.msra.mxu0 %v3480
    %4392 = vmatprep.mubr.bf16.mxu0 %v1658
    %4393 = vmatmul.mubr.bf16.gmra.mrb[0].mxu0 %v1657
    %v4394 = vpop.f32.mrb[0].mxu0
    %v4395 = vadd.f32 %v4354, %v4394
    %v4396 = vpop.f32.mrb[0].mxu0
    %v4397 = vadd.f32 %v4356, %v4396
    %v4398 = vpop.f32.mrb[0].mxu0
    %v4399 = vpop.f32.mrb[0].mxu0
    %4400 = vdwg.mxu0
    %4401 = vmatprep.subr.bf16.mxu0 %v3488
    %4402 = vmatpush1.bf16.msra.mxu0 %v3487
    %4403 = vmatprep.subr.bf16.mxu0 %v3495
    %4404 = vmatpush1.bf16.msra.mxu0 %v3494
    %4405 = vmatprep.subr.bf16.mxu0 %v3502
    %4406 = vmatpush1.bf16.msra.mxu0 %v3501
    %4407 = vmatprep.subr.bf16.mxu0 %v3509
    %4408 = vmatpush1.bf16.msra.mxu0 %v3508
    %4409 = vmatprep.subr.bf16.mxu0 %v3516
    %4410 = vmatpush1.bf16.msra.mxu0 %v3515
    %4411 = vmatprep.subr.bf16.mxu0 %v3523
    %4412 = vmatpush1.bf16.msra.mxu0 %v3522
    %4413 = vmatprep.subr.bf16.mxu0 %v3530
    %4414 = vmatpush1.bf16.msra.mxu0 %v3529
    %4415 = vmatprep.subr.bf16.mxu0 %v3537
    %4416 = vmatpush1.bf16.msra.mxu0 %v3536
    %4417 = vmatprep.subr.bf16.mxu0 %v3544
    %4418 = vmatpush1.bf16.msra.mxu0 %v3543
    %4419 = vmatprep.subr.bf16.mxu0 %v3551
    %4420 = vmatpush1.bf16.msra.mxu0 %v3550
    %4421 = vmatprep.subr.bf16.mxu0 %v3558
    %4422 = vmatpush1.bf16.msra.mxu0 %v3557
    %4423 = vmatprep.subr.bf16.mxu0 %v3565
    %4424 = vmatpush1.bf16.msra.mxu0 %v3564
    %4425 = vmatprep.subr.bf16.mxu0 %v3572
    %4426 = vmatpush1.bf16.msra.mxu0 %v3571
    %4427 = vmatprep.subr.bf16.mxu0 %v3579
    %4428 = vmatpush1.bf16.msra.mxu0 %v3578
    %4429 = vmatprep.subr.bf16.mxu0 %v3586
    %4430 = vmatpush1.bf16.msra.mxu0 %v3585
    %4431 = vmatprep.subr.bf16.mxu0 %v3593
    %4432 = vmatpush1.bf16.msra.mxu0 %v3592
    %4433 = vmatprep.mubr.bf16.mxu0 %v1660
    %4434 = vmatmul.mubr.bf16.gmra.mrb[0].mxu0 %v1659
    %v4435 = vpop.f32.mrb[0].mxu0
    %v4436 = vadd.f32 %v4395, %v4435
    %v4437 = vpop.f32.mrb[0].mxu0
    %v4438 = vadd.f32 %v4397, %v4437
    %v4439 = vpop.f32.mrb[0].mxu0
    %v4440 = vpop.f32.mrb[0].mxu0
    %4441 = vdwg.mxu0
    %4442 = vmatprep.subr.bf16.mxu0 %v3600
    %4443 = vmatpush1.bf16.msra.mxu0 %v3599
    %4444 = vmatprep.subr.bf16.mxu0 %v3607
    %4445 = vmatpush1.bf16.msra.mxu0 %v3606
    %4446 = vmatprep.subr.bf16.mxu0 %v3614
    %4447 = vmatpush1.bf16.msra.mxu0 %v3613
    %4448 = vmatprep.subr.bf16.mxu0 %v3621
    %4449 = vmatpush1.bf16.msra.mxu0 %v3620
    %4450 = vmatprep.subr.bf16.mxu0 0
    %4451 = vmatpush1.bf16.msra.mxu0 0
    %4452 = vmatprep.subr.bf16.mxu0 0
    %4453 = vmatpush1.bf16.msra.mxu0 0
    %4454 = vmatprep.subr.bf16.mxu0 0
    %4455 = vmatpush1.bf16.msra.mxu0 0
    %4456 = vmatprep.subr.bf16.mxu0 0
    %4457 = vmatpush1.bf16.msra.mxu0 0
    %4458 = vmatprep.subr.bf16.mxu0 0
    %4459 = vmatpush1.bf16.msra.mxu0 0
    %4460 = vmatprep.subr.bf16.mxu0 0
    %4461 = vmatpush1.bf16.msra.mxu0 0
    %4462 = vmatprep.subr.bf16.mxu0 0
    %4463 = vmatpush1.bf16.msra.mxu0 0
    %4464 = vmatprep.subr.bf16.mxu0 0
    %4465 = vmatpush1.bf16.msra.mxu0 0
    %4466 = vmatprep.subr.bf16.mxu0 0
    %4467 = vmatpush1.bf16.msra.mxu0 0
    %4468 = vmatprep.subr.bf16.mxu0 0
    %4469 = vmatpush1.bf16.msra.mxu0 0
    %4470 = vmatprep.subr.bf16.mxu0 0
    %4471 = vmatpush1.bf16.msra.mxu0 0
    %4472 = vmatprep.subr.bf16.mxu0 0
    %4473 = vmatpush1.bf16.msra.mxu0 0
    %4474 = vmatprep.mubr.bf16.mxu0 0
    %4475 = vmatmul.mubr.bf16.gmra.mrb[0].mxu0 %v3989
    %v4476 = vpop.f32.mrb[0].mxu0
    %v4477 = vadd.f32 %v4436, %v4476
    %v4478 = vpop.f32.mrb[0].mxu0
    %v4479 = vadd.f32 %v4438, %v4478
    %v4480 = vpop.f32.mrb[0].mxu0
    %v4481 = vpop.f32.mrb[0].mxu0
    %4482 = vdwg.mxu0
    %4483 = vmatprep.subr.bf16.mxu0 0
    %4484 = vmatpush1.bf16.msra.mxu0 %v3265
    %4485 = vmatprep.subr.bf16.mxu0 0
    %4486 = vmatpush1.bf16.msra.mxu0 %v3272
    %4487 = vmatprep.subr.bf16.mxu0 0
    %4488 = vmatpush1.bf16.msra.mxu0 %v3279
    %4489 = vmatprep.subr.bf16.mxu0 0
    %4490 = vmatpush1.bf16.msra.mxu0 %v3286
    %4491 = vmatprep.subr.bf16.mxu0 0
    %4492 = vmatpush1.bf16.msra.mxu0 %v3293
    %4493 = vmatprep.subr.bf16.mxu0 0
    %4494 = vmatpush1.bf16.msra.mxu0 %v3300
    %4495 = vmatprep.subr.bf16.mxu0 0
    %4496 = vmatpush1.bf16.msra.mxu0 %v3307
    %4497 = vmatprep.subr.bf16.mxu0 0
    %4498 = vmatpush1.bf16.msra.mxu0 %v3314
    %4499 = vmatprep.subr.bf16.mxu0 0
    %4500 = vmatpush1.bf16.msra.mxu0 %v3321
    %4501 = vmatprep.subr.bf16.mxu0 0
    %4502 = vmatpush1.bf16.msra.mxu0 %v3328
    %4503 = vmatprep.subr.bf16.mxu0 0
    %4504 = vmatpush1.bf16.msra.mxu0 %v3335
    %4505 = vmatprep.subr.bf16.mxu0 0
    %4506 = vmatpush1.bf16.msra.mxu0 %v3342
    %4507 = vmatprep.subr.bf16.mxu0 0
    %4508 = vmatpush1.bf16.msra.mxu0 %v3349
    %4509 = vmatprep.subr.bf16.mxu0 0
    %4510 = vmatpush1.bf16.msra.mxu0 %v3356
    %4511 = vmatprep.subr.bf16.mxu0 0
    %4512 = vmatpush1.bf16.msra.mxu0 %v3363
    %4513 = vmatprep.subr.bf16.mxu0 0
    %4514 = vmatpush1.bf16.msra.mxu0 %v3370
    %4515 = vmatprep.mubr.bf16.mxu0 %v1656
    %4516 = vmatmul.mubr.bf16.gmra.mrb[0].mxu0 %v1655
    %v4517 = vpop.f32.mrb[0].mxu0
    %v4518 = vadd.f32 %v2107, %v4517
    %v4519 = vpop.f32.mrb[0].mxu0
    %v4520 = vpop.f32.mrb[0].mxu0
    %v4521 = vpop.f32.mrb[0].mxu0
    %4522 = vdwg.mxu0
    %4523 = vmatprep.subr.bf16.mxu0 0
    %4524 = vmatpush1.bf16.msra.mxu0 %v3377
    %4525 = vmatprep.subr.bf16.mxu0 0
    %4526 = vmatpush1.bf16.msra.mxu0 %v3384
    %4527 = vmatprep.subr.bf16.mxu0 0
    %4528 = vmatpush1.bf16.msra.mxu0 %v3391
    %4529 = vmatprep.subr.bf16.mxu0 0
    %4530 = vmatpush1.bf16.msra.mxu0 %v3398
    %4531 = vmatprep.subr.bf16.mxu0 0
    %4532 = vmatpush1.bf16.msra.mxu0 %v3405
    %4533 = vmatprep.subr.bf16.mxu0 0
    %4534 = vmatpush1.bf16.msra.mxu0 %v3412
    %4535 = vmatprep.subr.bf16.mxu0 0
    %4536 = vmatpush1.bf16.msra.mxu0 %v3419
    %4537 = vmatprep.subr.bf16.mxu0 0
    %4538 = vmatpush1.bf16.msra.mxu0 %v3426
    %4539 = vmatprep.subr.bf16.mxu0 0
    %4540 = vmatpush1.bf16.msra.mxu0 %v3433
    %4541 = vmatprep.subr.bf16.mxu0 0
    %4542 = vmatpush1.bf16.msra.mxu0 %v3440
    %4543 = vmatprep.subr.bf16.mxu0 0
    %4544 = vmatpush1.bf16.msra.mxu0 %v3447
    %4545 = vmatprep.subr.bf16.mxu0 0
    %4546 = vmatpush1.bf16.msra.mxu0 %v3454
    %4547 = vmatprep.subr.bf16.mxu0 0
    %4548 = vmatpush1.bf16.msra.mxu0 %v3461
    %4549 = vmatprep.subr.bf16.mxu0 0
    %4550 = vmatpush1.bf16.msra.mxu0 %v3468
    %4551 = vmatprep.subr.bf16.mxu0 0
    %4552 = vmatpush1.bf16.msra.mxu0 %v3475
    %4553 = vmatprep.subr.bf16.mxu0 0
    %4554 = vmatpush1.bf16.msra.mxu0 %v3482
    %4555 = vmatprep.mubr.bf16.mxu0 %v1658
    %4556 = vmatmul.mubr.bf16.gmra.mrb[0].mxu0 %v1657
    %v4557 = vpop.f32.mrb[0].mxu0
    %v4558 = vadd.f32 %v4518, %v4557
    %v4559 = vpop.f32.mrb[0].mxu0
    %v4560 = vpop.f32.mrb[0].mxu0
    %v4561 = vpop.f32.mrb[0].mxu0
    %4562 = vdwg.mxu0
    %4563 = vmatprep.subr.bf16.mxu0 0
    %4564 = vmatpush1.bf16.msra.mxu0 %v3489
    %4565 = vmatprep.subr.bf16.mxu0 0
    %4566 = vmatpush1.bf16.msra.mxu0 %v3496
    %4567 = vmatprep.subr.bf16.mxu0 0
    %4568 = vmatpush1.bf16.msra.mxu0 %v3503
    %4569 = vmatprep.subr.bf16.mxu0 0
    %4570 = vmatpush1.bf16.msra.mxu0 %v3510
    %4571 = vmatprep.subr.bf16.mxu0 0
    %4572 = vmatpush1.bf16.msra.mxu0 %v3517
    %4573 = vmatprep.subr.bf16.mxu0 0
    %4574 = vmatpush1.bf16.msra.mxu0 %v3524
    %4575 = vmatprep.subr.bf16.mxu0 0
    %4576 = vmatpush1.bf16.msra.mxu0 %v3531
    %4577 = vmatprep.subr.bf16.mxu0 0
    %4578 = vmatpush1.bf16.msra.mxu0 %v3538
    %4579 = vmatprep.subr.bf16.mxu0 0
    %4580 = vmatpush1.bf16.msra.mxu0 %v3545
    %4581 = vmatprep.subr.bf16.mxu0 0
    %4582 = vmatpush1.bf16.msra.mxu0 %v3552
    %4583 = vmatprep.subr.bf16.mxu0 0
    %4584 = vmatpush1.bf16.msra.mxu0 %v3559
    %4585 = vmatprep.subr.bf16.mxu0 0
    %4586 = vmatpush1.bf16.msra.mxu0 %v3566
    %4587 = vmatprep.subr.bf16.mxu0 0
    %4588 = vmatpush1.bf16.msra.mxu0 %v3573
    %4589 = vmatprep.subr.bf16.mxu0 0
    %4590 = vmatpush1.bf16.msra.mxu0 %v3580
    %4591 = vmatprep.subr.bf16.mxu0 0
    %4592 = vmatpush1.bf16.msra.mxu0 %v3587
    %4593 = vmatprep.subr.bf16.mxu0 0
    %4594 = vmatpush1.bf16.msra.mxu0 %v3594
    %4595 = vmatprep.mubr.bf16.mxu0 %v1660
    %4596 = vmatmul.mubr.bf16.gmra.mrb[0].mxu0 %v1659
    %v4597 = vpop.f32.mrb[0].mxu0
    %v4598 = vadd.f32 %v4558, %v4597
    %v4599 = vpop.f32.mrb[0].mxu0
    %v4600 = vpop.f32.mrb[0].mxu0
    %v4601 = vpop.f32.mrb[0].mxu0
    %4602 = vdwg.mxu0
    %4603 = vmatprep.subr.bf16.mxu0 0
    %4604 = vmatpush1.bf16.msra.mxu0 %v3601
    %4605 = vmatprep.subr.bf16.mxu0 0
    %4606 = vmatpush1.bf16.msra.mxu0 %v3608
    %4607 = vmatprep.subr.bf16.mxu0 0
    %4608 = vmatpush1.bf16.msra.mxu0 %v3615
    %4609 = vmatprep.subr.bf16.mxu0 0
    %4610 = vmatpush1.bf16.msra.mxu0 %v3622
    %4611 = vmatprep.subr.bf16.mxu0 0
    %4612 = vmatpush1.bf16.msra.mxu0 0
    %4613 = vmatprep.subr.bf16.mxu0 0
    %4614 = vmatpush1.bf16.msra.mxu0 0
    %4615 = vmatprep.subr.bf16.mxu0 0
    %4616 = vmatpush1.bf16.msra.mxu0 0
    %4617 = vmatprep.subr.bf16.mxu0 0
    %4618 = vmatpush1.bf16.msra.mxu0 0
    %4619 = vmatprep.subr.bf16.mxu0 0
    %4620 = vmatpush1.bf16.msra.mxu0 0
    %4621 = vmatprep.subr.bf16.mxu0 0
    %4622 = vmatpush1.bf16.msra.mxu0 0
    %4623 = vmatprep.subr.bf16.mxu0 0
    %4624 = vmatpush1.bf16.msra.mxu0 0
    %4625 = vmatprep.subr.bf16.mxu0 0
    %4626 = vmatpush1.bf16.msra.mxu0 0
    %4627 = vmatprep.subr.bf16.mxu0 0
    %4628 = vmatpush1.bf16.msra.mxu0 0
    %4629 = vmatprep.subr.bf16.mxu0 0
    %4630 = vmatpush1.bf16.msra.mxu0 0
    %4631 = vmatprep.subr.bf16.mxu0 0
    %4632 = vmatpush1.bf16.msra.mxu0 0
    %4633 = vmatprep.subr.bf16.mxu0 0
    %4634 = vmatpush1.bf16.msra.mxu0 0
    %4635 = vmatprep.mubr.bf16.mxu0 0
    %4636 = vmatmul.mubr.bf16.gmra.mrb[0].mxu0 %v3989
    %v4637 = vpop.f32.mrb[0].mxu0
    %v4638 = vadd.f32 %v4598, %v4637
    %v4639 = vpop.f32.mrb[0].mxu0
    %v4640 = vpop.f32.mrb[0].mxu0
    %v4641 = vpop.f32.mrb[0].mxu0
    %4642 = vdwg.mxu0
    %vm4643 = vcmp.gt.f32.partialorder %v4149, 0.0
    %vm4644 = vcmp.gt.f32.partialorder %v4151, 0.0
    %vm4645 = vcmp.gt.f32.partialorder %v4313, 0.0
    %vm4646 = vcmp.gt.f32.partialorder %v4315, 0.0
    %vm4647 = vcmp.gt.f32.partialorder %v4477, 0.0
    %vm4648 = vcmp.gt.f32.partialorder %v4479, 0.0
    %vm4649 = vcmp.gt.f32.partialorder %v4638, 0.0
    %v4650 = vmul.f32 %v4149, 0.01
    %v4651 = vmul.f32 %v4151, 0.01
    %v4652 = vmul.f32 %v4313, 0.01
    %v4653 = vmul.f32 %v4315, 0.01
    %v4654 = vmul.f32 %v4477, 0.01
    %v4655 = vmul.f32 %v4479, 0.01
    %v4656 = vmul.f32 %v4638, 0.01
    %v4657 = vsel %vm4643, %v4149, %v4650
    %v4658 = vsel %vm4644, %v4151, %v4651
    %v4659 = vsel %vm4645, %v4313, %v4652
    %v4660 = vsel %vm4646, %v4315, %v4653
    %v4661 = vsel %vm4647, %v4477, %v4654
    %v4662 = vsel %vm4648, %v4479, %v4655
    %v4663 = vsel %vm4649, %v4638, %v4656
    %v4664 = vpack.c.bf16 %v4657, %v4657
    %v4665 = vpack.c.bf16 %v4658, %v4658
    %v4666 = vpack.c.bf16 %v4659, %v4659
    %v4667 = vpack.c.bf16 %v4660, %v4660
    %v4668 = vpack.c.bf16 %v4661, %v4661
    %v4669 = vpack.c.bf16 %v4662, %v4662
    %v4670 = vpack.c.bf16 %v4663, %v4663
    %v4671 = vld [vmem:[#allocation11] sm:$0xff]
    %v4672 = vld [vmem:[#allocation11 + $0x8] sm:$0xff]
    %v4673 = vld [vmem:[#allocation11 + $0x10] sm:$0xff]
    %v4674 = vld [vmem:[#allocation11 + $0x18] sm:$0xff]
    %v4675 = vld [vmem:[#allocation11 + $0x20] sm:$0xff]
    %v4676 = vld [vmem:[#allocation11 + $0x28] sm:$0xff]
    %v4677 = vld [vmem:[#allocation11 + $0x30] sm:$0xff]
    %v4678 = vld [vmem:[#allocation11 + $0x38] sm:$0xff]
    %v4679 = vld [vmem:[#allocation11 + $0x40] sm:$0xff]
    %v4680 = vld [vmem:[#allocation11 + $0x48] sm:$0xff]
    %v4681 = vld [vmem:[#allocation11 + $0x50] sm:$0xff]
    %v4682 = vld [vmem:[#allocation11 + $0x58] sm:$0xff]
    %v4683 = vld [vmem:[#allocation11 + $0x60] sm:$0xff]
    %v4684 = vld [vmem:[#allocation11 + $0x68] sm:$0xff]
    %v4685 = vld [vmem:[#allocation11 + $0x70] sm:$0xff]
    %v4686 = vld [vmem:[#allocation11 + $0x78] sm:$0xff]
    %v4687 = vld [vmem:[#allocation11 + $0x80] sm:$0xff]
    %v4688 = vld [vmem:[#allocation11 + $0x88] sm:$0xff]
    %v4689 = vld [vmem:[#allocation11 + $0x90] sm:$0xff]
    %v4690 = vld [vmem:[#allocation11 + $0x98] sm:$0xff]
    %v4691 = vld [vmem:[#allocation11 + $0xa0] sm:$0xff]
    %v4692 = vld [vmem:[#allocation11 + $0xa8] sm:$0xff]
    %v4693 = vld [vmem:[#allocation11 + $0xb0] sm:$0xff]
    %v4694 = vld [vmem:[#allocation11 + $0xb8] sm:$0xff]
    %v4695 = vld [vmem:[#allocation11 + $0xc0] sm:$0xff]
    %v4696 = vld [vmem:[#allocation11 + $0xc8] sm:$0xff]
    %v4697 = vld [vmem:[#allocation11 + $0xd0] sm:$0xff]
    %v4698 = vld [vmem:[#allocation11 + $0xd8] sm:$0xff]
    %v4699 = vld [vmem:[#allocation11 + $0xe0] sm:$0xff]
    %v4700 = vld [vmem:[#allocation11 + $0xe8] sm:$0xff]
    %v4701 = vld [vmem:[#allocation11 + $0xf0] sm:$0xff]
    %v4702 = vld [vmem:[#allocation11 + $0xf8] sm:$0xff]
    %v4703 = vld [vmem:[#allocation11 + $0x100] sm:$0xff]
    %v4704 = vld [vmem:[#allocation11 + $0x108] sm:$0xff]
    %v4705 = vld [vmem:[#allocation11 + $0x110] sm:$0xff]
    %v4706 = vld [vmem:[#allocation11 + $0x118] sm:$0xff]
    %v4707 = vld [vmem:[#allocation11 + $0x120] sm:$0xff]
    %v4708 = vld [vmem:[#allocation11 + $0x128] sm:$0xff]
    %v4709 = vld [vmem:[#allocation11 + $0x130] sm:$0xff]
    %v4710 = vld [vmem:[#allocation11 + $0x138] sm:$0xff]
    %v4711 = vld [vmem:[#allocation11 + $0x140] sm:$0xff]
    %v4712 = vld [vmem:[#allocation11 + $0x148] sm:$0xff]
    %v4713 = vld [vmem:[#allocation11 + $0x150] sm:$0xff]
    %v4714 = vld [vmem:[#allocation11 + $0x158] sm:$0xff]
    %v4715 = vld [vmem:[#allocation11 + $0x160] sm:$0xff]
    %v4716 = vld [vmem:[#allocation11 + $0x168] sm:$0xff]
    %v4717 = vld [vmem:[#allocation11 + $0x170] sm:$0xff]
    %v4718 = vld [vmem:[#allocation11 + $0x178] sm:$0xff]
    %v4719 = vld [vmem:[#allocation11 + $0x180] sm:$0xff]
    %v4720 = vld [vmem:[#allocation11 + $0x188] sm:$0xff]
    %v4721 = vld [vmem:[#allocation11 + $0x190] sm:$0xff]
    %v4722 = vld [vmem:[#allocation11 + $0x198] sm:$0xff]
    %v4723 = vld [vmem:[#allocation11 + $0x1a0] sm:$0xff]
    %v4724 = vld [vmem:[#allocation11 + $0x1a8] sm:$0xff]
    %v4725 = vld [vmem:[#allocation11 + $0x1b0] sm:$0xff]
    %v4726 = vld [vmem:[#allocation11 + $0x1b8] sm:$0xff]
    %v4727 = vld [vmem:[#allocation11 + $0x1c0] sm:$0xff]
    %v4728 = vld [vmem:[#allocation11 + $0x1c8] sm:$0xff]
    %v4729 = vld [vmem:[#allocation11 + $0x1d0] sm:$0xff]
    %v4730 = vld [vmem:[#allocation11 + $0x1d8] sm:$0xff]
    %v4731 = vld [vmem:[#allocation11 + $0x1e0] sm:$0xff]
    %v4732 = vld [vmem:[#allocation11 + $0x1e8] sm:$0xff]
    %v4733 = vld [vmem:[#allocation11 + $0x1f0] sm:$0xff]
    %v4734 = vld [vmem:[#allocation11 + $0x1f8] sm:$0xff]
    %v4735 = vld [vmem:[#allocation11 + $0x200] sm:$0xff]
    %v4736 = vld [vmem:[#allocation11 + $0x208] sm:$0xff]
    %v4737 = vld [vmem:[#allocation11 + $0x210] sm:$0xff]
    %v4738 = vld [vmem:[#allocation11 + $0x218] sm:$0xff]
    %v4739 = vld [vmem:[#allocation11 + $0x220] sm:$0xff]
    %v4740 = vld [vmem:[#allocation11 + $0x228] sm:$0xff]
    %v4741 = vld [vmem:[#allocation11 + $0x230] sm:$0xff]
    %v4742 = vld [vmem:[#allocation11 + $0x238] sm:$0xff]
    %v4743 = vld [vmem:[#allocation11 + $0x240] sm:$0xff]
    %v4744 = vld [vmem:[#allocation11 + $0x248] sm:$0xff]
    %v4745 = vld [vmem:[#allocation11 + $0x250] sm:$0xff]
    %v4746 = vld [vmem:[#allocation11 + $0x258] sm:$0xff]
    %v4747 = vld [vmem:[#allocation11 + $0x260] sm:$0xff]
    %v4748 = vld [vmem:[#allocation11 + $0x268] sm:$0xff]
    %v4749 = vld [vmem:[#allocation11 + $0x270] sm:$0xff]
    %v4750 = vld [vmem:[#allocation11 + $0x278] sm:$0xff]
    %v4751 = vld [vmem:[#allocation11 + $0x280] sm:$0xff]
    %v4752 = vld [vmem:[#allocation11 + $0x288] sm:$0xff]
    %v4753 = vld [vmem:[#allocation11 + $0x290] sm:$0xff]
    %v4754 = vld [vmem:[#allocation11 + $0x298] sm:$0xff]
    %v4755 = vld [vmem:[#allocation11 + $0x2a0] sm:$0xff]
    %v4756 = vld [vmem:[#allocation11 + $0x2a8] sm:$0xff]
    %v4757 = vld [vmem:[#allocation11 + $0x2b0] sm:$0xff]
    %v4758 = vld [vmem:[#allocation11 + $0x2b8] sm:$0xff]
    %v4759 = vld [vmem:[#allocation11 + $0x2c0] sm:$0xff]
    %v4760 = vld [vmem:[#allocation11 + $0x2c8] sm:$0xff]
    %v4761 = vld [vmem:[#allocation11 + $0x2d0] sm:$0xff]
    %v4762 = vld [vmem:[#allocation11 + $0x2d8] sm:$0xff]
    %v4763 = vld [vmem:[#allocation11 + $0x2e0] sm:$0xff]
    %v4764 = vld [vmem:[#allocation11 + $0x2e8] sm:$0xff]
    %v4765 = vld [vmem:[#allocation11 + $0x2f0] sm:$0xff]
    %v4766 = vld [vmem:[#allocation11 + $0x2f8] sm:$0xff]
    %v4767 = vld [vmem:[#allocation11 + $0x300] sm:$0xff]
    %v4768 = vld [vmem:[#allocation11 + $0x308] sm:$0xff]
    %v4769 = vld [vmem:[#allocation11 + $0x310] sm:$0xff]
    %v4770 = vld [vmem:[#allocation11 + $0x318] sm:$0xff]
    %v4771 = vld [vmem:[#allocation11 + $0x320] sm:$0xff]
    %v4772 = vld [vmem:[#allocation11 + $0x328] sm:$0xff]
    %v4773 = vld [vmem:[#allocation11 + $0x330] sm:$0xff]
    %v4774 = vld [vmem:[#allocation11 + $0x338] sm:$0xff]
    %v4775 = vld [vmem:[#allocation11 + $0x340] sm:$0xff]
    %v4776 = vld [vmem:[#allocation11 + $0x348] sm:$0xff]
    %v4777 = vld [vmem:[#allocation11 + $0x350] sm:$0xff]
    %v4778 = vld [vmem:[#allocation11 + $0x358] sm:$0xff]
    %v4779 = vld [vmem:[#allocation11 + $0x360] sm:$0xff]
    %v4780 = vld [vmem:[#allocation11 + $0x368] sm:$0xff]
    %v4781 = vld [vmem:[#allocation11 + $0x370] sm:$0xff]
    %v4782 = vld [vmem:[#allocation11 + $0x378] sm:$0xff]
    %v4783 = vld [vmem:[#allocation11 + $0x380] sm:$0xff]
    %v4784 = vld [vmem:[#allocation11 + $0x388] sm:$0xff]
    %v4785 = vld [vmem:[#allocation11 + $0x390] sm:$0xff]
    %v4786 = vld [vmem:[#allocation11 + $0x398] sm:$0xff]
    %v4787 = vld [vmem:[#allocation11 + $0x3a0] sm:$0xff]
    %v4788 = vld [vmem:[#allocation11 + $0x3a8] sm:$0xff]
    %v4789 = vld [vmem:[#allocation11 + $0x3b0] sm:$0xff]
    %v4790 = vld [vmem:[#allocation11 + $0x3b8] sm:$0xff]
    %v4791 = vld [vmem:[#allocation11 + $0x3c0] sm:$0xff]
    %v4792 = vld [vmem:[#allocation11 + $0x3c8] sm:$0xff]
    %v4793 = vld [vmem:[#allocation11 + $0x3d0] sm:$0xff]
    %v4794 = vld [vmem:[#allocation11 + $0x3d8] sm:$0xff]
    %v4795 = vld [vmem:[#allocation11 + $0x3e0] sm:$0xff]
    %v4796 = vld [vmem:[#allocation11 + $0x3e8] sm:$0xff]
    %v4797 = vld [vmem:[#allocation11 + $0x3f0] sm:$0xff]
    %v4798 = vld [vmem:[#allocation11 + $0x3f8] sm:$0xff]
    %v4799 = vld [vmem:[#allocation11 + $0x400] sm:$0xff]
    %v4800 = vld [vmem:[#allocation11 + $0x408] sm:$0xff]
    %v4801 = vld [vmem:[#allocation11 + $0x410] sm:$0xff]
    %v4802 = vld [vmem:[#allocation11 + $0x418] sm:$0xff]
    %v4803 = vld [vmem:[#allocation11 + $0x420] sm:$0xff]
    %v4804 = vld [vmem:[#allocation11 + $0x428] sm:$0xff]
    %v4805 = vld [vmem:[#allocation11 + $0x430] sm:$0xff]
    %v4806 = vld [vmem:[#allocation11 + $0x438] sm:$0xff]
    %v4807 = vld [vmem:[#allocation11 + $0x440] sm:$0xff]
    %v4808 = vld [vmem:[#allocation11 + $0x448] sm:$0xff]
    %v4809 = vld [vmem:[#allocation11 + $0x450] sm:$0xff]
    %v4810 = vld [vmem:[#allocation11 + $0x458] sm:$0xff]
    %v4811 = vld [vmem:[#allocation11 + $0x460] sm:$0xff]
    %v4812 = vld [vmem:[#allocation11 + $0x468] sm:$0xff]
    %v4813 = vld [vmem:[#allocation11 + $0x470] sm:$0xff]
    %v4814 = vld [vmem:[#allocation11 + $0x478] sm:$0xff]
    %v4815 = vld [vmem:[#allocation11 + $0x480] sm:$0xff]
    %v4816 = vld [vmem:[#allocation11 + $0x488] sm:$0xff]
    %v4817 = vld [vmem:[#allocation11 + $0x490] sm:$0xff]
    %v4818 = vld [vmem:[#allocation11 + $0x498] sm:$0xff]
    %v4819 = vld [vmem:[#allocation11 + $0x4a0] sm:$0xff]
    %v4820 = vld [vmem:[#allocation11 + $0x4a8] sm:$0xff]
    %v4821 = vld [vmem:[#allocation11 + $0x4b0] sm:$0xff]
    %v4822 = vld [vmem:[#allocation11 + $0x4b8] sm:$0xff]
    %v4823 = vld [vmem:[#allocation11 + $0x4c0] sm:$0xff]
    %v4824 = vld [vmem:[#allocation11 + $0x4c8] sm:$0xff]
    %v4825 = vld [vmem:[#allocation11 + $0x4d0] sm:$0xff]
    %v4826 = vld [vmem:[#allocation11 + $0x4d8] sm:$0xff]
    %v4827 = vld [vmem:[#allocation11 + $0x4e0] sm:$0xff]
    %v4828 = vld [vmem:[#allocation11 + $0x4e8] sm:$0xff]
    %v4829 = vld [vmem:[#allocation11 + $0x4f0] sm:$0xff]
    %v4830 = vld [vmem:[#allocation11 + $0x4f8] sm:$0xff]
    %v4831 = vld [vmem:[#allocation11 + $0x500] sm:$0xff]
    %v4832 = vld [vmem:[#allocation11 + $0x508] sm:$0xff]
    %v4833 = vld [vmem:[#allocation11 + $0x510] sm:$0xff]
    %v4834 = vld [vmem:[#allocation11 + $0x518] sm:$0xff]
    %v4835 = vld [vmem:[#allocation11 + $0x520] sm:$0xff]
    %v4836 = vld [vmem:[#allocation11 + $0x528] sm:$0xff]
    %v4837 = vld [vmem:[#allocation11 + $0x530] sm:$0xff]
    %v4838 = vld [vmem:[#allocation11 + $0x538] sm:$0xff]
    %v4839 = vld [vmem:[#allocation11 + $0x540] sm:$0xff]
    %v4840 = vld [vmem:[#allocation11 + $0x548] sm:$0xff]
    %v4841 = vld [vmem:[#allocation11 + $0x550] sm:$0xff]
    %v4842 = vld [vmem:[#allocation11 + $0x558] sm:$0xff]
    %v4843 = vld [vmem:[#allocation11 + $0x560] sm:$0xff]
    %v4844 = vld [vmem:[#allocation11 + $0x568] sm:$0xff]
    %v4845 = vld [vmem:[#allocation11 + $0x570] sm:$0xff]
    %v4846 = vld [vmem:[#allocation11 + $0x578] sm:$0xff]
    %v4847 = vld [vmem:[#allocation11 + $0x580] sm:$0xff]
    %v4848 = vld [vmem:[#allocation11 + $0x588] sm:$0xff]
    %v4849 = vld [vmem:[#allocation11 + $0x590] sm:$0xff]
    %v4850 = vld [vmem:[#allocation11 + $0x598] sm:$0xff]
    %v4851 = vld [vmem:[#allocation11 + $0x5a0] sm:$0xff]
    %v4852 = vld [vmem:[#allocation11 + $0x5a8] sm:$0xff]
    %v4853 = vld [vmem:[#allocation11 + $0x5b0] sm:$0xff]
    %v4854 = vld [vmem:[#allocation11 + $0x5b8] sm:$0xff]
    %v4855 = vld [vmem:[#allocation11 + $0x5c0] sm:$0xff]
    %v4856 = vld [vmem:[#allocation11 + $0x5c8] sm:$0xff]
    %v4857 = vld [vmem:[#allocation11 + $0x5d0] sm:$0xff]
    %v4858 = vld [vmem:[#allocation11 + $0x5d8] sm:$0xff]
    %v4859 = vld [vmem:[#allocation11 + $0x5e0] sm:$0xff]
    %v4860 = vld [vmem:[#allocation11 + $0x5e8] sm:$0xff]
    %v4861 = vld [vmem:[#allocation11 + $0x5f0] sm:$0xff]
    %v4862 = vld [vmem:[#allocation11 + $0x5f8] sm:$0xff]
    %v4863 = vld [vmem:[#allocation11 + $0x600] sm:$0xff]
    %v4864 = vld [vmem:[#allocation11 + $0x608] sm:$0xff]
    %v4865 = vld [vmem:[#allocation11 + $0x610] sm:$0xff]
    %v4866 = vld [vmem:[#allocation11 + $0x618] sm:$0xff]
    %v4867 = vld [vmem:[#allocation11 + $0x620] sm:$0xff]
    %v4868 = vld [vmem:[#allocation11 + $0x628] sm:$0xff]
    %v4869 = vld [vmem:[#allocation11 + $0x630] sm:$0xff]
    %v4870 = vld [vmem:[#allocation11 + $0x638] sm:$0xff]
    %v4871 = vld [vmem:[#allocation11 + $0x640] sm:$0xff]
    %v4872 = vld [vmem:[#allocation11 + $0x648] sm:$0xff]
    %v4873 = vld [vmem:[#allocation11 + $0x650] sm:$0xff]
    %v4874 = vld [vmem:[#allocation11 + $0x658] sm:$0xff]
    %v4875 = vld [vmem:[#allocation11 + $0x660] sm:$0xff]
    %v4876 = vld [vmem:[#allocation11 + $0x668] sm:$0xff]
    %v4877 = vld [vmem:[#allocation11 + $0x670] sm:$0xff]
    %v4878 = vld [vmem:[#allocation11 + $0x678] sm:$0xff]
    %v4879 = vld [vmem:[#allocation13] sm:$0xf]
    %v4881 = vlaneseq
    %v4882 = vshrl.u32 %v4881, 7
    %v4883 = vsub.s32 0, %v4882
    %v4884 = vrot.slane %v4879, %v4883
    %v4885 = vlaneseq
    %v4886 = vshrl.u32 %v4885, 7
    %v4887 = vsub.s32 1, %v4886
    %v4888 = vrot.slane %v4879, %v4887
    %v4889 = vlaneseq
    %v4890 = vshrl.u32 %v4889, 7
    %v4891 = vsub.s32 2, %v4890
    %v4892 = vrot.slane %v4879, %v4891
    %v4893 = vlaneseq
    %v4894 = vshrl.u32 %v4893, 7
    %v4895 = vsub.s32 3, %v4894
    %v4896 = vrot.slane %v4879, %v4895
    %v5109 = vunpack.c.l.b16 %v4671
    %v5110 = vunpack.c.h.b16 %v4671
    %v5111 = vunpack.c.l.b16 %v4672
    %v5112 = vunpack.c.h.b16 %v4672
    %v5113 = vunpack.c.l.b16 %v4673
    %v5114 = vunpack.c.h.b16 %v4673
    %v5115 = vunpack.c.l.b16 %v4674
    %v5116 = vunpack.c.h.b16 %v4674
    %v5117 = vunpack.c.l.b16 %v4675
    %v5118 = vunpack.c.h.b16 %v4675
    %v5119 = vunpack.c.l.b16 %v4676
    %v5120 = vunpack.c.h.b16 %v4676
    %v5121 = vunpack.c.l.b16 %v4677
    %v5122 = vunpack.c.h.b16 %v4677
    %v5123 = vunpack.c.l.b16 %v4678
    %v5124 = vunpack.c.h.b16 %v4678
    %v5125 = vunpack.c.l.b16 %v4679
    %v5126 = vunpack.c.h.b16 %v4679
    %v5127 = vunpack.c.l.b16 %v4680
    %v5128 = vunpack.c.h.b16 %v4680
    %v5129 = vunpack.c.l.b16 %v4681
    %v5130 = vunpack.c.h.b16 %v4681
    %v5131 = vunpack.c.l.b16 %v4682
    %v5132 = vunpack.c.h.b16 %v4682
    %v5133 = vunpack.c.l.b16 %v4683
    %v5134 = vunpack.c.h.b16 %v4683
    %v5135 = vunpack.c.l.b16 %v4684
    %v5136 = vunpack.c.h.b16 %v4684
    %v5137 = vunpack.c.l.b16 %v4685
    %v5138 = vunpack.c.h.b16 %v4685
    %v5139 = vunpack.c.l.b16 %v4686
    %v5140 = vunpack.c.h.b16 %v4686
    %v5141 = vunpack.c.l.b16 %v4687
    %v5142 = vunpack.c.h.b16 %v4687
    %v5143 = vunpack.c.l.b16 %v4688
    %v5144 = vunpack.c.h.b16 %v4688
    %v5145 = vunpack.c.l.b16 %v4689
    %v5146 = vunpack.c.h.b16 %v4689
    %v5147 = vunpack.c.l.b16 %v4690
    %v5148 = vunpack.c.h.b16 %v4690
    %v5149 = vunpack.c.l.b16 %v4691
    %v5150 = vunpack.c.h.b16 %v4691
    %v5151 = vunpack.c.l.b16 %v4692
    %v5152 = vunpack.c.h.b16 %v4692
    %v5153 = vunpack.c.l.b16 %v4693
    %v5154 = vunpack.c.h.b16 %v4693
    %v5155 = vunpack.c.l.b16 %v4694
    %v5156 = vunpack.c.h.b16 %v4694
    %v5157 = vunpack.c.l.b16 %v4695
    %v5158 = vunpack.c.h.b16 %v4695
    %v5159 = vunpack.c.l.b16 %v4696
    %v5160 = vunpack.c.h.b16 %v4696
    %v5161 = vunpack.c.l.b16 %v4697
    %v5162 = vunpack.c.h.b16 %v4697
    %v5163 = vunpack.c.l.b16 %v4698
    %v5164 = vunpack.c.h.b16 %v4698
    %v5165 = vunpack.c.l.b16 %v4699
    %v5166 = vunpack.c.h.b16 %v4699
    %v5167 = vunpack.c.l.b16 %v4700
    %v5168 = vunpack.c.h.b16 %v4700
    %v5169 = vunpack.c.l.b16 %v4701
    %v5170 = vunpack.c.h.b16 %v4701
    %v5171 = vunpack.c.l.b16 %v4702
    %v5172 = vunpack.c.h.b16 %v4702
    %v5173 = vunpack.c.l.b16 %v4703
    %v5174 = vunpack.c.h.b16 %v4703
    %v5175 = vunpack.c.l.b16 %v4704
    %v5176 = vunpack.c.h.b16 %v4704
    %v5177 = vunpack.c.l.b16 %v4705
    %v5178 = vunpack.c.h.b16 %v4705
    %v5179 = vunpack.c.l.b16 %v4706
    %v5180 = vunpack.c.h.b16 %v4706
    %v5181 = vunpack.c.l.b16 %v4707
    %v5182 = vunpack.c.h.b16 %v4707
    %v5183 = vunpack.c.l.b16 %v4708
    %v5184 = vunpack.c.h.b16 %v4708
    %v5185 = vunpack.c.l.b16 %v4709
    %v5186 = vunpack.c.h.b16 %v4709
    %v5187 = vunpack.c.l.b16 %v4710
    %v5188 = vunpack.c.h.b16 %v4710
    %v5189 = vunpack.c.l.b16 %v4711
    %v5190 = vunpack.c.h.b16 %v4711
    %v5191 = vunpack.c.l.b16 %v4712
    %v5192 = vunpack.c.h.b16 %v4712
    %v5193 = vunpack.c.l.b16 %v4713
    %v5194 = vunpack.c.h.b16 %v4713
    %v5195 = vunpack.c.l.b16 %v4714
    %v5196 = vunpack.c.h.b16 %v4714
    %v5197 = vunpack.c.l.b16 %v4715
    %v5198 = vunpack.c.h.b16 %v4715
    %v5199 = vunpack.c.l.b16 %v4716
    %v5200 = vunpack.c.h.b16 %v4716
    %v5201 = vunpack.c.l.b16 %v4717
    %v5202 = vunpack.c.h.b16 %v4717
    %v5203 = vunpack.c.l.b16 %v4718
    %v5204 = vunpack.c.h.b16 %v4718
    %v5205 = vunpack.c.l.b16 %v4719
    %v5206 = vunpack.c.h.b16 %v4719
    %v5207 = vunpack.c.l.b16 %v4720
    %v5208 = vunpack.c.h.b16 %v4720
    %v5209 = vunpack.c.l.b16 %v4721
    %v5210 = vunpack.c.h.b16 %v4721
    %v5211 = vunpack.c.l.b16 %v4722
    %v5212 = vunpack.c.h.b16 %v4722
    %v5213 = vunpack.c.l.b16 %v4723
    %v5214 = vunpack.c.h.b16 %v4723
    %v5215 = vunpack.c.l.b16 %v4724
    %v5216 = vunpack.c.h.b16 %v4724
    %v5217 = vunpack.c.l.b16 %v4725
    %v5218 = vunpack.c.h.b16 %v4725
    %v5219 = vunpack.c.l.b16 %v4726
    %v5220 = vunpack.c.h.b16 %v4726
    %v5221 = vunpack.c.l.b16 %v4727
    %v5222 = vunpack.c.h.b16 %v4727
    %v5223 = vunpack.c.l.b16 %v4728
    %v5224 = vunpack.c.h.b16 %v4728
    %v5225 = vunpack.c.l.b16 %v4729
    %v5226 = vunpack.c.h.b16 %v4729
    %v5227 = vunpack.c.l.b16 %v4730
    %v5228 = vunpack.c.h.b16 %v4730
    %v5229 = vunpack.c.l.b16 %v4731
    %v5230 = vunpack.c.h.b16 %v4731
    %v5231 = vunpack.c.l.b16 %v4732
    %v5232 = vunpack.c.h.b16 %v4732
    %v5233 = vunpack.c.l.b16 %v4733
    %v5234 = vunpack.c.h.b16 %v4733
    %v5235 = vunpack.c.l.b16 %v4734
    %v5236 = vunpack.c.h.b16 %v4734
    %v5237 = vunpack.c.l.b16 %v4735
    %v5238 = vunpack.c.h.b16 %v4735
    %v5239 = vunpack.c.l.b16 %v4736
    %v5240 = vunpack.c.h.b16 %v4736
    %v5241 = vunpack.c.l.b16 %v4737
    %v5242 = vunpack.c.h.b16 %v4737
    %v5243 = vunpack.c.l.b16 %v4738
    %v5244 = vunpack.c.h.b16 %v4738
    %v5245 = vunpack.c.l.b16 %v4739
    %v5246 = vunpack.c.h.b16 %v4739
    %v5247 = vunpack.c.l.b16 %v4740
    %v5248 = vunpack.c.h.b16 %v4740
    %v5249 = vunpack.c.l.b16 %v4741
    %v5250 = vunpack.c.h.b16 %v4741
    %v5251 = vunpack.c.l.b16 %v4742
    %v5252 = vunpack.c.h.b16 %v4742
    %v5253 = vunpack.c.l.b16 %v4743
    %v5254 = vunpack.c.h.b16 %v4743
    %v5255 = vunpack.c.l.b16 %v4744
    %v5256 = vunpack.c.h.b16 %v4744
    %v5257 = vunpack.c.l.b16 %v4745
    %v5258 = vunpack.c.h.b16 %v4745
    %v5259 = vunpack.c.l.b16 %v4746
    %v5260 = vunpack.c.h.b16 %v4746
    %v5261 = vunpack.c.l.b16 %v4747
    %v5262 = vunpack.c.h.b16 %v4747
    %v5263 = vunpack.c.l.b16 %v4748
    %v5264 = vunpack.c.h.b16 %v4748
    %v5265 = vunpack.c.l.b16 %v4749
    %v5266 = vunpack.c.h.b16 %v4749
    %v5267 = vunpack.c.l.b16 %v4750
    %v5268 = vunpack.c.h.b16 %v4750
    %v5269 = vunpack.c.l.b16 %v4751
    %v5270 = vunpack.c.h.b16 %v4751
    %v5271 = vunpack.c.l.b16 %v4752
    %v5272 = vunpack.c.h.b16 %v4752
    %v5273 = vunpack.c.l.b16 %v4753
    %v5274 = vunpack.c.h.b16 %v4753
    %v5275 = vunpack.c.l.b16 %v4754
    %v5276 = vunpack.c.h.b16 %v4754
    %v5277 = vunpack.c.l.b16 %v4755
    %v5278 = vunpack.c.h.b16 %v4755
    %v5279 = vunpack.c.l.b16 %v4756
    %v5280 = vunpack.c.h.b16 %v4756
    %v5281 = vunpack.c.l.b16 %v4757
    %v5282 = vunpack.c.h.b16 %v4757
    %v5283 = vunpack.c.l.b16 %v4758
    %v5284 = vunpack.c.h.b16 %v4758
    %v5285 = vunpack.c.l.b16 %v4759
    %v5286 = vunpack.c.h.b16 %v4759
    %v5287 = vunpack.c.l.b16 %v4760
    %v5288 = vunpack.c.h.b16 %v4760
    %v5289 = vunpack.c.l.b16 %v4761
    %v5290 = vunpack.c.h.b16 %v4761
    %v5291 = vunpack.c.l.b16 %v4762
    %v5292 = vunpack.c.h.b16 %v4762
    %v5293 = vunpack.c.l.b16 %v4763
    %v5294 = vunpack.c.h.b16 %v4763
    %v5295 = vunpack.c.l.b16 %v4764
    %v5296 = vunpack.c.h.b16 %v4764
    %v5297 = vunpack.c.l.b16 %v4765
    %v5298 = vunpack.c.h.b16 %v4765
    %v5299 = vunpack.c.l.b16 %v4766
    %v5300 = vunpack.c.h.b16 %v4766
    %v5301 = vunpack.c.l.b16 %v4767
    %v5302 = vunpack.c.h.b16 %v4767
    %v5303 = vunpack.c.l.b16 %v4768
    %v5304 = vunpack.c.h.b16 %v4768
    %v5305 = vunpack.c.l.b16 %v4769
    %v5306 = vunpack.c.h.b16 %v4769
    %v5307 = vunpack.c.l.b16 %v4770
    %v5308 = vunpack.c.h.b16 %v4770
    %v5309 = vunpack.c.l.b16 %v4771
    %v5310 = vunpack.c.h.b16 %v4771
    %v5311 = vunpack.c.l.b16 %v4772
    %v5312 = vunpack.c.h.b16 %v4772
    %v5313 = vunpack.c.l.b16 %v4773
    %v5314 = vunpack.c.h.b16 %v4773
    %v5315 = vunpack.c.l.b16 %v4774
    %v5316 = vunpack.c.h.b16 %v4774
    %v5317 = vunpack.c.l.b16 %v4775
    %v5318 = vunpack.c.h.b16 %v4775
    %v5319 = vunpack.c.l.b16 %v4776
    %v5320 = vunpack.c.h.b16 %v4776
    %v5321 = vunpack.c.l.b16 %v4777
    %v5322 = vunpack.c.h.b16 %v4777
    %v5323 = vunpack.c.l.b16 %v4778
    %v5324 = vunpack.c.h.b16 %v4778
    %v5325 = vunpack.c.l.b16 %v4779
    %v5326 = vunpack.c.h.b16 %v4779
    %v5327 = vunpack.c.l.b16 %v4780
    %v5328 = vunpack.c.h.b16 %v4780
    %v5329 = vunpack.c.l.b16 %v4781
    %v5330 = vunpack.c.h.b16 %v4781
    %v5331 = vunpack.c.l.b16 %v4782
    %v5332 = vunpack.c.h.b16 %v4782
    %v5333 = vunpack.c.l.b16 %v4783
    %v5334 = vunpack.c.h.b16 %v4783
    %v5335 = vunpack.c.l.b16 %v4784
    %v5336 = vunpack.c.h.b16 %v4784
    %v5337 = vunpack.c.l.b16 %v4785
    %v5338 = vunpack.c.h.b16 %v4785
    %v5339 = vunpack.c.l.b16 %v4786
    %v5340 = vunpack.c.h.b16 %v4786
    %v5341 = vunpack.c.l.b16 %v4787
    %v5342 = vunpack.c.h.b16 %v4787
    %v5343 = vunpack.c.l.b16 %v4788
    %v5344 = vunpack.c.h.b16 %v4788
    %v5345 = vunpack.c.l.b16 %v4789
    %v5346 = vunpack.c.h.b16 %v4789
    %v5347 = vunpack.c.l.b16 %v4790
    %v5348 = vunpack.c.h.b16 %v4790
    %v5349 = vunpack.c.l.b16 %v4791
    %v5350 = vunpack.c.h.b16 %v4791
    %v5351 = vunpack.c.l.b16 %v4792
    %v5352 = vunpack.c.h.b16 %v4792
    %v5353 = vunpack.c.l.b16 %v4793
    %v5354 = vunpack.c.h.b16 %v4793
    %v5355 = vunpack.c.l.b16 %v4794
    %v5356 = vunpack.c.h.b16 %v4794
    %v5357 = vunpack.c.l.b16 %v4795
    %v5358 = vunpack.c.h.b16 %v4795
    %v5359 = vunpack.c.l.b16 %v4796
    %v5360 = vunpack.c.h.b16 %v4796
    %v5361 = vunpack.c.l.b16 %v4797
    %v5362 = vunpack.c.h.b16 %v4797
    %v5363 = vunpack.c.l.b16 %v4798
    %v5364 = vunpack.c.h.b16 %v4798
    %v5365 = vunpack.c.l.b16 %v4799
    %v5366 = vunpack.c.h.b16 %v4799
    %v5367 = vunpack.c.l.b16 %v4800
    %v5368 = vunpack.c.h.b16 %v4800
    %v5369 = vunpack.c.l.b16 %v4801
    %v5370 = vunpack.c.h.b16 %v4801
    %v5371 = vunpack.c.l.b16 %v4802
    %v5372 = vunpack.c.h.b16 %v4802
    %v5373 = vunpack.c.l.b16 %v4803
    %v5374 = vunpack.c.h.b16 %v4803
    %v5375 = vunpack.c.l.b16 %v4804
    %v5376 = vunpack.c.h.b16 %v4804
    %v5377 = vunpack.c.l.b16 %v4805
    %v5378 = vunpack.c.h.b16 %v4805
    %v5379 = vunpack.c.l.b16 %v4806
    %v5380 = vunpack.c.h.b16 %v4806
    %v5381 = vunpack.c.l.b16 %v4807
    %v5382 = vunpack.c.h.b16 %v4807
    %v5383 = vunpack.c.l.b16 %v4808
    %v5384 = vunpack.c.h.b16 %v4808
    %v5385 = vunpack.c.l.b16 %v4809
    %v5386 = vunpack.c.h.b16 %v4809
    %v5387 = vunpack.c.l.b16 %v4810
    %v5388 = vunpack.c.h.b16 %v4810
    %v5389 = vunpack.c.l.b16 %v4811
    %v5390 = vunpack.c.h.b16 %v4811
    %v5391 = vunpack.c.l.b16 %v4812
    %v5392 = vunpack.c.h.b16 %v4812
    %v5393 = vunpack.c.l.b16 %v4813
    %v5394 = vunpack.c.h.b16 %v4813
    %v5395 = vunpack.c.l.b16 %v4814
    %v5396 = vunpack.c.h.b16 %v4814
    %v5397 = vunpack.c.l.b16 %v4815
    %v5398 = vunpack.c.h.b16 %v4815
    %v5399 = vunpack.c.l.b16 %v4816
    %v5400 = vunpack.c.h.b16 %v4816
    %v5401 = vunpack.c.l.b16 %v4817
    %v5402 = vunpack.c.h.b16 %v4817
    %v5403 = vunpack.c.l.b16 %v4818
    %v5404 = vunpack.c.h.b16 %v4818
    %v5405 = vunpack.c.l.b16 %v4819
    %v5406 = vunpack.c.h.b16 %v4819
    %v5407 = vunpack.c.l.b16 %v4820
    %v5408 = vunpack.c.h.b16 %v4820
    %v5409 = vunpack.c.l.b16 %v4821
    %v5410 = vunpack.c.h.b16 %v4821
    %v5411 = vunpack.c.l.b16 %v4822
    %v5412 = vunpack.c.h.b16 %v4822
    %v5413 = vunpack.c.l.b16 %v4823
    %v5414 = vunpack.c.h.b16 %v4823
    %v5415 = vunpack.c.l.b16 %v4824
    %v5416 = vunpack.c.h.b16 %v4824
    %v5417 = vunpack.c.l.b16 %v4825
    %v5418 = vunpack.c.h.b16 %v4825
    %v5419 = vunpack.c.l.b16 %v4826
    %v5420 = vunpack.c.h.b16 %v4826
    %v5421 = vunpack.c.l.b16 %v4827
    %v5422 = vunpack.c.h.b16 %v4827
    %v5423 = vunpack.c.l.b16 %v4828
    %v5424 = vunpack.c.h.b16 %v4828
    %v5425 = vunpack.c.l.b16 %v4829
    %v5426 = vunpack.c.h.b16 %v4829
    %v5427 = vunpack.c.l.b16 %v4830
    %v5428 = vunpack.c.h.b16 %v4830
    %v5429 = vunpack.c.l.b16 %v4831
    %v5430 = vunpack.c.h.b16 %v4831
    %v5431 = vunpack.c.l.b16 %v4832
    %v5432 = vunpack.c.h.b16 %v4832
    %v5433 = vunpack.c.l.b16 %v4833
    %v5434 = vunpack.c.h.b16 %v4833
    %v5435 = vunpack.c.l.b16 %v4834
    %v5436 = vunpack.c.h.b16 %v4834
    %v5437 = vunpack.c.l.b16 %v4835
    %v5438 = vunpack.c.h.b16 %v4835
    %v5439 = vunpack.c.l.b16 %v4836
    %v5440 = vunpack.c.h.b16 %v4836
    %v5441 = vunpack.c.l.b16 %v4837
    %v5442 = vunpack.c.h.b16 %v4837
    %v5443 = vunpack.c.l.b16 %v4838
    %v5444 = vunpack.c.h.b16 %v4838
    %v5445 = vunpack.c.l.b16 %v4839
    %v5446 = vunpack.c.h.b16 %v4839
    %v5447 = vunpack.c.l.b16 %v4840
    %v5448 = vunpack.c.h.b16 %v4840
    %v5449 = vunpack.c.l.b16 %v4841
    %v5450 = vunpack.c.h.b16 %v4841
    %v5451 = vunpack.c.l.b16 %v4842
    %v5452 = vunpack.c.h.b16 %v4842
    %v5453 = vunpack.c.l.b16 %v4843
    %v5454 = vunpack.c.h.b16 %v4843
    %v5455 = vunpack.c.l.b16 %v4844
    %v5456 = vunpack.c.h.b16 %v4844
    %v5457 = vunpack.c.l.b16 %v4845
    %v5458 = vunpack.c.h.b16 %v4845
    %v5459 = vunpack.c.l.b16 %v4846
    %v5460 = vunpack.c.h.b16 %v4846
    %v5461 = vunpack.c.l.b16 %v4847
    %v5462 = vunpack.c.h.b16 %v4847
    %v5463 = vunpack.c.l.b16 %v4848
    %v5464 = vunpack.c.h.b16 %v4848
    %v5465 = vunpack.c.l.b16 %v4849
    %v5466 = vunpack.c.h.b16 %v4849
    %v5467 = vunpack.c.l.b16 %v4850
    %v5468 = vunpack.c.h.b16 %v4850
    %v5469 = vunpack.c.l.b16 %v4851
    %v5470 = vunpack.c.h.b16 %v4851
    %v5471 = vunpack.c.l.b16 %v4852
    %v5472 = vunpack.c.h.b16 %v4852
    %v5473 = vunpack.c.l.b16 %v4853
    %v5474 = vunpack.c.h.b16 %v4853
    %v5475 = vunpack.c.l.b16 %v4854
    %v5476 = vunpack.c.h.b16 %v4854
    %v5477 = vunpack.c.l.b16 %v4855
    %v5478 = vunpack.c.h.b16 %v4855
    %v5479 = vunpack.c.l.b16 %v4856
    %v5480 = vunpack.c.h.b16 %v4856
    %v5481 = vunpack.c.l.b16 %v4857
    %v5482 = vunpack.c.h.b16 %v4857
    %v5483 = vunpack.c.l.b16 %v4858
    %v5484 = vunpack.c.h.b16 %v4858
    %v5485 = vunpack.c.l.b16 %v4859
    %v5486 = vunpack.c.h.b16 %v4859
    %v5487 = vunpack.c.l.b16 %v4860
    %v5488 = vunpack.c.h.b16 %v4860
    %v5489 = vunpack.c.l.b16 %v4861
    %v5490 = vunpack.c.h.b16 %v4861
    %v5491 = vunpack.c.l.b16 %v4862
    %v5492 = vunpack.c.h.b16 %v4862
    %v5493 = vunpack.c.l.b16 %v4863
    %v5494 = vunpack.c.h.b16 %v4863
    %v5495 = vunpack.c.l.b16 %v4864
    %v5496 = vunpack.c.h.b16 %v4864
    %v5497 = vunpack.c.l.b16 %v4865
    %v5498 = vunpack.c.h.b16 %v4865
    %v5499 = vunpack.c.l.b16 %v4866
    %v5500 = vunpack.c.h.b16 %v4866
    %v5501 = vunpack.c.l.b16 %v4867
    %v5502 = vunpack.c.h.b16 %v4867
    %v5503 = vunpack.c.l.b16 %v4868
    %v5504 = vunpack.c.h.b16 %v4868
    %v5505 = vunpack.c.l.b16 %v4869
    %v5506 = vunpack.c.h.b16 %v4869
    %v5507 = vunpack.c.l.b16 %v4870
    %v5508 = vunpack.c.h.b16 %v4870
    %v5509 = vunpack.c.l.b16 %v4871
    %v5510 = vunpack.c.h.b16 %v4871
    %v5511 = vunpack.c.l.b16 %v4872
    %v5512 = vunpack.c.h.b16 %v4872
    %v5513 = vunpack.c.l.b16 %v4873
    %v5514 = vunpack.c.h.b16 %v4873
    %v5515 = vunpack.c.l.b16 %v4874
    %v5516 = vunpack.c.h.b16 %v4874
    %v5517 = vunpack.c.l.b16 %v4875
    %v5518 = vunpack.c.h.b16 %v4875
    %v5519 = vunpack.c.l.b16 %v4876
    %v5520 = vunpack.c.h.b16 %v4876
    %v5521 = vunpack.c.l.b16 %v4877
    %v5522 = vunpack.c.h.b16 %v4877
    %v5523 = vunpack.c.l.b16 %v4878
    %v5524 = vunpack.c.h.b16 %v4878
    %v5525 = vpack.c.b16 %v5113, %v5109
    %v5526 = vpack.c.b16 %v5114, %v5110
    %v5527 = vpack.c.b16 %v5115, %v5111
    %v5528 = vpack.c.b16 %v5116, %v5112
    %v5529 = vpack.c.b16 %v5121, %v5117
    %v5530 = vpack.c.b16 %v5122, %v5118
    %v5531 = vpack.c.b16 %v5123, %v5119
    %v5532 = vpack.c.b16 %v5124, %v5120
    %v5533 = vpack.c.b16 %v5129, %v5125
    %v5534 = vpack.c.b16 %v5130, %v5126
    %v5535 = vpack.c.b16 %v5131, %v5127
    %v5536 = vpack.c.b16 %v5132, %v5128
    %v5537 = vpack.c.b16 %v5137, %v5133
    %v5538 = vpack.c.b16 %v5138, %v5134
    %v5539 = vpack.c.b16 %v5139, %v5135
    %v5540 = vpack.c.b16 %v5140, %v5136
    %v5541 = vpack.c.b16 %v5145, %v5141
    %v5542 = vpack.c.b16 %v5146, %v5142
    %v5543 = vpack.c.b16 %v5147, %v5143
    %v5544 = vpack.c.b16 %v5148, %v5144
    %v5545 = vpack.c.b16 %v5153, %v5149
    %v5546 = vpack.c.b16 %v5154, %v5150
    %v5547 = vpack.c.b16 %v5155, %v5151
    %v5548 = vpack.c.b16 %v5156, %v5152
    %v5549 = vpack.c.b16 %v5161, %v5157
    %v5550 = vpack.c.b16 %v5162, %v5158
    %v5551 = vpack.c.b16 %v5163, %v5159
    %v5552 = vpack.c.b16 %v5164, %v5160
    %v5553 = vpack.c.b16 %v5169, %v5165
    %v5554 = vpack.c.b16 %v5170, %v5166
    %v5555 = vpack.c.b16 %v5171, %v5167
    %v5556 = vpack.c.b16 %v5172, %v5168
    %v5557 = vpack.c.b16 %v5177, %v5173
    %v5558 = vpack.c.b16 %v5178, %v5174
    %v5559 = vpack.c.b16 %v5179, %v5175
    %v5560 = vpack.c.b16 %v5180, %v5176
    %v5561 = vpack.c.b16 %v5185, %v5181
    %v5562 = vpack.c.b16 %v5186, %v5182
    %v5563 = vpack.c.b16 %v5187, %v5183
    %v5564 = vpack.c.b16 %v5188, %v5184
    %v5565 = vpack.c.b16 %v5193, %v5189
    %v5566 = vpack.c.b16 %v5194, %v5190
    %v5567 = vpack.c.b16 %v5195, %v5191
    %v5568 = vpack.c.b16 %v5196, %v5192
    %v5569 = vpack.c.b16 %v5201, %v5197
    %v5570 = vpack.c.b16 %v5202, %v5198
    %v5571 = vpack.c.b16 %v5203, %v5199
    %v5572 = vpack.c.b16 %v5204, %v5200
    %v5573 = vpack.c.b16 %v5209, %v5205
    %v5574 = vpack.c.b16 %v5210, %v5206
    %v5575 = vpack.c.b16 %v5211, %v5207
    %v5576 = vpack.c.b16 %v5212, %v5208
    %v5577 = vpack.c.b16 %v5217, %v5213
    %v5578 = vpack.c.b16 %v5218, %v5214
    %v5579 = vpack.c.b16 %v5219, %v5215
    %v5580 = vpack.c.b16 %v5220, %v5216
    %v5581 = vpack.c.b16 %v5225, %v5221
    %v5582 = vpack.c.b16 %v5226, %v5222
    %v5583 = vpack.c.b16 %v5227, %v5223
    %v5584 = vpack.c.b16 %v5228, %v5224
    %v5585 = vpack.c.b16 %v5233, %v5229
    %v5586 = vpack.c.b16 %v5234, %v5230
    %v5587 = vpack.c.b16 %v5235, %v5231
    %v5588 = vpack.c.b16 %v5236, %v5232
    %v5589 = vpack.c.b16 %v5241, %v5237
    %v5590 = vpack.c.b16 %v5242, %v5238
    %v5591 = vpack.c.b16 %v5243, %v5239
    %v5592 = vpack.c.b16 %v5244, %v5240
    %v5593 = vpack.c.b16 %v5249, %v5245
    %v5594 = vpack.c.b16 %v5250, %v5246
    %v5595 = vpack.c.b16 %v5251, %v5247
    %v5596 = vpack.c.b16 %v5252, %v5248
    %v5597 = vpack.c.b16 %v5257, %v5253
    %v5598 = vpack.c.b16 %v5258, %v5254
    %v5599 = vpack.c.b16 %v5259, %v5255
    %v5600 = vpack.c.b16 %v5260, %v5256
    %v5601 = vpack.c.b16 %v5265, %v5261
    %v5602 = vpack.c.b16 %v5266, %v5262
    %v5603 = vpack.c.b16 %v5267, %v5263
    %v5604 = vpack.c.b16 %v5268, %v5264
    %v5605 = vpack.c.b16 %v5273, %v5269
    %v5606 = vpack.c.b16 %v5274, %v5270
    %v5607 = vpack.c.b16 %v5275, %v5271
    %v5608 = vpack.c.b16 %v5276, %v5272
    %v5609 = vpack.c.b16 %v5281, %v5277
    %v5610 = vpack.c.b16 %v5282, %v5278
    %v5611 = vpack.c.b16 %v5283, %v5279
    %v5612 = vpack.c.b16 %v5284, %v5280
    %v5613 = vpack.c.b16 %v5289, %v5285
    %v5614 = vpack.c.b16 %v5290, %v5286
    %v5615 = vpack.c.b16 %v5291, %v5287
    %v5616 = vpack.c.b16 %v5292, %v5288
    %v5617 = vpack.c.b16 %v5297, %v5293
    %v5618 = vpack.c.b16 %v5298, %v5294
    %v5619 = vpack.c.b16 %v5299, %v5295
    %v5620 = vpack.c.b16 %v5300, %v5296
    %v5621 = vpack.c.b16 %v5305, %v5301
    %v5622 = vpack.c.b16 %v5306, %v5302
    %v5623 = vpack.c.b16 %v5307, %v5303
    %v5624 = vpack.c.b16 %v5308, %v5304
    %v5625 = vpack.c.b16 %v5313, %v5309
    %v5626 = vpack.c.b16 %v5314, %v5310
    %v5627 = vpack.c.b16 %v5315, %v5311
    %v5628 = vpack.c.b16 %v5316, %v5312
    %v5629 = vpack.c.b16 %v5321, %v5317
    %v5630 = vpack.c.b16 %v5322, %v5318
    %v5631 = vpack.c.b16 %v5323, %v5319
    %v5632 = vpack.c.b16 %v5324, %v5320
    %v5633 = vpack.c.b16 %v5329, %v5325
    %v5634 = vpack.c.b16 %v5330, %v5326
    %v5635 = vpack.c.b16 %v5331, %v5327
    %v5636 = vpack.c.b16 %v5332, %v5328
    %v5637 = vpack.c.b16 %v5337, %v5333
    %v5638 = vpack.c.b16 %v5338, %v5334
    %v5639 = vpack.c.b16 %v5339, %v5335
    %v5640 = vpack.c.b16 %v5340, %v5336
    %v5641 = vpack.c.b16 %v5345, %v5341
    %v5642 = vpack.c.b16 %v5346, %v5342
    %v5643 = vpack.c.b16 %v5347, %v5343
    %v5644 = vpack.c.b16 %v5348, %v5344
    %v5645 = vpack.c.b16 %v5353, %v5349
    %v5646 = vpack.c.b16 %v5354, %v5350
    %v5647 = vpack.c.b16 %v5355, %v5351
    %v5648 = vpack.c.b16 %v5356, %v5352
    %v5649 = vpack.c.b16 %v5361, %v5357
    %v5650 = vpack.c.b16 %v5362, %v5358
    %v5651 = vpack.c.b16 %v5363, %v5359
    %v5652 = vpack.c.b16 %v5364, %v5360
    %v5653 = vpack.c.b16 %v5369, %v5365
    %v5654 = vpack.c.b16 %v5370, %v5366
    %v5655 = vpack.c.b16 %v5371, %v5367
    %v5656 = vpack.c.b16 %v5372, %v5368
    %v5657 = vpack.c.b16 %v5377, %v5373
    %v5658 = vpack.c.b16 %v5378, %v5374
    %v5659 = vpack.c.b16 %v5379, %v5375
    %v5660 = vpack.c.b16 %v5380, %v5376
    %v5661 = vpack.c.b16 %v5385, %v5381
    %v5662 = vpack.c.b16 %v5386, %v5382
    %v5663 = vpack.c.b16 %v5387, %v5383
    %v5664 = vpack.c.b16 %v5388, %v5384
    %v5665 = vpack.c.b16 %v5393, %v5389
    %v5666 = vpack.c.b16 %v5394, %v5390
    %v5667 = vpack.c.b16 %v5395, %v5391
    %v5668 = vpack.c.b16 %v5396, %v5392
    %v5669 = vpack.c.b16 %v5401, %v5397
    %v5670 = vpack.c.b16 %v5402, %v5398
    %v5671 = vpack.c.b16 %v5403, %v5399
    %v5672 = vpack.c.b16 %v5404, %v5400
    %v5673 = vpack.c.b16 %v5409, %v5405
    %v5674 = vpack.c.b16 %v5410, %v5406
    %v5675 = vpack.c.b16 %v5411, %v5407
    %v5676 = vpack.c.b16 %v5412, %v5408
    %v5677 = vpack.c.b16 %v5417, %v5413
    %v5678 = vpack.c.b16 %v5418, %v5414
    %v5679 = vpack.c.b16 %v5419, %v5415
    %v5680 = vpack.c.b16 %v5420, %v5416
    %v5681 = vpack.c.b16 %v5425, %v5421
    %v5682 = vpack.c.b16 %v5426, %v5422
    %v5683 = vpack.c.b16 %v5427, %v5423
    %v5684 = vpack.c.b16 %v5428, %v5424
    %v5685 = vpack.c.b16 %v5433, %v5429
    %v5686 = vpack.c.b16 %v5434, %v5430
    %v5687 = vpack.c.b16 %v5435, %v5431
    %v5688 = vpack.c.b16 %v5436, %v5432
    %v5689 = vpack.c.b16 %v5441, %v5437
    %v5690 = vpack.c.b16 %v5442, %v5438
    %v5691 = vpack.c.b16 %v5443, %v5439
    %v5692 = vpack.c.b16 %v5444, %v5440
    %v5693 = vpack.c.b16 %v5449, %v5445
    %v5694 = vpack.c.b16 %v5450, %v5446
    %v5695 = vpack.c.b16 %v5451, %v5447
    %v5696 = vpack.c.b16 %v5452, %v5448
    %v5697 = vpack.c.b16 %v5457, %v5453
    %v5698 = vpack.c.b16 %v5458, %v5454
    %v5699 = vpack.c.b16 %v5459, %v5455
    %v5700 = vpack.c.b16 %v5460, %v5456
    %v5701 = vpack.c.b16 %v5465, %v5461
    %v5702 = vpack.c.b16 %v5466, %v5462
    %v5703 = vpack.c.b16 %v5467, %v5463
    %v5704 = vpack.c.b16 %v5468, %v5464
    %v5705 = vpack.c.b16 %v5473, %v5469
    %v5706 = vpack.c.b16 %v5474, %v5470
    %v5707 = vpack.c.b16 %v5475, %v5471
    %v5708 = vpack.c.b16 %v5476, %v5472
    %v5709 = vpack.c.b16 %v5481, %v5477
    %v5710 = vpack.c.b16 %v5482, %v5478
    %v5711 = vpack.c.b16 %v5483, %v5479
    %v5712 = vpack.c.b16 %v5484, %v5480
    %v5713 = vpack.c.b16 %v5489, %v5485
    %v5714 = vpack.c.b16 %v5490, %v5486
    %v5715 = vpack.c.b16 %v5491, %v5487
    %v5716 = vpack.c.b16 %v5492, %v5488
    %v5717 = vpack.c.b16 %v5497, %v5493
    %v5718 = vpack.c.b16 %v5498, %v5494
    %v5719 = vpack.c.b16 %v5499, %v5495
    %v5720 = vpack.c.b16 %v5500, %v5496
    %v5721 = vpack.c.b16 %v5505, %v5501
    %v5722 = vpack.c.b16 %v5506, %v5502
    %v5723 = vpack.c.b16 %v5507, %v5503
    %v5724 = vpack.c.b16 %v5508, %v5504
    %v5725 = vpack.c.b16 %v5513, %v5509
    %v5726 = vpack.c.b16 %v5514, %v5510
    %v5727 = vpack.c.b16 %v5515, %v5511
    %v5728 = vpack.c.b16 %v5516, %v5512
    %v5729 = vpack.c.b16 %v5521, %v5517
    %v5730 = vpack.c.b16 %v5522, %v5518
    %v5731 = vpack.c.b16 %v5523, %v5519
    %v5732 = vpack.c.b16 %v5524, %v5520
    %v5942 = vsel %vm3987, %v4670, 0
    %5944 = vmatprep.subr.bf16.mxu0 %v5526
    %5945 = vmatpush1.bf16.msra.mxu0 %v5525
    %5946 = vmatprep.subr.bf16.mxu0 %v5530
    %5947 = vmatpush1.bf16.msra.mxu0 %v5529
    %5948 = vmatprep.subr.bf16.mxu0 %v5534
    %5949 = vmatpush1.bf16.msra.mxu0 %v5533
    %5950 = vmatprep.subr.bf16.mxu0 %v5538
    %5951 = vmatpush1.bf16.msra.mxu0 %v5537
    %5952 = vmatprep.subr.bf16.mxu0 %v5542
    %5953 = vmatpush1.bf16.msra.mxu0 %v5541
    %5954 = vmatprep.subr.bf16.mxu0 %v5546
    %5955 = vmatpush1.bf16.msra.mxu0 %v5545
    %5956 = vmatprep.subr.bf16.mxu0 %v5550
    %5957 = vmatpush1.bf16.msra.mxu0 %v5549
    %5958 = vmatprep.subr.bf16.mxu0 %v5554
    %5959 = vmatpush1.bf16.msra.mxu0 %v5553
    %5960 = vmatprep.subr.bf16.mxu0 %v5558
    %5961 = vmatpush1.bf16.msra.mxu0 %v5557
    %5962 = vmatprep.subr.bf16.mxu0 %v5562
    %5963 = vmatpush1.bf16.msra.mxu0 %v5561
    %5964 = vmatprep.subr.bf16.mxu0 %v5566
    %5965 = vmatpush1.bf16.msra.mxu0 %v5565
    %5966 = vmatprep.subr.bf16.mxu0 %v5570
    %5967 = vmatpush1.bf16.msra.mxu0 %v5569
    %5968 = vmatprep.subr.bf16.mxu0 %v5574
    %5969 = vmatpush1.bf16.msra.mxu0 %v5573
    %5970 = vmatprep.subr.bf16.mxu0 %v5578
    %5971 = vmatpush1.bf16.msra.mxu0 %v5577
    %5972 = vmatprep.subr.bf16.mxu0 %v5582
    %5973 = vmatpush1.bf16.msra.mxu0 %v5581
    %5974 = vmatprep.subr.bf16.mxu0 %v5586
    %5975 = vmatpush1.bf16.msra.mxu0 %v5585
    %5976 = vmatprep.mubr.bf16.mxu0 %v4665
    %5977 = vmatmul.mubr.bf16.gmra.mrb[0].mxu0 %v4664
    %v5978 = vpop.f32.mrb[0].mxu0
    %v5979 = vadd.f32 %v4884, %v5978
    %v5980 = vpop.f32.mrb[0].mxu0
    %v5981 = vadd.f32 %v4888, %v5980
    %v5982 = vpop.f32.mrb[0].mxu0
    %v5983 = vpop.f32.mrb[0].mxu0
    %5984 = vdwg.mxu0
    %5985 = vmatprep.subr.bf16.mxu0 %v5590
    %5986 = vmatpush1.bf16.msra.mxu0 %v5589
    %5987 = vmatprep.subr.bf16.mxu0 %v5594
    %5988 = vmatpush1.bf16.msra.mxu0 %v5593
    %5989 = vmatprep.subr.bf16.mxu0 %v5598
    %5990 = vmatpush1.bf16.msra.mxu0 %v5597
    %5991 = vmatprep.subr.bf16.mxu0 %v5602
    %5992 = vmatpush1.bf16.msra.mxu0 %v5601
    %5993 = vmatprep.subr.bf16.mxu0 %v5606
    %5994 = vmatpush1.bf16.msra.mxu0 %v5605
    %5995 = vmatprep.subr.bf16.mxu0 %v5610
    %5996 = vmatpush1.bf16.msra.mxu0 %v5609
    %5997 = vmatprep.subr.bf16.mxu0 %v5614
    %5998 = vmatpush1.bf16.msra.mxu0 %v5613
    %5999 = vmatprep.subr.bf16.mxu0 %v5618
    %6000 = vmatpush1.bf16.msra.mxu0 %v5617
    %6001 = vmatprep.subr.bf16.mxu0 %v5622
    %6002 = vmatpush1.bf16.msra.mxu0 %v5621
    %6003 = vmatprep.subr.bf16.mxu0 %v5626
    %6004 = vmatpush1.bf16.msra.mxu0 %v5625
    %6005 = vmatprep.subr.bf16.mxu0 %v5630
    %6006 = vmatpush1.bf16.msra.mxu0 %v5629
    %6007 = vmatprep.subr.bf16.mxu0 %v5634
    %6008 = vmatpush1.bf16.msra.mxu0 %v5633
    %6009 = vmatprep.subr.bf16.mxu0 %v5638
    %6010 = vmatpush1.bf16.msra.mxu0 %v5637
    %6011 = vmatprep.subr.bf16.mxu0 %v5642
    %6012 = vmatpush1.bf16.msra.mxu0 %v5641
    %6013 = vmatprep.subr.bf16.mxu0 %v5646
    %6014 = vmatpush1.bf16.msra.mxu0 %v5645
    %6015 = vmatprep.subr.bf16.mxu0 %v5650
    %6016 = vmatpush1.bf16.msra.mxu0 %v5649
    %6017 = vmatprep.mubr.bf16.mxu0 %v4667
    %6018 = vmatmul.mubr.bf16.gmra.mrb[0].mxu0 %v4666
    %v6019 = vpop.f32.mrb[0].mxu0
    %v6020 = vadd.f32 %v5979, %v6019
    %v6021 = vpop.f32.mrb[0].mxu0
    %v6022 = vadd.f32 %v5981, %v6021
    %v6023 = vpop.f32.mrb[0].mxu0
    %v6024 = vpop.f32.mrb[0].mxu0
    %6025 = vdwg.mxu0
    %6026 = vmatprep.subr.bf16.mxu0 %v5654
    %6027 = vmatpush1.bf16.msra.mxu0 %v5653
    %6028 = vmatprep.subr.bf16.mxu0 %v5658
    %6029 = vmatpush1.bf16.msra.mxu0 %v5657
    %6030 = vmatprep.subr.bf16.mxu0 %v5662
    %6031 = vmatpush1.bf16.msra.mxu0 %v5661
    %6032 = vmatprep.subr.bf16.mxu0 %v5666
    %6033 = vmatpush1.bf16.msra.mxu0 %v5665
    %6034 = vmatprep.subr.bf16.mxu0 %v5670
    %6035 = vmatpush1.bf16.msra.mxu0 %v5669
    %6036 = vmatprep.subr.bf16.mxu0 %v5674
    %6037 = vmatpush1.bf16.msra.mxu0 %v5673
    %6038 = vmatprep.subr.bf16.mxu0 %v5678
    %6039 = vmatpush1.bf16.msra.mxu0 %v5677
    %6040 = vmatprep.subr.bf16.mxu0 %v5682
    %6041 = vmatpush1.bf16.msra.mxu0 %v5681
    %6042 = vmatprep.subr.bf16.mxu0 %v5686
    %6043 = vmatpush1.bf16.msra.mxu0 %v5685
    %6044 = vmatprep.subr.bf16.mxu0 %v5690
    %6045 = vmatpush1.bf16.msra.mxu0 %v5689
    %6046 = vmatprep.subr.bf16.mxu0 %v5694
    %6047 = vmatpush1.bf16.msra.mxu0 %v5693
    %6048 = vmatprep.subr.bf16.mxu0 %v5698
    %6049 = vmatpush1.bf16.msra.mxu0 %v5697
    %6050 = vmatprep.subr.bf16.mxu0 %v5702
    %6051 = vmatpush1.bf16.msra.mxu0 %v5701
    %6052 = vmatprep.subr.bf16.mxu0 %v5706
    %6053 = vmatpush1.bf16.msra.mxu0 %v5705
    %6054 = vmatprep.subr.bf16.mxu0 %v5710
    %6055 = vmatpush1.bf16.msra.mxu0 %v5709
    %6056 = vmatprep.subr.bf16.mxu0 %v5714
    %6057 = vmatpush1.bf16.msra.mxu0 %v5713
    %6058 = vmatprep.mubr.bf16.mxu0 %v4669
    %6059 = vmatmul.mubr.bf16.gmra.mrb[0].mxu0 %v4668
    %v6060 = vpop.f32.mrb[0].mxu0
    %v6061 = vadd.f32 %v6020, %v6060
    %v6062 = vpop.f32.mrb[0].mxu0
    %v6063 = vadd.f32 %v6022, %v6062
    %v6064 = vpop.f32.mrb[0].mxu0
    %v6065 = vpop.f32.mrb[0].mxu0
    %6066 = vdwg.mxu0
    %6067 = vmatprep.subr.bf16.mxu0 %v5718
    %6068 = vmatpush1.bf16.msra.mxu0 %v5717
    %6069 = vmatprep.subr.bf16.mxu0 %v5722
    %6070 = vmatpush1.bf16.msra.mxu0 %v5721
    %6071 = vmatprep.subr.bf16.mxu0 %v5726
    %6072 = vmatpush1.bf16.msra.mxu0 %v5725
    %6073 = vmatprep.subr.bf16.mxu0 %v5730
    %6074 = vmatpush1.bf16.msra.mxu0 %v5729
    %6075 = vmatprep.subr.bf16.mxu0 0
    %6076 = vmatpush1.bf16.msra.mxu0 0
    %6077 = vmatprep.subr.bf16.mxu0 0
    %6078 = vmatpush1.bf16.msra.mxu0 0
    %6079 = vmatprep.subr.bf16.mxu0 0
    %6080 = vmatpush1.bf16.msra.mxu0 0
    %6081 = vmatprep.subr.bf16.mxu0 0
    %6082 = vmatpush1.bf16.msra.mxu0 0
    %6083 = vmatprep.subr.bf16.mxu0 0
    %6084 = vmatpush1.bf16.msra.mxu0 0
    %6085 = vmatprep.subr.bf16.mxu0 0
    %6086 = vmatpush1.bf16.msra.mxu0 0
    %6087 = vmatprep.subr.bf16.mxu0 0
    %6088 = vmatpush1.bf16.msra.mxu0 0
    %6089 = vmatprep.subr.bf16.mxu0 0
    %6090 = vmatpush1.bf16.msra.mxu0 0
    %6091 = vmatprep.subr.bf16.mxu0 0
    %6092 = vmatpush1.bf16.msra.mxu0 0
    %6093 = vmatprep.subr.bf16.mxu0 0
    %6094 = vmatpush1.bf16.msra.mxu0 0
    %6095 = vmatprep.subr.bf16.mxu0 0
    %6096 = vmatpush1.bf16.msra.mxu0 0
    %6097 = vmatprep.subr.bf16.mxu0 0
    %6098 = vmatpush1.bf16.msra.mxu0 0
    %6099 = vmatprep.mubr.bf16.mxu0 0
    %6100 = vmatmul.mubr.bf16.gmra.mrb[0].mxu0 %v5942
    %v6101 = vpop.f32.mrb[0].mxu0
    %v6102 = vadd.f32 %v6061, %v6101
    %v6103 = vpop.f32.mrb[0].mxu0
    %v6104 = vadd.f32 %v6063, %v6103
    %v6105 = vpop.f32.mrb[0].mxu0
    %v6106 = vpop.f32.mrb[0].mxu0
    %6107 = vdwg.mxu0
    %6108 = vmatprep.subr.bf16.mxu0 %v5528
    %6109 = vmatpush1.bf16.msra.mxu0 %v5527
    %6110 = vmatprep.subr.bf16.mxu0 %v5532
    %6111 = vmatpush1.bf16.msra.mxu0 %v5531
    %6112 = vmatprep.subr.bf16.mxu0 %v5536
    %6113 = vmatpush1.bf16.msra.mxu0 %v5535
    %6114 = vmatprep.subr.bf16.mxu0 %v5540
    %6115 = vmatpush1.bf16.msra.mxu0 %v5539
    %6116 = vmatprep.subr.bf16.mxu0 %v5544
    %6117 = vmatpush1.bf16.msra.mxu0 %v5543
    %6118 = vmatprep.subr.bf16.mxu0 %v5548
    %6119 = vmatpush1.bf16.msra.mxu0 %v5547
    %6120 = vmatprep.subr.bf16.mxu0 %v5552
    %6121 = vmatpush1.bf16.msra.mxu0 %v5551
    %6122 = vmatprep.subr.bf16.mxu0 %v5556
    %6123 = vmatpush1.bf16.msra.mxu0 %v5555
    %6124 = vmatprep.subr.bf16.mxu0 %v5560
    %6125 = vmatpush1.bf16.msra.mxu0 %v5559
    %6126 = vmatprep.subr.bf16.mxu0 %v5564
    %6127 = vmatpush1.bf16.msra.mxu0 %v5563
    %6128 = vmatprep.subr.bf16.mxu0 %v5568
    %6129 = vmatpush1.bf16.msra.mxu0 %v5567
    %6130 = vmatprep.subr.bf16.mxu0 %v5572
    %6131 = vmatpush1.bf16.msra.mxu0 %v5571
    %6132 = vmatprep.subr.bf16.mxu0 %v5576
    %6133 = vmatpush1.bf16.msra.mxu0 %v5575
    %6134 = vmatprep.subr.bf16.mxu0 %v5580
    %6135 = vmatpush1.bf16.msra.mxu0 %v5579
    %6136 = vmatprep.subr.bf16.mxu0 %v5584
    %6137 = vmatpush1.bf16.msra.mxu0 %v5583
    %6138 = vmatprep.subr.bf16.mxu0 %v5588
    %6139 = vmatpush1.bf16.msra.mxu0 %v5587
    %6140 = vmatprep.mubr.bf16.mxu0 %v4665
    %6141 = vmatmul.mubr.bf16.gmra.mrb[0].mxu0 %v4664
    %v6142 = vpop.f32.mrb[0].mxu0
    %v6143 = vadd.f32 %v4892, %v6142
    %v6144 = vpop.f32.mrb[0].mxu0
    %v6145 = vadd.f32 %v4896, %v6144
    %v6146 = vpop.f32.mrb[0].mxu0
    %v6147 = vpop.f32.mrb[0].mxu0
    %6148 = vdwg.mxu0
    %6149 = vmatprep.subr.bf16.mxu0 %v5592
    %6150 = vmatpush1.bf16.msra.mxu0 %v5591
    %6151 = vmatprep.subr.bf16.mxu0 %v5596
    %6152 = vmatpush1.bf16.msra.mxu0 %v5595
    %6153 = vmatprep.subr.bf16.mxu0 %v5600
    %6154 = vmatpush1.bf16.msra.mxu0 %v5599
    %6155 = vmatprep.subr.bf16.mxu0 %v5604
    %6156 = vmatpush1.bf16.msra.mxu0 %v5603
    %6157 = vmatprep.subr.bf16.mxu0 %v5608
    %6158 = vmatpush1.bf16.msra.mxu0 %v5607
    %6159 = vmatprep.subr.bf16.mxu0 %v5612
    %6160 = vmatpush1.bf16.msra.mxu0 %v5611
    %6161 = vmatprep.subr.bf16.mxu0 %v5616
    %6162 = vmatpush1.bf16.msra.mxu0 %v5615
    %6163 = vmatprep.subr.bf16.mxu0 %v5620
    %6164 = vmatpush1.bf16.msra.mxu0 %v5619
    %6165 = vmatprep.subr.bf16.mxu0 %v5624
    %6166 = vmatpush1.bf16.msra.mxu0 %v5623
    %6167 = vmatprep.subr.bf16.mxu0 %v5628
    %6168 = vmatpush1.bf16.msra.mxu0 %v5627
    %6169 = vmatprep.subr.bf16.mxu0 %v5632
    %6170 = vmatpush1.bf16.msra.mxu0 %v5631
    %6171 = vmatprep.subr.bf16.mxu0 %v5636
    %6172 = vmatpush1.bf16.msra.mxu0 %v5635
    %6173 = vmatprep.subr.bf16.mxu0 %v5640
    %6174 = vmatpush1.bf16.msra.mxu0 %v5639
    %6175 = vmatprep.subr.bf16.mxu0 %v5644
    %6176 = vmatpush1.bf16.msra.mxu0 %v5643
    %6177 = vmatprep.subr.bf16.mxu0 %v5648
    %6178 = vmatpush1.bf16.msra.mxu0 %v5647
    %6179 = vmatprep.subr.bf16.mxu0 %v5652
    %6180 = vmatpush1.bf16.msra.mxu0 %v5651
    %6181 = vmatprep.mubr.bf16.mxu0 %v4667
    %6182 = vmatmul.mubr.bf16.gmra.mrb[0].mxu0 %v4666
    %v6183 = vpop.f32.mrb[0].mxu0
    %v6184 = vadd.f32 %v6143, %v6183
    %v6185 = vpop.f32.mrb[0].mxu0
    %v6186 = vadd.f32 %v6145, %v6185
    %v6187 = vpop.f32.mrb[0].mxu0
    %v6188 = vpop.f32.mrb[0].mxu0
    %6189 = vdwg.mxu0
    %6190 = vmatprep.subr.bf16.mxu0 %v5656
    %6191 = vmatpush1.bf16.msra.mxu0 %v5655
    %6192 = vmatprep.subr.bf16.mxu0 %v5660
    %6193 = vmatpush1.bf16.msra.mxu0 %v5659
    %6194 = vmatprep.subr.bf16.mxu0 %v5664
    %6195 = vmatpush1.bf16.msra.mxu0 %v5663
    %6196 = vmatprep.subr.bf16.mxu0 %v5668
    %6197 = vmatpush1.bf16.msra.mxu0 %v5667
    %6198 = vmatprep.subr.bf16.mxu0 %v5672
    %6199 = vmatpush1.bf16.msra.mxu0 %v5671
    %6200 = vmatprep.subr.bf16.mxu0 %v5676
    %6201 = vmatpush1.bf16.msra.mxu0 %v5675
    %6202 = vmatprep.subr.bf16.mxu0 %v5680
    %6203 = vmatpush1.bf16.msra.mxu0 %v5679
    %6204 = vmatprep.subr.bf16.mxu0 %v5684
    %6205 = vmatpush1.bf16.msra.mxu0 %v5683
    %6206 = vmatprep.subr.bf16.mxu0 %v5688
    %6207 = vmatpush1.bf16.msra.mxu0 %v5687
    %6208 = vmatprep.subr.bf16.mxu0 %v5692
    %6209 = vmatpush1.bf16.msra.mxu0 %v5691
    %6210 = vmatprep.subr.bf16.mxu0 %v5696
    %6211 = vmatpush1.bf16.msra.mxu0 %v5695
    %6212 = vmatprep.subr.bf16.mxu0 %v5700
    %6213 = vmatpush1.bf16.msra.mxu0 %v5699
    %6214 = vmatprep.subr.bf16.mxu0 %v5704
    %6215 = vmatpush1.bf16.msra.mxu0 %v5703
    %6216 = vmatprep.subr.bf16.mxu0 %v5708
    %6217 = vmatpush1.bf16.msra.mxu0 %v5707
    %6218 = vmatprep.subr.bf16.mxu0 %v5712
    %6219 = vmatpush1.bf16.msra.mxu0 %v5711
    %6220 = vmatprep.subr.bf16.mxu0 %v5716
    %6221 = vmatpush1.bf16.msra.mxu0 %v5715
    %6222 = vmatprep.mubr.bf16.mxu0 %v4669
    %6223 = vmatmul.mubr.bf16.gmra.mrb[0].mxu0 %v4668
    %v6224 = vpop.f32.mrb[0].mxu0
    %v6225 = vadd.f32 %v6184, %v6224
    %v6226 = vpop.f32.mrb[0].mxu0
    %v6227 = vadd.f32 %v6186, %v6226
    %v6228 = vpop.f32.mrb[0].mxu0
    %v6229 = vpop.f32.mrb[0].mxu0
    %6230 = vdwg.mxu0
    %6231 = vmatprep.subr.bf16.mxu0 %v5720
    %6232 = vmatpush1.bf16.msra.mxu0 %v5719
    %6233 = vmatprep.subr.bf16.mxu0 %v5724
    %6234 = vmatpush1.bf16.msra.mxu0 %v5723
    %6235 = vmatprep.subr.bf16.mxu0 %v5728
    %6236 = vmatpush1.bf16.msra.mxu0 %v5727
    %6237 = vmatprep.subr.bf16.mxu0 %v5732
    %6238 = vmatpush1.bf16.msra.mxu0 %v5731
    %6239 = vmatprep.subr.bf16.mxu0 0
    %6240 = vmatpush1.bf16.msra.mxu0 0
    %6241 = vmatprep.subr.bf16.mxu0 0
    %6242 = vmatpush1.bf16.msra.mxu0 0
    %6243 = vmatprep.subr.bf16.mxu0 0
    %6244 = vmatpush1.bf16.msra.mxu0 0
    %6245 = vmatprep.subr.bf16.mxu0 0
    %6246 = vmatpush1.bf16.msra.mxu0 0
    %6247 = vmatprep.subr.bf16.mxu0 0
    %6248 = vmatpush1.bf16.msra.mxu0 0
    %6249 = vmatprep.subr.bf16.mxu0 0
    %6250 = vmatpush1.bf16.msra.mxu0 0
    %6251 = vmatprep.subr.bf16.mxu0 0
    %6252 = vmatpush1.bf16.msra.mxu0 0
    %6253 = vmatprep.subr.bf16.mxu0 0
    %6254 = vmatpush1.bf16.msra.mxu0 0
    %6255 = vmatprep.subr.bf16.mxu0 0
    %6256 = vmatpush1.bf16.msra.mxu0 0
    %6257 = vmatprep.subr.bf16.mxu0 0
    %6258 = vmatpush1.bf16.msra.mxu0 0
    %6259 = vmatprep.subr.bf16.mxu0 0
    %6260 = vmatpush1.bf16.msra.mxu0 0
    %6261 = vmatprep.subr.bf16.mxu0 0
    %6262 = vmatpush1.bf16.msra.mxu0 0
    %6263 = vmatprep.mubr.bf16.mxu0 0
    %6264 = vmatmul.mubr.bf16.gmra.mrb[0].mxu0 %v5942
    %v6265 = vpop.f32.mrb[0].mxu0
    %v6266 = vadd.f32 %v6225, %v6265
    %v6267 = vpop.f32.mrb[0].mxu0
    %v6268 = vadd.f32 %v6227, %v6267
    %v6269 = vpop.f32.mrb[0].mxu0
    %v6270 = vpop.f32.mrb[0].mxu0
    %6271 = vdwg.mxu0
    %6272 = vst [vmem:[#allocation14] sm:$0xff] %v6102
    %6273 = vst [vmem:[#allocation14 + $0x8] sm:$0xff] %v6104
    %6274 = vst [vmem:[#allocation14 + $0x10] sm:$0xff] %v6266
    %6275 = vst.msk [vmem:[#allocation14 + $0x18] sm:$0xff] %vm1304, %v6268
    // Predicated region
    $region58: #{mlp_forward.1} parent=1 // pred_check
      _
    $region59: #{mlp_forward.1} parent=1 // pred_check_branch
      %6277 = sbr.rel (0) target = $region61
    $region60: #{mlp_forward.1} parent=1 // pred_region
      %s6279 = ssub.s32 512, 512
      %6280 = vsyncadd [#allocation4], %s6279
      %s6282 = sshll.u32 [#allocation14], 4
      %s6283 = int_to_ptr.vmem [resolvable:$true] %s6282
      %6285 = dma.vmem_to_hbm [thread:$0]  %s6283, 512, %s7, [#allocation4]
    $region61: #{mlp_forward.1} parent=1 // pred_fallthru
      _
    // Predicated region
    $region62: #{mlp_forward.1} parent=1 // pred_check
      _
    $region63: #{mlp_forward.1} parent=1 // pred_check_branch
      %6287 = sbr.rel (0) target = $region65
    $region64: #{mlp_forward.1} parent=1 // pred_region
      %6288 = dma.done [#allocation4], 512
    $region65: #{mlp_forward.1} parent=1 // pred_fallthru
      _
    %6289 = vsyncpa [#allocation3], 1
    %6290 = vsyncpa [#allocation6], 1
    %6291 = vsyncpa [#allocation9], 1
    %6292 = vsyncpa [#allocation12], 1
    %6293 = vsyncpa [#allocation4], 1

</llo_original>
